<compile_context>
chip_gen: v7x
topology: tpu7x:2x2x1
jax: 0.10.0
libtpu: 0.0.40
codegen_flags: <defaults>
</compile_context>

<pallas_src>
import numpy as np

import jax
import jax.numpy as jnp
from jax.experimental import pallas as pl
from jax.experimental.pallas import tpu as pltpu


def _round_up(x: int, m: int) -> int:
    return ((x + m - 1) // m) * m


def fold_bn(gamma, beta, mean, var, eps=1e-5):
    """Eval-mode BatchNorm2d folded to a per-channel affine (scale, shift)."""
    scale = gamma * jax.lax.rsqrt(var + eps)
    shift = beta - mean * scale
    return scale, shift


def _make_block_kernel(layer_cfg, W, HW, HWp, Bt, max_cin, slab_off,
                       matmul_dtype, out_dtype):
    """Fused kernel for one tile of Bt batch elements.

    layer_cfg: tuple of (kh, kw, cin_pad, residual) per conv layer (static).
    Ref order: x, then per layer (w, bias, scale, shift), then out,
    im2col scratch, zero-halo scratch.
    """
    n_layers = len(layer_cfg)
    lanes = Bt * HWp
    pw_max = max((kw - 1) // 2 for _, kw, _, _ in layer_cfg)

    def kernel(x_ref, *rest):
        param_refs = rest[:4 * n_layers]
        o_ref = rest[4 * n_layers]
        col_ref = rest[4 * n_layers + 1]
        xbuf_ref = rest[4 * n_layers + 2]

        # Zero the halo buffer ONCE per grid step (not per layer): the halo
        # columns are never rewritten, so every layer's y-out-of-range taps
        # read zeros; the centre slab is fully overwritten per (layer, image).
        xbuf_ref[...] = jnp.zeros_like(xbuf_ref)

        # x-boundary masks, hoisted out of the layer/tap loops and
        # pre-broadcast (JAX does not CSE broadcast_in_dim).
        xpos = jax.lax.broadcasted_iota(jnp.int32, (max_cin, HWp), 1) % W
        xmask = {dx: (xpos + dx >= 0) & (xpos + dx < W)
                 for dx in range(-pw_max, pw_max + 1) if dx != 0}

        if HWp != HW:
            # Keeps the spatial pad lanes of every image exactly zero so that
            # y-shifted taps of the next layer read 'same'-padding zeros.
            lpos = jax.lax.broadcasted_iota(jnp.int32, (1, lanes), 1) % HWp
            img_valid = lpos < HW
        else:
            img_valid = None

        cur = x_ref[...].astype(jnp.float32)               # (cin0, Bt*HWp)

        for li, (kh, kw, cin, residual) in enumerate(layer_cfg):
            w_ref, b_ref, s_ref, t_ref = param_refs[4 * li: 4 * li + 4]
            ph, pw = (kh - 1) // 2, (kw - 1) // 2

            cur_lp = cur.astype(matmul_dtype)              # MXU feed (bf16)

            # im2col build: per image, copy its (cin, HWp) slab into the
            # zero-halo buffer, then write each (dy, dx) tap as a
            # lane-shifted window into the packed column matrix.
            for b in range(Bt):
                xbuf_ref[0:cin, slab_off:slab_off + HWp] = (
                    cur_lp[:, b * HWp:(b + 1) * HWp])
                t = 0
                for dy in range(-ph, ph + 1):
                    for dx in range(-pw, pw + 1):
                        start = slab_off + dy * W + dx
                        tap = xbuf_ref[0:cin, start:start + HWp]
                        if dx != 0:
                            tap = jnp.where(xmask[dx][0:cin], tap, 0.0)
                        col_ref[t * cin:(t + 1) * cin,
                                b * HWp:(b + 1) * HWp] = tap
                        t += 1

            # ONE MXU matmul per conv:
            # (Cout, kh*kw*cin) x (kh*kw*cin, Bt*HWp), f32 accumulation.
            kkc = kh * kw * cin
            z = jnp.dot(w_ref[...], col_ref[0:kkc, :],
                        preferred_element_type=jnp.float32)
            z = z + b_ref[...]                    # conv bias
            z = jnp.maximum(z, 0.0)               # ReLU
            z = z * s_ref[...] + t_ref[...]       # BatchNorm (eval, folded)
            if residual:
                z = z + cur                       # residual connection (f32)
            if img_valid is not None:
                z = jnp.where(img_valid, z, 0.0)  # keep pad lanes at zero
            cur = z

        o_ref[...] = cur.astype(out_dtype)

    return kernel


def make_residual_cnn_block_forward(
        input_channels, channels, kernel_sizes,
        use_depthwise_separable_convolutions_when_possible=False,
        bn_eps=1e-5, matmul_dtype=jnp.bfloat16, batch_tile=None):
    """Returns a jitted forward(x_nchw, params) for ResidualCNNBlockModule."""
    if use_depthwise_separable_convolutions_when_possible:
        # TODO(synk): grouped (depthwise-separable) convolution path is not
        #             implemented in the Pallas kernel.
        raise NotImplementedError("grouped conv path not implemented")

    ksizes = [(5, 5)] + [tuple(k) if isinstance(k, (tuple, list)) else (k, k)
                         for k in kernel_sizes]
    for kh, kw in ksizes:
        # TODO(synk): even kernel sizes need asymmetric 'same' padding.
        assert kh % 2 == 1 and kw % 2 == 1, "odd kernel sizes only"

    cin_pad0 = _round_up(input_channels, 8)
    cch_pad = _round_up(channels, 8)
    residual_first = (input_channels == channels)

    layer_cfg = []
    for li, (kh, kw) in enumerate(ksizes):
        cin = cin_pad0 if li == 0 else cch_pad
        layer_cfg.append((kh, kw, cin, residual_first if li == 0 else True))
    layer_cfg = tuple(layer_cfg)

    mm_bytes = np.dtype(matmul_dtype).itemsize

    @jax.jit
    def forward(x_nchw, params):
        N, Cin, H, W = x_nchw.shape
        HW = H * W
        HWp = _round_up(HW, 128)           # lane-dense spatial dim
        out_dtype = x_nchw.dtype
        out_bytes = np.dtype(out_dtype).itemsize

        # Batch tile: amortise per-grid-step overhead over several images.
        if batch_tile is None:
            Bt = max(1, min(N, 2048 // HWp))
        else:
            Bt = max(1, min(batch_tile, N))
        Np = _round_up(N, Bt)

        # NCHW -> channels-major lane-dense layout (C, Np*HWp).  All layout
        # plumbing (pad / transpose) happens here in plain XLA.
        x = x_nchw.reshape(N, Cin, HW).astype(jnp.float32)
        x = jnp.pad(x, ((0, Np - N), (0, cin_pad0 - Cin), (0, HWp - HW)))
        x = jnp.transpose(x, (1, 0, 2)).reshape(cin_pad0, Np * HWp)

        flat_inputs = [x]
        in_specs = [pl.BlockSpec((cin_pad0, Bt * HWp), lambda n: (0, n))]
        param_bytes = 0
        for li, (kh, kw, cin, _) in enumerate(layer_cfg):
            w = params["conv_w"][li].astype(jnp.float32)   # (C, cin_raw, kh, kw)
            b = params["conv_b"][li].astype(jnp.float32)
            scale, shift = fold_bn(params["bn_gamma"][li], params["bn_beta"][li],
                                   params["bn_mean"][li], params["bn_var"][li],
                                   bn_eps)
            cout_raw, cin_raw = w.shape[0], w.shape[1]
            w = jnp.pad(w, ((0, cch_pad - cout_raw), (0, cin - cin_raw),
                            (0, 0), (0, 0)))
            # (Cout, Cin, kh, kw) -> (Cout, kh*kw*Cin), matching im2col rows;
            # cast to bf16 here so the MXU gets native-rate operands.
            w_mat = jnp.transpose(w, (0, 2, 3, 1)).reshape(
                cch_pad, kh * kw * cin).astype(matmul_dtype)
            b = jnp.pad(b, (0, cch_pad - cout_raw)).reshape(cch_pad, 1)
            scale = jnp.pad(scale.astype(jnp.float32),
                            (0, cch_pad - cout_raw)).reshape(cch_pad, 1)
            shift = jnp.pad(shift.astype(jnp.float32),
                            (0, cch_pad - cout_raw)).reshape(cch_pad, 1)

            flat_inputs += [w_mat, b, scale, shift]
            # TODO(synk): these grid-invariant parameter blocks are still
            #             double-buffered; pl.Buffered(1) / manual DMA would
            #             halve their VMEM at large channel counts.
            in_specs += [
                pl.BlockSpec((cch_pad, kh * kw * cin), lambda n: (0, 0)),
                pl.BlockSpec((cch_pad, 1), lambda n: (0, 0)),
                pl.BlockSpec((cch_pad, 1), lambda n: (0, 0)),
                pl.BlockSpec((cch_pad, 1), lambda n: (0, 0)),
            ]
            param_bytes += (cch_pad * kh * kw * cin * mm_bytes
                            + 3 * cch_pad * 4)

        max_kkc = max(kh * kw * cin for kh, kw, cin, _ in layer_cfg)
        max_halo = max(((kh - 1) // 2) * W + (kw - 1) // 2
                       for kh, kw, _, _ in layer_cfg)
        max_cin = max(cin for _, _, cin, _ in layer_cfg)
        slab_off = _round_up(max_halo, 128)       # lane-aligned slab writes
        buf_w = _round_up(slab_off + HWp + max_halo, 128)

        # Rough VMEM budget -> explicit limit (matters on v7x's 64 MiB).
        est_vmem = (2 * (cin_pad0 * 4 + cch_pad * out_bytes) * Bt * HWp
                    + 2 * param_bytes
                    + max_kkc * Bt * HWp * mm_bytes
                    + max_cin * buf_w * mm_bytes)
        vmem_limit = int(min(64 * 2**20, max(16 * 2**20, 2 * est_vmem)))

        flops = 2 * sum(cch_pad * kh * kw * cin
                        for kh, kw, cin, _ in layer_cfg) * Np * HWp
        bytes_accessed = (cin_pad0 * Np * HWp * 4
                          + cch_pad * Np * HWp * out_bytes + param_bytes)

        # TODO(synk): for large H*W additionally tile the spatial (lane) axis
        #             with a halo so the im2col scratch stays inside VMEM.
        out = pl.pallas_call(
            _make_block_kernel(layer_cfg, W, HW, HWp, Bt, max_cin, slab_off,
                               matmul_dtype, out_dtype),
            out_shape=jax.ShapeDtypeStruct((cch_pad, Np * HWp), out_dtype),
            grid=(Np // Bt,),
            in_specs=in_specs,
            out_specs=pl.BlockSpec((cch_pad, Bt * HWp), lambda n: (0, n)),
            scratch_shapes=[
                pltpu.VMEM((max_kkc, Bt * HWp), matmul_dtype),   # im2col
                pltpu.VMEM((max_cin, buf_w), matmul_dtype),      # zero-halo buf
            ],
            compiler_params=pltpu.CompilerParams(
                dimension_semantics=("parallel",),
                vmem_limit_bytes=vmem_limit),
            cost_estimate=pl.CostEstimate(
                flops=int(flops), transcendentals=0,
                bytes_accessed=int(bytes_accessed)),
        )(*flat_inputs)

        # (C, Np*HWp) -> (N, channels, H, W); layout plumbing back in XLA.
        out = out.reshape(cch_pad, Np, HWp).transpose(1, 0, 2)
        out = out[:N, :channels, :HW].reshape(N, channels, H, W)
        return out

    return forward


def make_params(key, input_channels, channels, kernel_sizes):
    """Random Conv2d / BatchNorm2d parameters mirroring the PyTorch module."""
    ksizes = [(5, 5)] + [tuple(k) if isinstance(k, (tuple, list)) else (k, k)
                         for k in kernel_sizes]
    cins = [input_channels] + [channels] * len(kernel_sizes)
    params = {k: [] for k in ["conv_w", "conv_b", "bn_gamma", "bn_beta",
                              "bn_mean", "bn_var"]}
    for (kh, kw), cin in zip(ksizes, cins):
        key, k1, k2, k3, k4, k5, k6 = jax.random.split(key, 7)
        fan = cin * kh * kw
        params["conv_w"].append(
            jax.random.normal(k1, (channels, cin, kh, kw), jnp.float32)
            / jnp.sqrt(fan))
        params["conv_b"].append(
            0.1 * jax.random.normal(k2, (channels,), jnp.float32))
        params["bn_gamma"].append(
            1.0 + 0.1 * jax.random.normal(k3, (channels,), jnp.float32))
        params["bn_beta"].append(
            0.1 * jax.random.normal(k4, (channels,), jnp.float32))
        params["bn_mean"].append(
            0.1 * jax.random.normal(k5, (channels,), jnp.float32))
        params["bn_var"].append(
            1.0 + 0.2 * jax.random.uniform(k6, (channels,), jnp.float32))
    return params


def _reference(x_nchw, params, input_channels, channels, kernel_sizes,
               eps=1e-5, conv_dtype=None):
    """Pure-JAX reference of the PyTorch forward (eval-mode BatchNorm).

    conv_dtype=bf16 rounds the conv operands (weights & activations) to bf16
    before an f32-accumulated conv, mimicking the kernel's MXU feed.
    """
    residual_first = (input_channels == channels)
    out = x_nchw.astype(jnp.float32)
    n_layers = 1 + len(kernel_sizes)
    for li in range(n_layers):
        inp = out
        w = params["conv_w"][li].astype(jnp.float32)
        b = params["conv_b"][li].astype(jnp.float32)
        xin = out
        if conv_dtype is not None:
            xin = xin.astype(conv_dtype).astype(jnp.float32)
            w = w.astype(conv_dtype).astype(jnp.float32)
        y = jax.lax.conv_general_dilated(
            xin, w, window_strides=(1, 1), padding="SAME",
            dimension_numbers=("NCHW", "OIHW", "NCHW"))
        y = y + b[None, :, None, None]
        y = jnp.maximum(y, 0.0)
        scale, shift = fold_bn(params["bn_gamma"][li], params["bn_beta"][li],
                               params["bn_mean"][li], params["bn_var"][li], eps)
        y = y * scale[None, :, None, None] + shift[None, :, None, None]
        if li != 0 or residual_first:
            y = y + inp
        out = y
    return out


if __name__ == "__main__":
    key = jax.random.PRNGKey(0)
    kx1, kp1, kx2, kp2 = jax.random.split(key, 4)

    # Config 1: input_channels != channels -> no residual on the first layer.
    # Uses the bf16 MXU path (default).
    N, Cin, Cch, H, W = 2, 4, 8, 16, 16
    ks1 = [3, 3]
    x1 = jax.random.normal(kx1, (N, Cin, H, W), jnp.float32)        # NCHW
    p1 = make_params(kp1, Cin, Cch, ks1)
    fwd1 = make_residual_cnn_block_forward(Cin, Cch, ks1)
    out1 = jax.block_until_ready(fwd1(x1, p1))
    assert out1.shape == (N, Cch, H, W), out1.shape
    ref1_q = _reference(x1, p1, Cin, Cch, ks1, conv_dtype=jnp.bfloat16)
    ref1_f = _reference(x1, p1, Cin, Cch, ks1, conv_dtype=None)
    assert jnp.allclose(out1, ref1_q, atol=5e-3, rtol=5e-3), float(
        jnp.max(jnp.abs(out1 - ref1_q)))
    assert jnp.allclose(out1, ref1_f, atol=1e-1, rtol=1e-1), float(
        jnp.max(jnp.abs(out1 - ref1_f)))

    # Config 2: input_channels == channels -> residual on the first layer too.
    # Uses the f32 matmul path for a tight check of the module semantics.
    ks2 = [3]
    x2 = jax.random.normal(kx2, (N, Cch, H, W), jnp.float32)
    p2 = make_params(kp2, Cch, Cch, ks2)
    fwd2 = make_residual_cnn_block_forward(Cch, Cch, ks2,
                                           matmul_dtype=jnp.float32)
    out2 = jax.block_until_ready(fwd2(x2, p2))
    assert out2.shape == (N, Cch, H, W), out2.shape
    ref2 = _reference(x2, p2, Cch, Cch, ks2, conv_dtype=None)
    assert jnp.allclose(out2, ref2, atol=1e-4, rtol=1e-4), float(
        jnp.max(jnp.abs(out2 - ref2)))

    print("KERNEL_OK")
</pallas_src>

<mosaic_0001>
module attributes {stable_mosaic.version = 11 : i64} {
  func.func @kernel(%arg0: i32, %arg1: memref<8x512xf32, #tpu.memory_space<vmem>>, %arg2: memref<8x200xbf16, #tpu.memory_space<vmem>>, %arg3: memref<8x1xf32, #tpu.memory_space<vmem>>, %arg4: memref<8x1xf32, #tpu.memory_space<vmem>>, %arg5: memref<8x1xf32, #tpu.memory_space<vmem>>, %arg6: memref<8x72xbf16, #tpu.memory_space<vmem>>, %arg7: memref<8x1xf32, #tpu.memory_space<vmem>>, %arg8: memref<8x1xf32, #tpu.memory_space<vmem>>, %arg9: memref<8x1xf32, #tpu.memory_space<vmem>>, %arg10: memref<8x72xbf16, #tpu.memory_space<vmem>>, %arg11: memref<8x1xf32, #tpu.memory_space<vmem>>, %arg12: memref<8x1xf32, #tpu.memory_space<vmem>>, %arg13: memref<8x1xf32, #tpu.memory_space<vmem>>, %arg14: memref<8x512xf32, #tpu.memory_space<vmem>>, %arg15: memref<200x512xbf16, #tpu.memory_space<vmem>>, %arg16: memref<8x512xbf16, #tpu.memory_space<vmem>>) attributes {dimension_semantics = [#tpu.dimension_semantics<parallel>], iteration_bounds = array<i64: 1>, scalar_prefetch = 0 : i64, scratch_operands = 2 : i64, tpu.core_type = #tpu.core_type<tc>, window_params = [{transform_indices = @transform_0, window_bounds = array<i64: 8, 512>}, {pipeline_mode = #tpu.pipeline_mode<synchronous>, transform_indices = @transform_1, window_bounds = array<i64: 8, 200>}, {pipeline_mode = #tpu.pipeline_mode<synchronous>, transform_indices = @transform_2, window_bounds = array<i64: 8, 1>}, {pipeline_mode = #tpu.pipeline_mode<synchronous>, transform_indices = @transform_3, window_bounds = array<i64: 8, 1>}, {pipeline_mode = #tpu.pipeline_mode<synchronous>, transform_indices = @transform_4, window_bounds = array<i64: 8, 1>}, {pipeline_mode = #tpu.pipeline_mode<synchronous>, transform_indices = @transform_5, window_bounds = array<i64: 8, 72>}, {pipeline_mode = #tpu.pipeline_mode<synchronous>, transform_indices = @transform_6, window_bounds = array<i64: 8, 1>}, {pipeline_mode = #tpu.pipeline_mode<synchronous>, transform_indices = @transform_7, window_bounds = array<i64: 8, 1>}, {pipeline_mode = #tpu.pipeline_mode<synchronous>, transform_indices = @transform_8, window_bounds = array<i64: 8, 1>}, {pipeline_mode = #tpu.pipeline_mode<synchronous>, transform_indices = @transform_9, window_bounds = array<i64: 8, 72>}, {pipeline_mode = #tpu.pipeline_mode<synchronous>, transform_indices = @transform_10, window_bounds = array<i64: 8, 1>}, {pipeline_mode = #tpu.pipeline_mode<synchronous>, transform_indices = @transform_11, window_bounds = array<i64: 8, 1>}, {pipeline_mode = #tpu.pipeline_mode<synchronous>, transform_indices = @transform_12, window_bounds = array<i64: 8, 1>}, {transform_indices = @transform_13, window_bounds = array<i64: 8, 512>}]} {
    %cst = arith.constant 0.000000e+00 : bf16
    %0 = vector.broadcast %cst : bf16 to vector<8x512xbf16>
    %c0 = arith.constant 0 : index
    %c0_0 = arith.constant 0 : index
    %1 = vector.load %arg16[%c0, %c0_0] : memref<8x512xbf16, #tpu.memory_space<vmem>>, vector<8x512xbf16>
    tpu.vector_store %arg16[%c0, %c0_0], %0 {strides = array<i32>} : memref<8x512xbf16, #tpu.memory_space<vmem>>, vector<8x512xbf16>,
    %2 = tpu.iota {dimensions = array<i32: 1>} : vector<8x256xi32>
    %c16_i32 = arith.constant 16 : i32
    %c0_i32 = arith.constant 0 : i32
    %3 = arith.cmpi eq, %c16_i32, %c0_i32 : i32
    %c1_i32 = arith.constant 1 : i32
    %4 = arith.select %3, %c1_i32, %c16_i32 : i32
    %5 = vector.broadcast %4 : i32 to vector<8x256xi32>
    %6 = arith.remsi %2, %5 : vector<8x256xi32>
    %c0_i32_1 = arith.constant 0 : i32
    %7 = vector.broadcast %c0_i32_1 : i32 to vector<8x256xi32>
    %8 = arith.cmpi ne, %6, %7 : vector<8x256xi32>
    %c0_i32_2 = arith.constant 0 : i32
    %9 = vector.broadcast %c0_i32_2 : i32 to vector<8x256xi32>
    %10 = arith.cmpi slt, %6, %9 : vector<8x256xi32>
    %c0_i32_3 = arith.constant 0 : i32
    %11 = arith.cmpi slt, %4, %c0_i32_3 : i32
    %12 = vector.broadcast %11 : i1 to vector<8x256xi1>
    %13 = vector.broadcast %12 : vector<8x256xi1> to vector<8x256xi1>
    %14 = arith.xori %10, %13 : vector<8x256xi1>
    %15 = arith.andi %14, %8 : vector<8x256xi1>
    %16 = vector.broadcast %4 : i32 to vector<8x256xi32>
    %17 = arith.addi %6, %16 : vector<8x256xi32>
    %18 = arith.select %15, %17, %6 : vector<8x256xi1>, vector<8x256xi32>
    %c-2_i32 = arith.constant -2 : i32
    %19 = vector.broadcast %c-2_i32 : i32 to vector<8x256xi32>
    %20 = arith.addi %18, %19 : vector<8x256xi32>
    %c0_i32_4 = arith.constant 0 : i32
    %21 = vector.broadcast %c0_i32_4 : i32 to vector<8x256xi32>
    %22 = arith.cmpi sge, %20, %21 : vector<8x256xi32>
    %c-2_i32_5 = arith.constant -2 : i32
    %23 = vector.broadcast %c-2_i32_5 : i32 to vector<8x256xi32>
    %24 = arith.addi %18, %23 : vector<8x256xi32>
    %c16_i32_6 = arith.constant 16 : i32
    %25 = vector.broadcast %c16_i32_6 : i32 to vector<8x256xi32>
    %26 = arith.cmpi slt, %24, %25 : vector<8x256xi32>
    %27 = arith.andi %22, %26 : vector<8x256xi1>
    %c-1_i32 = arith.constant -1 : i32
    %28 = vector.broadcast %c-1_i32 : i32 to vector<8x256xi32>
    %29 = arith.addi %18, %28 : vector<8x256xi32>
    %c0_i32_7 = arith.constant 0 : i32
    %30 = vector.broadcast %c0_i32_7 : i32 to vector<8x256xi32>
    %31 = arith.cmpi sge, %29, %30 : vector<8x256xi32>
    %c-1_i32_8 = arith.constant -1 : i32
    %32 = vector.broadcast %c-1_i32_8 : i32 to vector<8x256xi32>
    %33 = arith.addi %18, %32 : vector<8x256xi32>
    %c16_i32_9 = arith.constant 16 : i32
    %34 = vector.broadcast %c16_i32_9 : i32 to vector<8x256xi32>
    %35 = arith.cmpi slt, %33, %34 : vector<8x256xi32>
    %36 = arith.andi %31, %35 : vector<8x256xi1>
    %c1_i32_10 = arith.constant 1 : i32
    %37 = vector.broadcast %c1_i32_10 : i32 to vector<8x256xi32>
    %38 = arith.addi %18, %37 : vector<8x256xi32>
    %c0_i32_11 = arith.constant 0 : i32
    %39 = vector.broadcast %c0_i32_11 : i32 to vector<8x256xi32>
    %40 = arith.cmpi sge, %38, %39 : vector<8x256xi32>
    %c1_i32_12 = arith.constant 1 : i32
    %41 = vector.broadcast %c1_i32_12 : i32 to vector<8x256xi32>
    %42 = arith.addi %18, %41 : vector<8x256xi32>
    %c16_i32_13 = arith.constant 16 : i32
    %43 = vector.broadcast %c16_i32_13 : i32 to vector<8x256xi32>
    %44 = arith.cmpi slt, %42, %43 : vector<8x256xi32>
    %45 = arith.andi %40, %44 : vector<8x256xi1>
    %c2_i32 = arith.constant 2 : i32
    %46 = vector.broadcast %c2_i32 : i32 to vector<8x256xi32>
    %47 = arith.addi %18, %46 : vector<8x256xi32>
    %c0_i32_14 = arith.constant 0 : i32
    %48 = vector.broadcast %c0_i32_14 : i32 to vector<8x256xi32>
    %49 = arith.cmpi sge, %47, %48 : vector<8x256xi32>
    %c2_i32_15 = arith.constant 2 : i32
    %50 = vector.broadcast %c2_i32_15 : i32 to vector<8x256xi32>
    %51 = arith.addi %18, %50 : vector<8x256xi32>
    %c16_i32_16 = arith.constant 16 : i32
    %52 = vector.broadcast %c16_i32_16 : i32 to vector<8x256xi32>
    %53 = arith.cmpi slt, %51, %52 : vector<8x256xi32>
    %54 = arith.andi %49, %53 : vector<8x256xi1>
    %c0_17 = arith.constant 0 : index
    %c0_18 = arith.constant 0 : index
    %55 = vector.load %arg1[%c0_17, %c0_18] : memref<8x512xf32, #tpu.memory_space<vmem>>, vector<8x512xf32>
    %56 = arith.truncf %55 : vector<8x512xf32> to vector<8x512xbf16>
    %57 = vector.extract_strided_slice %56 {offsets = [0, 0], sizes = [8, 256], strides = [1, 1]} : vector<8x512xbf16> to vector<8x256xbf16>
    %c0_19 = arith.constant 0 : index
    %c128 = arith.constant 128 : index
    %58 = vector.load %arg16[%c0_19, %c128] : memref<8x512xbf16, #tpu.memory_space<vmem>>, vector<8x256xbf16>
    tpu.vector_store %arg16[%c0_19, %c128], %57 {strides = array<i32>} : memref<8x512xbf16, #tpu.memory_space<vmem>>, vector<8x256xbf16>,
    %c0_20 = arith.constant 0 : index
    %c94 = arith.constant 94 : index
    %59 = vector.load %arg16[%c0_20, %c94] : memref<8x512xbf16, #tpu.memory_space<vmem>>, vector<8x256xbf16>
    %cst_21 = arith.constant 0.000000e+00 : f32
    %60 = arith.truncf %cst_21 : f32 to bf16
    %61 = vector.broadcast %60 : bf16 to vector<8x256xbf16>
    %62 = arith.select %27, %59, %61 : vector<8x256xi1>, vector<8x256xbf16>
    %c0_22 = arith.constant 0 : index
    %c0_23 = arith.constant 0 : index
    %63 = vector.load %arg15[%c0_22, %c0_23] : memref<200x512xbf16, #tpu.memory_space<vmem>>, vector<8x256xbf16>
    tpu.vector_store %arg15[%c0_22, %c0_23], %62 {strides = array<i32>} : memref<200x512xbf16, #tpu.memory_space<vmem>>, vector<8x256xbf16>,
    %c0_24 = arith.constant 0 : index
    %c95 = arith.constant 95 : index
    %64 = vector.load %arg16[%c0_24, %c95] : memref<8x512xbf16, #tpu.memory_space<vmem>>, vector<8x256xbf16>
    %cst_25 = arith.constant 0.000000e+00 : f32
    %65 = arith.truncf %cst_25 : f32 to bf16
    %66 = vector.broadcast %65 : bf16 to vector<8x256xbf16>
    %67 = arith.select %36, %64, %66 : vector<8x256xi1>, vector<8x256xbf16>
    %c8 = arith.constant 8 : index
    %c0_26 = arith.constant 0 : index
    %68 = vector.load %arg15[%c8, %c0_26] : memref<200x512xbf16, #tpu.memory_space<vmem>>, vector<8x256xbf16>
    tpu.vector_store %arg15[%c8, %c0_26], %67 {strides = array<i32>} : memref<200x512xbf16, #tpu.memory_space<vmem>>, vector<8x256xbf16>,
    %c0_27 = arith.constant 0 : index
    %c96 = arith.constant 96 : index
    %69 = vector.load %arg16[%c0_27, %c96] : memref<8x512xbf16, #tpu.memory_space<vmem>>, vector<8x256xbf16>
    %c16 = arith.constant 16 : index
    %c0_28 = arith.constant 0 : index
    %70 = vector.load %arg15[%c16, %c0_28] : memref<200x512xbf16, #tpu.memory_space<vmem>>, vector<8x256xbf16>
    tpu.vector_store %arg15[%c16, %c0_28], %69 {strides = array<i32>} : memref<200x512xbf16, #tpu.memory_space<vmem>>, vector<8x256xbf16>,
    %c0_29 = arith.constant 0 : index
    %c97 = arith.constant 97 : index
    %71 = vector.load %arg16[%c0_29, %c97] : memref<8x512xbf16, #tpu.memory_space<vmem>>, vector<8x256xbf16>
    %cst_30 = arith.constant 0.000000e+00 : f32
    %72 = arith.truncf %cst_30 : f32 to bf16
    %73 = vector.broadcast %72 : bf16 to vector<8x256xbf16>
    %74 = arith.select %45, %71, %73 : vector<8x256xi1>, vector<8x256xbf16>
    %c24 = arith.constant 24 : index
    %c0_31 = arith.constant 0 : index
    %75 = vector.load %arg15[%c24, %c0_31] : memref<200x512xbf16, #tpu.memory_space<vmem>>, vector<8x256xbf16>
    tpu.vector_store %arg15[%c24, %c0_31], %74 {strides = array<i32>} : memref<200x512xbf16, #tpu.memory_space<vmem>>, vector<8x256xbf16>,
    %c0_32 = arith.constant 0 : index
    %c98 = arith.constant 98 : index
    %76 = vector.load %arg16[%c0_32, %c98] : memref<8x512xbf16, #tpu.memory_space<vmem>>, vector<8x256xbf16>
    %cst_33 = arith.constant 0.000000e+00 : f32
    %77 = arith.truncf %cst_33 : f32 to bf16
    %78 = vector.broadcast %77 : bf16 to vector<8x256xbf16>
    %79 = arith.select %54, %76, %78 : vector<8x256xi1>, vector<8x256xbf16>
    %c32 = arith.constant 32 : index
    %c0_34 = arith.constant 0 : index
    %80 = vector.load %arg15[%c32, %c0_34] : memref<200x512xbf16, #tpu.memory_space<vmem>>, vector<8x256xbf16>
    tpu.vector_store %arg15[%c32, %c0_34], %79 {strides = array<i32>} : memref<200x512xbf16, #tpu.memory_space<vmem>>, vector<8x256xbf16>,
    %c0_35 = arith.constant 0 : index
    %c110 = arith.constant 110 : index
    %81 = vector.load %arg16[%c0_35, %c110] : memref<8x512xbf16, #tpu.memory_space<vmem>>, vector<8x256xbf16>
    %cst_36 = arith.constant 0.000000e+00 : f32
    %82 = arith.truncf %cst_36 : f32 to bf16
    %83 = vector.broadcast %82 : bf16 to vector<8x256xbf16>
    %84 = arith.select %27, %81, %83 : vector<8x256xi1>, vector<8x256xbf16>
    %c40 = arith.constant 40 : index
    %c0_37 = arith.constant 0 : index
    %85 = vector.load %arg15[%c40, %c0_37] : memref<200x512xbf16, #tpu.memory_space<vmem>>, vector<8x256xbf16>
    tpu.vector_store %arg15[%c40, %c0_37], %84 {strides = array<i32>} : memref<200x512xbf16, #tpu.memory_space<vmem>>, vector<8x256xbf16>,
    %c0_38 = arith.constant 0 : index
    %c111 = arith.constant 111 : index
    %86 = vector.load %arg16[%c0_38, %c111] : memref<8x512xbf16, #tpu.memory_space<vmem>>, vector<8x256xbf16>
    %cst_39 = arith.constant 0.000000e+00 : f32
    %87 = arith.truncf %cst_39 : f32 to bf16
    %88 = vector.broadcast %87 : bf16 to vector<8x256xbf16>
    %89 = arith.select %36, %86, %88 : vector<8x256xi1>, vector<8x256xbf16>
    %c48 = arith.constant 48 : index
    %c0_40 = arith.constant 0 : index
    %90 = vector.load %arg15[%c48, %c0_40] : memref<200x512xbf16, #tpu.memory_space<vmem>>, vector<8x256xbf16>
    tpu.vector_store %arg15[%c48, %c0_40], %89 {strides = array<i32>} : memref<200x512xbf16, #tpu.memory_space<vmem>>, vector<8x256xbf16>,
    %c0_41 = arith.constant 0 : index
    %c112 = arith.constant 112 : index
    %91 = vector.load %arg16[%c0_41, %c112] : memref<8x512xbf16, #tpu.memory_space<vmem>>, vector<8x256xbf16>
    %c56 = arith.constant 56 : index
    %c0_42 = arith.constant 0 : index
    %92 = vector.load %arg15[%c56, %c0_42] : memref<200x512xbf16, #tpu.memory_space<vmem>>, vector<8x256xbf16>
    tpu.vector_store %arg15[%c56, %c0_42], %91 {strides = array<i32>} : memref<200x512xbf16, #tpu.memory_space<vmem>>, vector<8x256xbf16>,
    %c0_43 = arith.constant 0 : index
    %c113 = arith.constant 113 : index
    %93 = vector.load %arg16[%c0_43, %c113] : memref<8x512xbf16, #tpu.memory_space<vmem>>, vector<8x256xbf16>
    %cst_44 = arith.constant 0.000000e+00 : f32
    %94 = arith.truncf %cst_44 : f32 to bf16
    %95 = vector.broadcast %94 : bf16 to vector<8x256xbf16>
    %96 = arith.select %45, %93, %95 : vector<8x256xi1>, vector<8x256xbf16>
    %c64 = arith.constant 64 : index
    %c0_45 = arith.constant 0 : index
    %97 = vector.load %arg15[%c64, %c0_45] : memref<200x512xbf16, #tpu.memory_space<vmem>>, vector<8x256xbf16>
    tpu.vector_store %arg15[%c64, %c0_45], %96 {strides = array<i32>} : memref<200x512xbf16, #tpu.memory_space<vmem>>, vector<8x256xbf16>,
    %c0_46 = arith.constant 0 : index
    %c114 = arith.constant 114 : index
    %98 = vector.load %arg16[%c0_46, %c114] : memref<8x512xbf16, #tpu.memory_space<vmem>>, vector<8x256xbf16>
    %cst_47 = arith.constant 0.000000e+00 : f32
    %99 = arith.truncf %cst_47 : f32 to bf16
    %100 = vector.broadcast %99 : bf16 to vector<8x256xbf16>
    %101 = arith.select %54, %98, %100 : vector<8x256xi1>, vector<8x256xbf16>
    %c72 = arith.constant 72 : index
    %c0_48 = arith.constant 0 : index
    %102 = vector.load %arg15[%c72, %c0_48] : memref<200x512xbf16, #tpu.memory_space<vmem>>, vector<8x256xbf16>
    tpu.vector_store %arg15[%c72, %c0_48], %101 {strides = array<i32>} : memref<200x512xbf16, #tpu.memory_space<vmem>>, vector<8x256xbf16>,
    %c0_49 = arith.constant 0 : index
    %c126 = arith.constant 126 : index
    %103 = vector.load %arg16[%c0_49, %c126] : memref<8x512xbf16, #tpu.memory_space<vmem>>, vector<8x256xbf16>
    %cst_50 = arith.constant 0.000000e+00 : f32
    %104 = arith.truncf %cst_50 : f32 to bf16
    %105 = vector.broadcast %104 : bf16 to vector<8x256xbf16>
    %106 = arith.select %27, %103, %105 : vector<8x256xi1>, vector<8x256xbf16>
    %c80 = arith.constant 80 : index
    %c0_51 = arith.constant 0 : index
    %107 = vector.load %arg15[%c80, %c0_51] : memref<200x512xbf16, #tpu.memory_space<vmem>>, vector<8x256xbf16>
    tpu.vector_store %arg15[%c80, %c0_51], %106 {strides = array<i32>} : memref<200x512xbf16, #tpu.memory_space<vmem>>, vector<8x256xbf16>,
    %c0_52 = arith.constant 0 : index
    %c127 = arith.constant 127 : index
    %108 = vector.load %arg16[%c0_52, %c127] : memref<8x512xbf16, #tpu.memory_space<vmem>>, vector<8x256xbf16>
    %cst_53 = arith.constant 0.000000e+00 : f32
    %109 = arith.truncf %cst_53 : f32 to bf16
    %110 = vector.broadcast %109 : bf16 to vector<8x256xbf16>
    %111 = arith.select %36, %108, %110 : vector<8x256xi1>, vector<8x256xbf16>
    %c88 = arith.constant 88 : index
    %c0_54 = arith.constant 0 : index
    %112 = vector.load %arg15[%c88, %c0_54] : memref<200x512xbf16, #tpu.memory_space<vmem>>, vector<8x256xbf16>
    tpu.vector_store %arg15[%c88, %c0_54], %111 {strides = array<i32>} : memref<200x512xbf16, #tpu.memory_space<vmem>>, vector<8x256xbf16>,
    %c0_55 = arith.constant 0 : index
    %c128_56 = arith.constant 128 : index
    %113 = vector.load %arg16[%c0_55, %c128_56] : memref<8x512xbf16, #tpu.memory_space<vmem>>, vector<8x256xbf16>
    %c96_57 = arith.constant 96 : index
    %c0_58 = arith.constant 0 : index
    %114 = vector.load %arg15[%c96_57, %c0_58] : memref<200x512xbf16, #tpu.memory_space<vmem>>, vector<8x256xbf16>
    tpu.vector_store %arg15[%c96_57, %c0_58], %113 {strides = array<i32>} : memref<200x512xbf16, #tpu.memory_space<vmem>>, vector<8x256xbf16>,
    %c0_59 = arith.constant 0 : index
    %c129 = arith.constant 129 : index
    %115 = vector.load %arg16[%c0_59, %c129] : memref<8x512xbf16, #tpu.memory_space<vmem>>, vector<8x256xbf16>
    %cst_60 = arith.constant 0.000000e+00 : f32
    %116 = arith.truncf %cst_60 : f32 to bf16
    %117 = vector.broadcast %116 : bf16 to vector<8x256xbf16>
    %118 = arith.select %45, %115, %117 : vector<8x256xi1>, vector<8x256xbf16>
    %c104 = arith.constant 104 : index
    %c0_61 = arith.constant 0 : index
    %119 = vector.load %arg15[%c104, %c0_61] : memref<200x512xbf16, #tpu.memory_space<vmem>>, vector<8x256xbf16>
    tpu.vector_store %arg15[%c104, %c0_61], %118 {strides = array<i32>} : memref<200x512xbf16, #tpu.memory_space<vmem>>, vector<8x256xbf16>,
    %c0_62 = arith.constant 0 : index
    %c130 = arith.constant 130 : index
    %120 = vector.load %arg16[%c0_62, %c130] : memref<8x512xbf16, #tpu.memory_space<vmem>>, vector<8x256xbf16>
    %cst_63 = arith.constant 0.000000e+00 : f32
    %121 = arith.truncf %cst_63 : f32 to bf16
    %122 = vector.broadcast %121 : bf16 to vector<8x256xbf16>
    %123 = arith.select %54, %120, %122 : vector<8x256xi1>, vector<8x256xbf16>
    %c112_64 = arith.constant 112 : index
    %c0_65 = arith.constant 0 : index
    %124 = vector.load %arg15[%c112_64, %c0_65] : memref<200x512xbf16, #tpu.memory_space<vmem>>, vector<8x256xbf16>
    tpu.vector_store %arg15[%c112_64, %c0_65], %123 {strides = array<i32>} : memref<200x512xbf16, #tpu.memory_space<vmem>>, vector<8x256xbf16>,
    %c0_66 = arith.constant 0 : index
    %c142 = arith.constant 142 : index
    %125 = vector.load %arg16[%c0_66, %c142] : memref<8x512xbf16, #tpu.memory_space<vmem>>, vector<8x256xbf16>
    %cst_67 = arith.constant 0.000000e+00 : f32
    %126 = arith.truncf %cst_67 : f32 to bf16
    %127 = vector.broadcast %126 : bf16 to vector<8x256xbf16>
    %128 = arith.select %27, %125, %127 : vector<8x256xi1>, vector<8x256xbf16>
    %c120 = arith.constant 120 : index
    %c0_68 = arith.constant 0 : index
    %129 = vector.load %arg15[%c120, %c0_68] : memref<200x512xbf16, #tpu.memory_space<vmem>>, vector<8x256xbf16>
    tpu.vector_store %arg15[%c120, %c0_68], %128 {strides = array<i32>} : memref<200x512xbf16, #tpu.memory_space<vmem>>, vector<8x256xbf16>,
    %c0_69 = arith.constant 0 : index
    %c143 = arith.constant 143 : index
    %130 = vector.load %arg16[%c0_69, %c143] : memref<8x512xbf16, #tpu.memory_space<vmem>>, vector<8x256xbf16>
    %cst_70 = arith.constant 0.000000e+00 : f32
    %131 = arith.truncf %cst_70 : f32 to bf16
    %132 = vector.broadcast %131 : bf16 to vector<8x256xbf16>
    %133 = arith.select %36, %130, %132 : vector<8x256xi1>, vector<8x256xbf16>
    %c128_71 = arith.constant 128 : index
    %c0_72 = arith.constant 0 : index
    %134 = vector.load %arg15[%c128_71, %c0_72] : memref<200x512xbf16, #tpu.memory_space<vmem>>, vector<8x256xbf16>
    tpu.vector_store %arg15[%c128_71, %c0_72], %133 {strides = array<i32>} : memref<200x512xbf16, #tpu.memory_space<vmem>>, vector<8x256xbf16>,
    %c0_73 = arith.constant 0 : index
    %c144 = arith.constant 144 : index
    %135 = vector.load %arg16[%c0_73, %c144] : memref<8x512xbf16, #tpu.memory_space<vmem>>, vector<8x256xbf16>
    %c136 = arith.constant 136 : index
    %c0_74 = arith.constant 0 : index
    %136 = vector.load %arg15[%c136, %c0_74] : memref<200x512xbf16, #tpu.memory_space<vmem>>, vector<8x256xbf16>
    tpu.vector_store %arg15[%c136, %c0_74], %135 {strides = array<i32>} : memref<200x512xbf16, #tpu.memory_space<vmem>>, vector<8x256xbf16>,
    %c0_75 = arith.constant 0 : index
    %c145 = arith.constant 145 : index
    %137 = vector.load %arg16[%c0_75, %c145] : memref<8x512xbf16, #tpu.memory_space<vmem>>, vector<8x256xbf16>
    %cst_76 = arith.constant 0.000000e+00 : f32
    %138 = arith.truncf %cst_76 : f32 to bf16
    %139 = vector.broadcast %138 : bf16 to vector<8x256xbf16>
    %140 = arith.select %45, %137, %139 : vector<8x256xi1>, vector<8x256xbf16>
    %c144_77 = arith.constant 144 : index
    %c0_78 = arith.constant 0 : index
    %141 = vector.load %arg15[%c144_77, %c0_78] : memref<200x512xbf16, #tpu.memory_space<vmem>>, vector<8x256xbf16>
    tpu.vector_store %arg15[%c144_77, %c0_78], %140 {strides = array<i32>} : memref<200x512xbf16, #tpu.memory_space<vmem>>, vector<8x256xbf16>,
    %c0_79 = arith.constant 0 : index
    %c146 = arith.constant 146 : index
    %142 = vector.load %arg16[%c0_79, %c146] : memref<8x512xbf16, #tpu.memory_space<vmem>>, vector<8x256xbf16>
    %cst_80 = arith.constant 0.000000e+00 : f32
    %143 = arith.truncf %cst_80 : f32 to bf16
    %144 = vector.broadcast %143 : bf16 to vector<8x256xbf16>
    %145 = arith.select %54, %142, %144 : vector<8x256xi1>, vector<8x256xbf16>
    %c152 = arith.constant 152 : index
    %c0_81 = arith.constant 0 : index
    %146 = vector.load %arg15[%c152, %c0_81] : memref<200x512xbf16, #tpu.memory_space<vmem>>, vector<8x256xbf16>
    tpu.vector_store %arg15[%c152, %c0_81], %145 {strides = array<i32>} : memref<200x512xbf16, #tpu.memory_space<vmem>>, vector<8x256xbf16>,
    %c0_82 = arith.constant 0 : index
    %c158 = arith.constant 158 : index
    %147 = vector.load %arg16[%c0_82, %c158] : memref<8x512xbf16, #tpu.memory_space<vmem>>, vector<8x256xbf16>
    %cst_83 = arith.constant 0.000000e+00 : f32
    %148 = arith.truncf %cst_83 : f32 to bf16
    %149 = vector.broadcast %148 : bf16 to vector<8x256xbf16>
    %150 = arith.select %27, %147, %149 : vector<8x256xi1>, vector<8x256xbf16>
    %c160 = arith.constant 160 : index
    %c0_84 = arith.constant 0 : index
    %151 = vector.load %arg15[%c160, %c0_84] : memref<200x512xbf16, #tpu.memory_space<vmem>>, vector<8x256xbf16>
    tpu.vector_store %arg15[%c160, %c0_84], %150 {strides = array<i32>} : memref<200x512xbf16, #tpu.memory_space<vmem>>, vector<8x256xbf16>,
    %c0_85 = arith.constant 0 : index
    %c159 = arith.constant 159 : index
    %152 = vector.load %arg16[%c0_85, %c159] : memref<8x512xbf16, #tpu.memory_space<vmem>>, vector<8x256xbf16>
    %cst_86 = arith.constant 0.000000e+00 : f32
    %153 = arith.truncf %cst_86 : f32 to bf16
    %154 = vector.broadcast %153 : bf16 to vector<8x256xbf16>
    %155 = arith.select %36, %152, %154 : vector<8x256xi1>, vector<8x256xbf16>
    %c168 = arith.constant 168 : index
    %c0_87 = arith.constant 0 : index
    %156 = vector.load %arg15[%c168, %c0_87] : memref<200x512xbf16, #tpu.memory_space<vmem>>, vector<8x256xbf16>
    tpu.vector_store %arg15[%c168, %c0_87], %155 {strides = array<i32>} : memref<200x512xbf16, #tpu.memory_space<vmem>>, vector<8x256xbf16>,
    %c0_88 = arith.constant 0 : index
    %c160_89 = arith.constant 160 : index
    %157 = vector.load %arg16[%c0_88, %c160_89] : memref<8x512xbf16, #tpu.memory_space<vmem>>, vector<8x256xbf16>
    %c176 = arith.constant 176 : index
    %c0_90 = arith.constant 0 : index
    %158 = vector.load %arg15[%c176, %c0_90] : memref<200x512xbf16, #tpu.memory_space<vmem>>, vector<8x256xbf16>
    tpu.vector_store %arg15[%c176, %c0_90], %157 {strides = array<i32>} : memref<200x512xbf16, #tpu.memory_space<vmem>>, vector<8x256xbf16>,
    %c0_91 = arith.constant 0 : index
    %c161 = arith.constant 161 : index
    %159 = vector.load %arg16[%c0_91, %c161] : memref<8x512xbf16, #tpu.memory_space<vmem>>, vector<8x256xbf16>
    %cst_92 = arith.constant 0.000000e+00 : f32
    %160 = arith.truncf %cst_92 : f32 to bf16
    %161 = vector.broadcast %160 : bf16 to vector<8x256xbf16>
    %162 = arith.select %45, %159, %161 : vector<8x256xi1>, vector<8x256xbf16>
    %c184 = arith.constant 184 : index
    %c0_93 = arith.constant 0 : index
    %163 = vector.load %arg15[%c184, %c0_93] : memref<200x512xbf16, #tpu.memory_space<vmem>>, vector<8x256xbf16>
    tpu.vector_store %arg15[%c184, %c0_93], %162 {strides = array<i32>} : memref<200x512xbf16, #tpu.memory_space<vmem>>, vector<8x256xbf16>,
    %c0_94 = arith.constant 0 : index
    %c162 = arith.constant 162 : index
    %164 = vector.load %arg16[%c0_94, %c162] : memref<8x512xbf16, #tpu.memory_space<vmem>>, vector<8x256xbf16>
    %cst_95 = arith.constant 0.000000e+00 : f32
    %165 = arith.truncf %cst_95 : f32 to bf16
    %166 = vector.broadcast %165 : bf16 to vector<8x256xbf16>
    %167 = arith.select %54, %164, %166 : vector<8x256xi1>, vector<8x256xbf16>
    %c192 = arith.constant 192 : index
    %c0_96 = arith.constant 0 : index
    %168 = vector.load %arg15[%c192, %c0_96] : memref<200x512xbf16, #tpu.memory_space<vmem>>, vector<8x256xbf16>
    tpu.vector_store %arg15[%c192, %c0_96], %167 {strides = array<i32>} : memref<200x512xbf16, #tpu.memory_space<vmem>>, vector<8x256xbf16>,
    %169 = vector.extract_strided_slice %56 {offsets = [0, 256], sizes = [8, 256], strides = [1, 1]} : vector<8x512xbf16> to vector<8x256xbf16>
    %c0_97 = arith.constant 0 : index
    %c128_98 = arith.constant 128 : index
    %170 = vector.load %arg16[%c0_97, %c128_98] : memref<8x512xbf16, #tpu.memory_space<vmem>>, vector<8x256xbf16>
    tpu.vector_store %arg16[%c0_97, %c128_98], %169 {strides = array<i32>} : memref<8x512xbf16, #tpu.memory_space<vmem>>, vector<8x256xbf16>,
    %c0_99 = arith.constant 0 : index
    %c94_100 = arith.constant 94 : index
    %171 = vector.load %arg16[%c0_99, %c94_100] : memref<8x512xbf16, #tpu.memory_space<vmem>>, vector<8x256xbf16>
    %cst_101 = arith.constant 0.000000e+00 : f32
    %172 = arith.truncf %cst_101 : f32 to bf16
    %173 = vector.broadcast %172 : bf16 to vector<8x256xbf16>
    %174 = arith.select %27, %171, %173 : vector<8x256xi1>, vector<8x256xbf16>
    %c0_102 = arith.constant 0 : index
    %c256 = arith.constant 256 : index
    %175 = vector.load %arg15[%c0_102, %c256] : memref<200x512xbf16, #tpu.memory_space<vmem>>, vector<8x256xbf16>
    tpu.vector_store %arg15[%c0_102, %c256], %174 {strides = array<i32>} : memref<200x512xbf16, #tpu.memory_space<vmem>>, vector<8x256xbf16>,
    %c0_103 = arith.constant 0 : index
    %c95_104 = arith.constant 95 : index
    %176 = vector.load %arg16[%c0_103, %c95_104] : memref<8x512xbf16, #tpu.memory_space<vmem>>, vector<8x256xbf16>
    %cst_105 = arith.constant 0.000000e+00 : f32
    %177 = arith.truncf %cst_105 : f32 to bf16
    %178 = vector.broadcast %177 : bf16 to vector<8x256xbf16>
    %179 = arith.select %36, %176, %178 : vector<8x256xi1>, vector<8x256xbf16>
    %c8_106 = arith.constant 8 : index
    %c256_107 = arith.constant 256 : index
    %180 = vector.load %arg15[%c8_106, %c256_107] : memref<200x512xbf16, #tpu.memory_space<vmem>>, vector<8x256xbf16>
    tpu.vector_store %arg15[%c8_106, %c256_107], %179 {strides = array<i32>} : memref<200x512xbf16, #tpu.memory_space<vmem>>, vector<8x256xbf16>,
    %c0_108 = arith.constant 0 : index
    %c96_109 = arith.constant 96 : index
    %181 = vector.load %arg16[%c0_108, %c96_109] : memref<8x512xbf16, #tpu.memory_space<vmem>>, vector<8x256xbf16>
    %c16_110 = arith.constant 16 : index
    %c256_111 = arith.constant 256 : index
    %182 = vector.load %arg15[%c16_110, %c256_111] : memref<200x512xbf16, #tpu.memory_space<vmem>>, vector<8x256xbf16>
    tpu.vector_store %arg15[%c16_110, %c256_111], %181 {strides = array<i32>} : memref<200x512xbf16, #tpu.memory_space<vmem>>, vector<8x256xbf16>,
    %c0_112 = arith.constant 0 : index
    %c97_113 = arith.constant 97 : index
    %183 = vector.load %arg16[%c0_112, %c97_113] : memref<8x512xbf16, #tpu.memory_space<vmem>>, vector<8x256xbf16>
    %cst_114 = arith.constant 0.000000e+00 : f32
    %184 = arith.truncf %cst_114 : f32 to bf16
    %185 = vector.broadcast %184 : bf16 to vector<8x256xbf16>
    %186 = arith.select %45, %183, %185 : vector<8x256xi1>, vector<8x256xbf16>
    %c24_115 = arith.constant 24 : index
    %c256_116 = arith.constant 256 : index
    %187 = vector.load %arg15[%c24_115, %c256_116] : memref<200x512xbf16, #tpu.memory_space<vmem>>, vector<8x256xbf16>
    tpu.vector_store %arg15[%c24_115, %c256_116], %186 {strides = array<i32>} : memref<200x512xbf16, #tpu.memory_space<vmem>>, vector<8x256xbf16>,
    %c0_117 = arith.constant 0 : index
    %c98_118 = arith.constant 98 : index
    %188 = vector.load %arg16[%c0_117, %c98_118] : memref<8x512xbf16, #tpu.memory_space<vmem>>, vector<8x256xbf16>
    %cst_119 = arith.constant 0.000000e+00 : f32
    %189 = arith.truncf %cst_119 : f32 to bf16
    %190 = vector.broadcast %189 : bf16 to vector<8x256xbf16>
    %191 = arith.select %54, %188, %190 : vector<8x256xi1>, vector<8x256xbf16>
    %c32_120 = arith.constant 32 : index
    %c256_121 = arith.constant 256 : index
    %192 = vector.load %arg15[%c32_120, %c256_121] : memref<200x512xbf16, #tpu.memory_space<vmem>>, vector<8x256xbf16>
    tpu.vector_store %arg15[%c32_120, %c256_121], %191 {strides = array<i32>} : memref<200x512xbf16, #tpu.memory_space<vmem>>, vector<8x256xbf16>,
    %c0_122 = arith.constant 0 : index
    %c110_123 = arith.constant 110 : index
    %193 = vector.load %arg16[%c0_122, %c110_123] : memref<8x512xbf16, #tpu.memory_space<vmem>>, vector<8x256xbf16>
    %cst_124 = arith.constant 0.000000e+00 : f32
    %194 = arith.truncf %cst_124 : f32 to bf16
    %195 = vector.broadcast %194 : bf16 to vector<8x256xbf16>
    %196 = arith.select %27, %193, %195 : vector<8x256xi1>, vector<8x256xbf16>
    %c40_125 = arith.constant 40 : index
    %c256_126 = arith.constant 256 : index
    %197 = vector.load %arg15[%c40_125, %c256_126] : memref<200x512xbf16, #tpu.memory_space<vmem>>, vector<8x256xbf16>
    tpu.vector_store %arg15[%c40_125, %c256_126], %196 {strides = array<i32>} : memref<200x512xbf16, #tpu.memory_space<vmem>>, vector<8x256xbf16>,
    %c0_127 = arith.constant 0 : index
    %c111_128 = arith.constant 111 : index
    %198 = vector.load %arg16[%c0_127, %c111_128] : memref<8x512xbf16, #tpu.memory_space<vmem>>, vector<8x256xbf16>
    %cst_129 = arith.constant 0.000000e+00 : f32
    %199 = arith.truncf %cst_129 : f32 to bf16
    %200 = vector.broadcast %199 : bf16 to vector<8x256xbf16>
    %201 = arith.select %36, %198, %200 : vector<8x256xi1>, vector<8x256xbf16>
    %c48_130 = arith.constant 48 : index
    %c256_131 = arith.constant 256 : index
    %202 = vector.load %arg15[%c48_130, %c256_131] : memref<200x512xbf16, #tpu.memory_space<vmem>>, vector<8x256xbf16>
    tpu.vector_store %arg15[%c48_130, %c256_131], %201 {strides = array<i32>} : memref<200x512xbf16, #tpu.memory_space<vmem>>, vector<8x256xbf16>,
    %c0_132 = arith.constant 0 : index
    %c112_133 = arith.constant 112 : index
    %203 = vector.load %arg16[%c0_132, %c112_133] : memref<8x512xbf16, #tpu.memory_space<vmem>>, vector<8x256xbf16>
    %c56_134 = arith.constant 56 : index
    %c256_135 = arith.constant 256 : index
    %204 = vector.load %arg15[%c56_134, %c256_135] : memref<200x512xbf16, #tpu.memory_space<vmem>>, vector<8x256xbf16>
    tpu.vector_store %arg15[%c56_134, %c256_135], %203 {strides = array<i32>} : memref<200x512xbf16, #tpu.memory_space<vmem>>, vector<8x256xbf16>,
    %c0_136 = arith.constant 0 : index
    %c113_137 = arith.constant 113 : index
    %205 = vector.load %arg16[%c0_136, %c113_137] : memref<8x512xbf16, #tpu.memory_space<vmem>>, vector<8x256xbf16>
    %cst_138 = arith.constant 0.000000e+00 : f32
    %206 = arith.truncf %cst_138 : f32 to bf16
    %207 = vector.broadcast %206 : bf16 to vector<8x256xbf16>
    %208 = arith.select %45, %205, %207 : vector<8x256xi1>, vector<8x256xbf16>
    %c64_139 = arith.constant 64 : index
    %c256_140 = arith.constant 256 : index
    %209 = vector.load %arg15[%c64_139, %c256_140] : memref<200x512xbf16, #tpu.memory_space<vmem>>, vector<8x256xbf16>
    tpu.vector_store %arg15[%c64_139, %c256_140], %208 {strides = array<i32>} : memref<200x512xbf16, #tpu.memory_space<vmem>>, vector<8x256xbf16>,
    %c0_141 = arith.constant 0 : index
    %c114_142 = arith.constant 114 : index
    %210 = vector.load %arg16[%c0_141, %c114_142] : memref<8x512xbf16, #tpu.memory_space<vmem>>, vector<8x256xbf16>
    %cst_143 = arith.constant 0.000000e+00 : f32
    %211 = arith.truncf %cst_143 : f32 to bf16
    %212 = vector.broadcast %211 : bf16 to vector<8x256xbf16>
    %213 = arith.select %54, %210, %212 : vector<8x256xi1>, vector<8x256xbf16>
    %c72_144 = arith.constant 72 : index
    %c256_145 = arith.constant 256 : index
    %214 = vector.load %arg15[%c72_144, %c256_145] : memref<200x512xbf16, #tpu.memory_space<vmem>>, vector<8x256xbf16>
    tpu.vector_store %arg15[%c72_144, %c256_145], %213 {strides = array<i32>} : memref<200x512xbf16, #tpu.memory_space<vmem>>, vector<8x256xbf16>,
    %c0_146 = arith.constant 0 : index
    %c126_147 = arith.constant 126 : index
    %215 = vector.load %arg16[%c0_146, %c126_147] : memref<8x512xbf16, #tpu.memory_space<vmem>>, vector<8x256xbf16>
    %cst_148 = arith.constant 0.000000e+00 : f32
    %216 = arith.truncf %cst_148 : f32 to bf16
    %217 = vector.broadcast %216 : bf16 to vector<8x256xbf16>
    %218 = arith.select %27, %215, %217 : vector<8x256xi1>, vector<8x256xbf16>
    %c80_149 = arith.constant 80 : index
    %c256_150 = arith.constant 256 : index
    %219 = vector.load %arg15[%c80_149, %c256_150] : memref<200x512xbf16, #tpu.memory_space<vmem>>, vector<8x256xbf16>
    tpu.vector_store %arg15[%c80_149, %c256_150], %218 {strides = array<i32>} : memref<200x512xbf16, #tpu.memory_space<vmem>>, vector<8x256xbf16>,
    %c0_151 = arith.constant 0 : index
    %c127_152 = arith.constant 127 : index
    %220 = vector.load %arg16[%c0_151, %c127_152] : memref<8x512xbf16, #tpu.memory_space<vmem>>, vector<8x256xbf16>
    %cst_153 = arith.constant 0.000000e+00 : f32
    %221 = arith.truncf %cst_153 : f32 to bf16
    %222 = vector.broadcast %221 : bf16 to vector<8x256xbf16>
    %223 = arith.select %36, %220, %222 : vector<8x256xi1>, vector<8x256xbf16>
    %c88_154 = arith.constant 88 : index
    %c256_155 = arith.constant 256 : index
    %224 = vector.load %arg15[%c88_154, %c256_155] : memref<200x512xbf16, #tpu.memory_space<vmem>>, vector<8x256xbf16>
    tpu.vector_store %arg15[%c88_154, %c256_155], %223 {strides = array<i32>} : memref<200x512xbf16, #tpu.memory_space<vmem>>, vector<8x256xbf16>,
    %c0_156 = arith.constant 0 : index
    %c128_157 = arith.constant 128 : index
    %225 = vector.load %arg16[%c0_156, %c128_157] : memref<8x512xbf16, #tpu.memory_space<vmem>>, vector<8x256xbf16>
    %c96_158 = arith.constant 96 : index
    %c256_159 = arith.constant 256 : index
    %226 = vector.load %arg15[%c96_158, %c256_159] : memref<200x512xbf16, #tpu.memory_space<vmem>>, vector<8x256xbf16>
    tpu.vector_store %arg15[%c96_158, %c256_159], %225 {strides = array<i32>} : memref<200x512xbf16, #tpu.memory_space<vmem>>, vector<8x256xbf16>,
    %c0_160 = arith.constant 0 : index
    %c129_161 = arith.constant 129 : index
    %227 = vector.load %arg16[%c0_160, %c129_161] : memref<8x512xbf16, #tpu.memory_space<vmem>>, vector<8x256xbf16>
    %cst_162 = arith.constant 0.000000e+00 : f32
    %228 = arith.truncf %cst_162 : f32 to bf16
    %229 = vector.broadcast %228 : bf16 to vector<8x256xbf16>
    %230 = arith.select %45, %227, %229 : vector<8x256xi1>, vector<8x256xbf16>
    %c104_163 = arith.constant 104 : index
    %c256_164 = arith.constant 256 : index
    %231 = vector.load %arg15[%c104_163, %c256_164] : memref<200x512xbf16, #tpu.memory_space<vmem>>, vector<8x256xbf16>
    tpu.vector_store %arg15[%c104_163, %c256_164], %230 {strides = array<i32>} : memref<200x512xbf16, #tpu.memory_space<vmem>>, vector<8x256xbf16>,
    %c0_165 = arith.constant 0 : index
    %c130_166 = arith.constant 130 : index
    %232 = vector.load %arg16[%c0_165, %c130_166] : memref<8x512xbf16, #tpu.memory_space<vmem>>, vector<8x256xbf16>
    %cst_167 = arith.constant 0.000000e+00 : f32
    %233 = arith.truncf %cst_167 : f32 to bf16
    %234 = vector.broadcast %233 : bf16 to vector<8x256xbf16>
    %235 = arith.select %54, %232, %234 : vector<8x256xi1>, vector<8x256xbf16>
    %c112_168 = arith.constant 112 : index
    %c256_169 = arith.constant 256 : index
    %236 = vector.load %arg15[%c112_168, %c256_169] : memref<200x512xbf16, #tpu.memory_space<vmem>>, vector<8x256xbf16>
    tpu.vector_store %arg15[%c112_168, %c256_169], %235 {strides = array<i32>} : memref<200x512xbf16, #tpu.memory_space<vmem>>, vector<8x256xbf16>,
    %c0_170 = arith.constant 0 : index
    %c142_171 = arith.constant 142 : index
    %237 = vector.load %arg16[%c0_170, %c142_171] : memref<8x512xbf16, #tpu.memory_space<vmem>>, vector<8x256xbf16>
    %cst_172 = arith.constant 0.000000e+00 : f32
    %238 = arith.truncf %cst_172 : f32 to bf16
    %239 = vector.broadcast %238 : bf16 to vector<8x256xbf16>
    %240 = arith.select %27, %237, %239 : vector<8x256xi1>, vector<8x256xbf16>
    %c120_173 = arith.constant 120 : index
    %c256_174 = arith.constant 256 : index
    %241 = vector.load %arg15[%c120_173, %c256_174] : memref<200x512xbf16, #tpu.memory_space<vmem>>, vector<8x256xbf16>
    tpu.vector_store %arg15[%c120_173, %c256_174], %240 {strides = array<i32>} : memref<200x512xbf16, #tpu.memory_space<vmem>>, vector<8x256xbf16>,
    %c0_175 = arith.constant 0 : index
    %c143_176 = arith.constant 143 : index
    %242 = vector.load %arg16[%c0_175, %c143_176] : memref<8x512xbf16, #tpu.memory_space<vmem>>, vector<8x256xbf16>
    %cst_177 = arith.constant 0.000000e+00 : f32
    %243 = arith.truncf %cst_177 : f32 to bf16
    %244 = vector.broadcast %243 : bf16 to vector<8x256xbf16>
    %245 = arith.select %36, %242, %244 : vector<8x256xi1>, vector<8x256xbf16>
    %c128_178 = arith.constant 128 : index
    %c256_179 = arith.constant 256 : index
    %246 = vector.load %arg15[%c128_178, %c256_179] : memref<200x512xbf16, #tpu.memory_space<vmem>>, vector<8x256xbf16>
    tpu.vector_store %arg15[%c128_178, %c256_179], %245 {strides = array<i32>} : memref<200x512xbf16, #tpu.memory_space<vmem>>, vector<8x256xbf16>,
    %c0_180 = arith.constant 0 : index
    %c144_181 = arith.constant 144 : index
    %247 = vector.load %arg16[%c0_180, %c144_181] : memref<8x512xbf16, #tpu.memory_space<vmem>>, vector<8x256xbf16>
    %c136_182 = arith.constant 136 : index
    %c256_183 = arith.constant 256 : index
    %248 = vector.load %arg15[%c136_182, %c256_183] : memref<200x512xbf16, #tpu.memory_space<vmem>>, vector<8x256xbf16>
    tpu.vector_store %arg15[%c136_182, %c256_183], %247 {strides = array<i32>} : memref<200x512xbf16, #tpu.memory_space<vmem>>, vector<8x256xbf16>,
    %c0_184 = arith.constant 0 : index
    %c145_185 = arith.constant 145 : index
    %249 = vector.load %arg16[%c0_184, %c145_185] : memref<8x512xbf16, #tpu.memory_space<vmem>>, vector<8x256xbf16>
    %cst_186 = arith.constant 0.000000e+00 : f32
    %250 = arith.truncf %cst_186 : f32 to bf16
    %251 = vector.broadcast %250 : bf16 to vector<8x256xbf16>
    %252 = arith.select %45, %249, %251 : vector<8x256xi1>, vector<8x256xbf16>
    %c144_187 = arith.constant 144 : index
    %c256_188 = arith.constant 256 : index
    %253 = vector.load %arg15[%c144_187, %c256_188] : memref<200x512xbf16, #tpu.memory_space<vmem>>, vector<8x256xbf16>
    tpu.vector_store %arg15[%c144_187, %c256_188], %252 {strides = array<i32>} : memref<200x512xbf16, #tpu.memory_space<vmem>>, vector<8x256xbf16>,
    %c0_189 = arith.constant 0 : index
    %c146_190 = arith.constant 146 : index
    %254 = vector.load %arg16[%c0_189, %c146_190] : memref<8x512xbf16, #tpu.memory_space<vmem>>, vector<8x256xbf16>
    %cst_191 = arith.constant 0.000000e+00 : f32
    %255 = arith.truncf %cst_191 : f32 to bf16
    %256 = vector.broadcast %255 : bf16 to vector<8x256xbf16>
    %257 = arith.select %54, %254, %256 : vector<8x256xi1>, vector<8x256xbf16>
    %c152_192 = arith.constant 152 : index
    %c256_193 = arith.constant 256 : index
    %258 = vector.load %arg15[%c152_192, %c256_193] : memref<200x512xbf16, #tpu.memory_space<vmem>>, vector<8x256xbf16>
    tpu.vector_store %arg15[%c152_192, %c256_193], %257 {strides = array<i32>} : memref<200x512xbf16, #tpu.memory_space<vmem>>, vector<8x256xbf16>,
    %c0_194 = arith.constant 0 : index
    %c158_195 = arith.constant 158 : index
    %259 = vector.load %arg16[%c0_194, %c158_195] : memref<8x512xbf16, #tpu.memory_space<vmem>>, vector<8x256xbf16>
    %cst_196 = arith.constant 0.000000e+00 : f32
    %260 = arith.truncf %cst_196 : f32 to bf16
    %261 = vector.broadcast %260 : bf16 to vector<8x256xbf16>
    %262 = arith.select %27, %259, %261 : vector<8x256xi1>, vector<8x256xbf16>
    %c160_197 = arith.constant 160 : index
    %c256_198 = arith.constant 256 : index
    %263 = vector.load %arg15[%c160_197, %c256_198] : memref<200x512xbf16, #tpu.memory_space<vmem>>, vector<8x256xbf16>
    tpu.vector_store %arg15[%c160_197, %c256_198], %262 {strides = array<i32>} : memref<200x512xbf16, #tpu.memory_space<vmem>>, vector<8x256xbf16>,
    %c0_199 = arith.constant 0 : index
    %c159_200 = arith.constant 159 : index
    %264 = vector.load %arg16[%c0_199, %c159_200] : memref<8x512xbf16, #tpu.memory_space<vmem>>, vector<8x256xbf16>
    %cst_201 = arith.constant 0.000000e+00 : f32
    %265 = arith.truncf %cst_201 : f32 to bf16
    %266 = vector.broadcast %265 : bf16 to vector<8x256xbf16>
    %267 = arith.select %36, %264, %266 : vector<8x256xi1>, vector<8x256xbf16>
    %c168_202 = arith.constant 168 : index
    %c256_203 = arith.constant 256 : index
    %268 = vector.load %arg15[%c168_202, %c256_203] : memref<200x512xbf16, #tpu.memory_space<vmem>>, vector<8x256xbf16>
    tpu.vector_store %arg15[%c168_202, %c256_203], %267 {strides = array<i32>} : memref<200x512xbf16, #tpu.memory_space<vmem>>, vector<8x256xbf16>,
    %c0_204 = arith.constant 0 : index
    %c160_205 = arith.constant 160 : index
    %269 = vector.load %arg16[%c0_204, %c160_205] : memref<8x512xbf16, #tpu.memory_space<vmem>>, vector<8x256xbf16>
    %c176_206 = arith.constant 176 : index
    %c256_207 = arith.constant 256 : index
    %270 = vector.load %arg15[%c176_206, %c256_207] : memref<200x512xbf16, #tpu.memory_space<vmem>>, vector<8x256xbf16>
    tpu.vector_store %arg15[%c176_206, %c256_207], %269 {strides = array<i32>} : memref<200x512xbf16, #tpu.memory_space<vmem>>, vector<8x256xbf16>,
    %c0_208 = arith.constant 0 : index
    %c161_209 = arith.constant 161 : index
    %271 = vector.load %arg16[%c0_208, %c161_209] : memref<8x512xbf16, #tpu.memory_space<vmem>>, vector<8x256xbf16>
    %cst_210 = arith.constant 0.000000e+00 : f32
    %272 = arith.truncf %cst_210 : f32 to bf16
    %273 = vector.broadcast %272 : bf16 to vector<8x256xbf16>
    %274 = arith.select %45, %271, %273 : vector<8x256xi1>, vector<8x256xbf16>
    %c184_211 = arith.constant 184 : index
    %c256_212 = arith.constant 256 : index
    %275 = vector.load %arg15[%c184_211, %c256_212] : memref<200x512xbf16, #tpu.memory_space<vmem>>, vector<8x256xbf16>
    tpu.vector_store %arg15[%c184_211, %c256_212], %274 {strides = array<i32>} : memref<200x512xbf16, #tpu.memory_space<vmem>>, vector<8x256xbf16>,
    %c0_213 = arith.constant 0 : index
    %c162_214 = arith.constant 162 : index
    %276 = vector.load %arg16[%c0_213, %c162_214] : memref<8x512xbf16, #tpu.memory_space<vmem>>, vector<8x256xbf16>
    %cst_215 = arith.constant 0.000000e+00 : f32
    %277 = arith.truncf %cst_215 : f32 to bf16
    %278 = vector.broadcast %277 : bf16 to vector<8x256xbf16>
    %279 = arith.select %54, %276, %278 : vector<8x256xi1>, vector<8x256xbf16>
    %c192_216 = arith.constant 192 : index
    %c256_217 = arith.constant 256 : index
    %280 = vector.load %arg15[%c192_216, %c256_217] : memref<200x512xbf16, #tpu.memory_space<vmem>>, vector<8x256xbf16>
    tpu.vector_store %arg15[%c192_216, %c256_217], %279 {strides = array<i32>} : memref<200x512xbf16, #tpu.memory_space<vmem>>, vector<8x256xbf16>,
    %c0_218 = arith.constant 0 : index
    %c0_219 = arith.constant 0 : index
    %281 = vector.load %arg2[%c0_218, %c0_219] : memref<8x200xbf16, #tpu.memory_space<vmem>>, vector<8x200xbf16>
    %c0_220 = arith.constant 0 : index
    %c0_221 = arith.constant 0 : index
    %282 = vector.load %arg15[%c0_220, %c0_221] : memref<200x512xbf16, #tpu.memory_space<vmem>>, vector<200x512xbf16>
    %cst_222 = arith.constant dense<0.000000e+00> : vector<8x512xf32>
    %283 = tpu.matmul %281, %282, %cst_222 {dimension_numbers = #tpu.dot_dimension_numbers<[1], [0], [0], [1], [0, 0, 1, 1], [], []>} : vector<8x200xbf16>, vector<200x512xbf16>, vector<8x512xf32> -> vector<8x512xf32>
    %c0_223 = arith.constant 0 : index
    %c0_224 = arith.constant 0 : index
    %284 = vector.load %arg3[%c0_223, %c0_224] : memref<8x1xf32, #tpu.memory_space<vmem>>, vector<8x1xf32>
    %285 = vector.broadcast %284 : vector<8x1xf32> to vector<8x512xf32>
    %286 = arith.addf %283, %285 : vector<8x512xf32>
    %cst_225 = arith.constant 0.000000e+00 : f32
    %287 = vector.broadcast %cst_225 : f32 to vector<8x512xf32>
    %288 = arith.maximumf %286, %287 : vector<8x512xf32>
    %c0_226 = arith.constant 0 : index
    %c0_227 = arith.constant 0 : index
    %289 = vector.load %arg4[%c0_226, %c0_227] : memref<8x1xf32, #tpu.memory_space<vmem>>, vector<8x1xf32>
    %290 = vector.broadcast %289 : vector<8x1xf32> to vector<8x512xf32>
    %291 = arith.mulf %288, %290 : vector<8x512xf32>
    %c0_228 = arith.constant 0 : index
    %c0_229 = arith.constant 0 : index
    %292 = vector.load %arg5[%c0_228, %c0_229] : memref<8x1xf32, #tpu.memory_space<vmem>>, vector<8x1xf32>
    %293 = vector.broadcast %292 : vector<8x1xf32> to vector<8x512xf32>
    %294 = arith.addf %291, %293 : vector<8x512xf32>
    %295 = arith.truncf %294 : vector<8x512xf32> to vector<8x512xbf16>
    %296 = vector.extract_strided_slice %295 {offsets = [0, 0], sizes = [8, 256], strides = [1, 1]} : vector<8x512xbf16> to vector<8x256xbf16>
    %c0_230 = arith.constant 0 : index
    %c128_231 = arith.constant 128 : index
    %297 = vector.load %arg16[%c0_230, %c128_231] : memref<8x512xbf16, #tpu.memory_space<vmem>>, vector<8x256xbf16>
    tpu.vector_store %arg16[%c0_230, %c128_231], %296 {strides = array<i32>} : memref<8x512xbf16, #tpu.memory_space<vmem>>, vector<8x256xbf16>,
    %c0_232 = arith.constant 0 : index
    %c111_233 = arith.constant 111 : index
    %298 = vector.load %arg16[%c0_232, %c111_233] : memref<8x512xbf16, #tpu.memory_space<vmem>>, vector<8x256xbf16>
    %cst_234 = arith.constant 0.000000e+00 : f32
    %299 = arith.truncf %cst_234 : f32 to bf16
    %300 = vector.broadcast %299 : bf16 to vector<8x256xbf16>
    %301 = arith.select %36, %298, %300 : vector<8x256xi1>, vector<8x256xbf16>
    %c0_235 = arith.constant 0 : index
    %c0_236 = arith.constant 0 : index
    %302 = vector.load %arg15[%c0_235, %c0_236] : memref<200x512xbf16, #tpu.memory_space<vmem>>, vector<8x256xbf16>
    tpu.vector_store %arg15[%c0_235, %c0_236], %301 {strides = array<i32>} : memref<200x512xbf16, #tpu.memory_space<vmem>>, vector<8x256xbf16>,
    %c0_237 = arith.constant 0 : index
    %c112_238 = arith.constant 112 : index
    %303 = vector.load %arg16[%c0_237, %c112_238] : memref<8x512xbf16, #tpu.memory_space<vmem>>, vector<8x256xbf16>
    %c8_239 = arith.constant 8 : index
    %c0_240 = arith.constant 0 : index
    %304 = vector.load %arg15[%c8_239, %c0_240] : memref<200x512xbf16, #tpu.memory_space<vmem>>, vector<8x256xbf16>
    tpu.vector_store %arg15[%c8_239, %c0_240], %303 {strides = array<i32>} : memref<200x512xbf16, #tpu.memory_space<vmem>>, vector<8x256xbf16>,
    %c0_241 = arith.constant 0 : index
    %c113_242 = arith.constant 113 : index
    %305 = vector.load %arg16[%c0_241, %c113_242] : memref<8x512xbf16, #tpu.memory_space<vmem>>, vector<8x256xbf16>
    %cst_243 = arith.constant 0.000000e+00 : f32
    %306 = arith.truncf %cst_243 : f32 to bf16
    %307 = vector.broadcast %306 : bf16 to vector<8x256xbf16>
    %308 = arith.select %45, %305, %307 : vector<8x256xi1>, vector<8x256xbf16>
    %c16_244 = arith.constant 16 : index
    %c0_245 = arith.constant 0 : index
    %309 = vector.load %arg15[%c16_244, %c0_245] : memref<200x512xbf16, #tpu.memory_space<vmem>>, vector<8x256xbf16>
    tpu.vector_store %arg15[%c16_244, %c0_245], %308 {strides = array<i32>} : memref<200x512xbf16, #tpu.memory_space<vmem>>, vector<8x256xbf16>,
    %c0_246 = arith.constant 0 : index
    %c127_247 = arith.constant 127 : index
    %310 = vector.load %arg16[%c0_246, %c127_247] : memref<8x512xbf16, #tpu.memory_space<vmem>>, vector<8x256xbf16>
    %cst_248 = arith.constant 0.000000e+00 : f32
    %311 = arith.truncf %cst_248 : f32 to bf16
    %312 = vector.broadcast %311 : bf16 to vector<8x256xbf16>
    %313 = arith.select %36, %310, %312 : vector<8x256xi1>, vector<8x256xbf16>
    %c24_249 = arith.constant 24 : index
    %c0_250 = arith.constant 0 : index
    %314 = vector.load %arg15[%c24_249, %c0_250] : memref<200x512xbf16, #tpu.memory_space<vmem>>, vector<8x256xbf16>
    tpu.vector_store %arg15[%c24_249, %c0_250], %313 {strides = array<i32>} : memref<200x512xbf16, #tpu.memory_space<vmem>>, vector<8x256xbf16>,
    %c0_251 = arith.constant 0 : index
    %c128_252 = arith.constant 128 : index
    %315 = vector.load %arg16[%c0_251, %c128_252] : memref<8x512xbf16, #tpu.memory_space<vmem>>, vector<8x256xbf16>
    %c32_253 = arith.constant 32 : index
    %c0_254 = arith.constant 0 : index
    %316 = vector.load %arg15[%c32_253, %c0_254] : memref<200x512xbf16, #tpu.memory_space<vmem>>, vector<8x256xbf16>
    tpu.vector_store %arg15[%c32_253, %c0_254], %315 {strides = array<i32>} : memref<200x512xbf16, #tpu.memory_space<vmem>>, vector<8x256xbf16>,
    %c0_255 = arith.constant 0 : index
    %c129_256 = arith.constant 129 : index
    %317 = vector.load %arg16[%c0_255, %c129_256] : memref<8x512xbf16, #tpu.memory_space<vmem>>, vector<8x256xbf16>
    %cst_257 = arith.constant 0.000000e+00 : f32
    %318 = arith.truncf %cst_257 : f32 to bf16
    %319 = vector.broadcast %318 : bf16 to vector<8x256xbf16>
    %320 = arith.select %45, %317, %319 : vector<8x256xi1>, vector<8x256xbf16>
    %c40_258 = arith.constant 40 : index
    %c0_259 = arith.constant 0 : index
    %321 = vector.load %arg15[%c40_258, %c0_259] : memref<200x512xbf16, #tpu.memory_space<vmem>>, vector<8x256xbf16>
    tpu.vector_store %arg15[%c40_258, %c0_259], %320 {strides = array<i32>} : memref<200x512xbf16, #tpu.memory_space<vmem>>, vector<8x256xbf16>,
    %c0_260 = arith.constant 0 : index
    %c143_261 = arith.constant 143 : index
    %322 = vector.load %arg16[%c0_260, %c143_261] : memref<8x512xbf16, #tpu.memory_space<vmem>>, vector<8x256xbf16>
    %cst_262 = arith.constant 0.000000e+00 : f32
    %323 = arith.truncf %cst_262 : f32 to bf16
    %324 = vector.broadcast %323 : bf16 to vector<8x256xbf16>
    %325 = arith.select %36, %322, %324 : vector<8x256xi1>, vector<8x256xbf16>
    %c48_263 = arith.constant 48 : index
    %c0_264 = arith.constant 0 : index
    %326 = vector.load %arg15[%c48_263, %c0_264] : memref<200x512xbf16, #tpu.memory_space<vmem>>, vector<8x256xbf16>
    tpu.vector_store %arg15[%c48_263, %c0_264], %325 {strides = array<i32>} : memref<200x512xbf16, #tpu.memory_space<vmem>>, vector<8x256xbf16>,
    %c0_265 = arith.constant 0 : index
    %c144_266 = arith.constant 144 : index
    %327 = vector.load %arg16[%c0_265, %c144_266] : memref<8x512xbf16, #tpu.memory_space<vmem>>, vector<8x256xbf16>
    %c56_267 = arith.constant 56 : index
    %c0_268 = arith.constant 0 : index
    %328 = vector.load %arg15[%c56_267, %c0_268] : memref<200x512xbf16, #tpu.memory_space<vmem>>, vector<8x256xbf16>
    tpu.vector_store %arg15[%c56_267, %c0_268], %327 {strides = array<i32>} : memref<200x512xbf16, #tpu.memory_space<vmem>>, vector<8x256xbf16>,
    %c0_269 = arith.constant 0 : index
    %c145_270 = arith.constant 145 : index
    %329 = vector.load %arg16[%c0_269, %c145_270] : memref<8x512xbf16, #tpu.memory_space<vmem>>, vector<8x256xbf16>
    %cst_271 = arith.constant 0.000000e+00 : f32
    %330 = arith.truncf %cst_271 : f32 to bf16
    %331 = vector.broadcast %330 : bf16 to vector<8x256xbf16>
    %332 = arith.select %45, %329, %331 : vector<8x256xi1>, vector<8x256xbf16>
    %c64_272 = arith.constant 64 : index
    %c0_273 = arith.constant 0 : index
    %333 = vector.load %arg15[%c64_272, %c0_273] : memref<200x512xbf16, #tpu.memory_space<vmem>>, vector<8x256xbf16>
    tpu.vector_store %arg15[%c64_272, %c0_273], %332 {strides = array<i32>} : memref<200x512xbf16, #tpu.memory_space<vmem>>, vector<8x256xbf16>,
    %334 = vector.extract_strided_slice %295 {offsets = [0, 256], sizes = [8, 256], strides = [1, 1]} : vector<8x512xbf16> to vector<8x256xbf16>
    %c0_274 = arith.constant 0 : index
    %c128_275 = arith.constant 128 : index
    %335 = vector.load %arg16[%c0_274, %c128_275] : memref<8x512xbf16, #tpu.memory_space<vmem>>, vector<8x256xbf16>
    tpu.vector_store %arg16[%c0_274, %c128_275], %334 {strides = array<i32>} : memref<8x512xbf16, #tpu.memory_space<vmem>>, vector<8x256xbf16>,
    %c0_276 = arith.constant 0 : index
    %c111_277 = arith.constant 111 : index
    %336 = vector.load %arg16[%c0_276, %c111_277] : memref<8x512xbf16, #tpu.memory_space<vmem>>, vector<8x256xbf16>
    %cst_278 = arith.constant 0.000000e+00 : f32
    %337 = arith.truncf %cst_278 : f32 to bf16
    %338 = vector.broadcast %337 : bf16 to vector<8x256xbf16>
    %339 = arith.select %36, %336, %338 : vector<8x256xi1>, vector<8x256xbf16>
    %c0_279 = arith.constant 0 : index
    %c256_280 = arith.constant 256 : index
    %340 = vector.load %arg15[%c0_279, %c256_280] : memref<200x512xbf16, #tpu.memory_space<vmem>>, vector<8x256xbf16>
    tpu.vector_store %arg15[%c0_279, %c256_280], %339 {strides = array<i32>} : memref<200x512xbf16, #tpu.memory_space<vmem>>, vector<8x256xbf16>,
    %c0_281 = arith.constant 0 : index
    %c112_282 = arith.constant 112 : index
    %341 = vector.load %arg16[%c0_281, %c112_282] : memref<8x512xbf16, #tpu.memory_space<vmem>>, vector<8x256xbf16>
    %c8_283 = arith.constant 8 : index
    %c256_284 = arith.constant 256 : index
    %342 = vector.load %arg15[%c8_283, %c256_284] : memref<200x512xbf16, #tpu.memory_space<vmem>>, vector<8x256xbf16>
    tpu.vector_store %arg15[%c8_283, %c256_284], %341 {strides = array<i32>} : memref<200x512xbf16, #tpu.memory_space<vmem>>, vector<8x256xbf16>,
    %c0_285 = arith.constant 0 : index
    %c113_286 = arith.constant 113 : index
    %343 = vector.load %arg16[%c0_285, %c113_286] : memref<8x512xbf16, #tpu.memory_space<vmem>>, vector<8x256xbf16>
    %cst_287 = arith.constant 0.000000e+00 : f32
    %344 = arith.truncf %cst_287 : f32 to bf16
    %345 = vector.broadcast %344 : bf16 to vector<8x256xbf16>
    %346 = arith.select %45, %343, %345 : vector<8x256xi1>, vector<8x256xbf16>
    %c16_288 = arith.constant 16 : index
    %c256_289 = arith.constant 256 : index
    %347 = vector.load %arg15[%c16_288, %c256_289] : memref<200x512xbf16, #tpu.memory_space<vmem>>, vector<8x256xbf16>
    tpu.vector_store %arg15[%c16_288, %c256_289], %346 {strides = array<i32>} : memref<200x512xbf16, #tpu.memory_space<vmem>>, vector<8x256xbf16>,
    %c0_290 = arith.constant 0 : index
    %c127_291 = arith.constant 127 : index
    %348 = vector.load %arg16[%c0_290, %c127_291] : memref<8x512xbf16, #tpu.memory_space<vmem>>, vector<8x256xbf16>
    %cst_292 = arith.constant 0.000000e+00 : f32
    %349 = arith.truncf %cst_292 : f32 to bf16
    %350 = vector.broadcast %349 : bf16 to vector<8x256xbf16>
    %351 = arith.select %36, %348, %350 : vector<8x256xi1>, vector<8x256xbf16>
    %c24_293 = arith.constant 24 : index
    %c256_294 = arith.constant 256 : index
    %352 = vector.load %arg15[%c24_293, %c256_294] : memref<200x512xbf16, #tpu.memory_space<vmem>>, vector<8x256xbf16>
    tpu.vector_store %arg15[%c24_293, %c256_294], %351 {strides = array<i32>} : memref<200x512xbf16, #tpu.memory_space<vmem>>, vector<8x256xbf16>,
    %c0_295 = arith.constant 0 : index
    %c128_296 = arith.constant 128 : index
    %353 = vector.load %arg16[%c0_295, %c128_296] : memref<8x512xbf16, #tpu.memory_space<vmem>>, vector<8x256xbf16>
    %c32_297 = arith.constant 32 : index
    %c256_298 = arith.constant 256 : index
    %354 = vector.load %arg15[%c32_297, %c256_298] : memref<200x512xbf16, #tpu.memory_space<vmem>>, vector<8x256xbf16>
    tpu.vector_store %arg15[%c32_297, %c256_298], %353 {strides = array<i32>} : memref<200x512xbf16, #tpu.memory_space<vmem>>, vector<8x256xbf16>,
    %c0_299 = arith.constant 0 : index
    %c129_300 = arith.constant 129 : index
    %355 = vector.load %arg16[%c0_299, %c129_300] : memref<8x512xbf16, #tpu.memory_space<vmem>>, vector<8x256xbf16>
    %cst_301 = arith.constant 0.000000e+00 : f32
    %356 = arith.truncf %cst_301 : f32 to bf16
    %357 = vector.broadcast %356 : bf16 to vector<8x256xbf16>
    %358 = arith.select %45, %355, %357 : vector<8x256xi1>, vector<8x256xbf16>
    %c40_302 = arith.constant 40 : index
    %c256_303 = arith.constant 256 : index
    %359 = vector.load %arg15[%c40_302, %c256_303] : memref<200x512xbf16, #tpu.memory_space<vmem>>, vector<8x256xbf16>
    tpu.vector_store %arg15[%c40_302, %c256_303], %358 {strides = array<i32>} : memref<200x512xbf16, #tpu.memory_space<vmem>>, vector<8x256xbf16>,
    %c0_304 = arith.constant 0 : index
    %c143_305 = arith.constant 143 : index
    %360 = vector.load %arg16[%c0_304, %c143_305] : memref<8x512xbf16, #tpu.memory_space<vmem>>, vector<8x256xbf16>
    %cst_306 = arith.constant 0.000000e+00 : f32
    %361 = arith.truncf %cst_306 : f32 to bf16
    %362 = vector.broadcast %361 : bf16 to vector<8x256xbf16>
    %363 = arith.select %36, %360, %362 : vector<8x256xi1>, vector<8x256xbf16>
    %c48_307 = arith.constant 48 : index
    %c256_308 = arith.constant 256 : index
    %364 = vector.load %arg15[%c48_307, %c256_308] : memref<200x512xbf16, #tpu.memory_space<vmem>>, vector<8x256xbf16>
    tpu.vector_store %arg15[%c48_307, %c256_308], %363 {strides = array<i32>} : memref<200x512xbf16, #tpu.memory_space<vmem>>, vector<8x256xbf16>,
    %c0_309 = arith.constant 0 : index
    %c144_310 = arith.constant 144 : index
    %365 = vector.load %arg16[%c0_309, %c144_310] : memref<8x512xbf16, #tpu.memory_space<vmem>>, vector<8x256xbf16>
    %c56_311 = arith.constant 56 : index
    %c256_312 = arith.constant 256 : index
    %366 = vector.load %arg15[%c56_311, %c256_312] : memref<200x512xbf16, #tpu.memory_space<vmem>>, vector<8x256xbf16>
    tpu.vector_store %arg15[%c56_311, %c256_312], %365 {strides = array<i32>} : memref<200x512xbf16, #tpu.memory_space<vmem>>, vector<8x256xbf16>,
    %c0_313 = arith.constant 0 : index
    %c145_314 = arith.constant 145 : index
    %367 = vector.load %arg16[%c0_313, %c145_314] : memref<8x512xbf16, #tpu.memory_space<vmem>>, vector<8x256xbf16>
    %cst_315 = arith.constant 0.000000e+00 : f32
    %368 = arith.truncf %cst_315 : f32 to bf16
    %369 = vector.broadcast %368 : bf16 to vector<8x256xbf16>
    %370 = arith.select %45, %367, %369 : vector<8x256xi1>, vector<8x256xbf16>
    %c64_316 = arith.constant 64 : index
    %c256_317 = arith.constant 256 : index
    %371 = vector.load %arg15[%c64_316, %c256_317] : memref<200x512xbf16, #tpu.memory_space<vmem>>, vector<8x256xbf16>
    tpu.vector_store %arg15[%c64_316, %c256_317], %370 {strides = array<i32>} : memref<200x512xbf16, #tpu.memory_space<vmem>>, vector<8x256xbf16>,
    %c0_318 = arith.constant 0 : index
    %c0_319 = arith.constant 0 : index
    %372 = vector.load %arg6[%c0_318, %c0_319] : memref<8x72xbf16, #tpu.memory_space<vmem>>, vector<8x72xbf16>
    %c0_320 = arith.constant 0 : index
    %c0_321 = arith.constant 0 : index
    %373 = vector.load %arg15[%c0_320, %c0_321] : memref<200x512xbf16, #tpu.memory_space<vmem>>, vector<72x512xbf16>
    %cst_322 = arith.constant dense<0.000000e+00> : vector<8x512xf32>
    %374 = tpu.matmul %372, %373, %cst_322 {dimension_numbers = #tpu.dot_dimension_numbers<[1], [0], [0], [1], [0, 0, 1, 1], [], []>} : vector<8x72xbf16>, vector<72x512xbf16>, vector<8x512xf32> -> vector<8x512xf32>
    %c0_323 = arith.constant 0 : index
    %c0_324 = arith.constant 0 : index
    %375 = vector.load %arg7[%c0_323, %c0_324] : memref<8x1xf32, #tpu.memory_space<vmem>>, vector<8x1xf32>
    %376 = vector.broadcast %375 : vector<8x1xf32> to vector<8x512xf32>
    %377 = arith.addf %374, %376 : vector<8x512xf32>
    %cst_325 = arith.constant 0.000000e+00 : f32
    %378 = vector.broadcast %cst_325 : f32 to vector<8x512xf32>
    %379 = arith.maximumf %377, %378 : vector<8x512xf32>
    %c0_326 = arith.constant 0 : index
    %c0_327 = arith.constant 0 : index
    %380 = vector.load %arg8[%c0_326, %c0_327] : memref<8x1xf32, #tpu.memory_space<vmem>>, vector<8x1xf32>
    %381 = vector.broadcast %380 : vector<8x1xf32> to vector<8x512xf32>
    %382 = arith.mulf %379, %381 : vector<8x512xf32>
    %c0_328 = arith.constant 0 : index
    %c0_329 = arith.constant 0 : index
    %383 = vector.load %arg9[%c0_328, %c0_329] : memref<8x1xf32, #tpu.memory_space<vmem>>, vector<8x1xf32>
    %384 = vector.broadcast %383 : vector<8x1xf32> to vector<8x512xf32>
    %385 = arith.addf %382, %384 : vector<8x512xf32>
    %386 = arith.addf %385, %294 : vector<8x512xf32>
    %387 = arith.truncf %386 : vector<8x512xf32> to vector<8x512xbf16>
    %388 = vector.extract_strided_slice %387 {offsets = [0, 0], sizes = [8, 256], strides = [1, 1]} : vector<8x512xbf16> to vector<8x256xbf16>
    %c0_330 = arith.constant 0 : index
    %c128_331 = arith.constant 128 : index
    %389 = vector.load %arg16[%c0_330, %c128_331] : memref<8x512xbf16, #tpu.memory_space<vmem>>, vector<8x256xbf16>
    tpu.vector_store %arg16[%c0_330, %c128_331], %388 {strides = array<i32>} : memref<8x512xbf16, #tpu.memory_space<vmem>>, vector<8x256xbf16>,
    %c0_332 = arith.constant 0 : index
    %c111_333 = arith.constant 111 : index
    %390 = vector.load %arg16[%c0_332, %c111_333] : memref<8x512xbf16, #tpu.memory_space<vmem>>, vector<8x256xbf16>
    %cst_334 = arith.constant 0.000000e+00 : f32
    %391 = arith.truncf %cst_334 : f32 to bf16
    %392 = vector.broadcast %391 : bf16 to vector<8x256xbf16>
    %393 = arith.select %36, %390, %392 : vector<8x256xi1>, vector<8x256xbf16>
    %c0_335 = arith.constant 0 : index
    %c0_336 = arith.constant 0 : index
    %394 = vector.load %arg15[%c0_335, %c0_336] : memref<200x512xbf16, #tpu.memory_space<vmem>>, vector<8x256xbf16>
    tpu.vector_store %arg15[%c0_335, %c0_336], %393 {strides = array<i32>} : memref<200x512xbf16, #tpu.memory_space<vmem>>, vector<8x256xbf16>,
    %c0_337 = arith.constant 0 : index
    %c112_338 = arith.constant 112 : index
    %395 = vector.load %arg16[%c0_337, %c112_338] : memref<8x512xbf16, #tpu.memory_space<vmem>>, vector<8x256xbf16>
    %c8_339 = arith.constant 8 : index
    %c0_340 = arith.constant 0 : index
    %396 = vector.load %arg15[%c8_339, %c0_340] : memref<200x512xbf16, #tpu.memory_space<vmem>>, vector<8x256xbf16>
    tpu.vector_store %arg15[%c8_339, %c0_340], %395 {strides = array<i32>} : memref<200x512xbf16, #tpu.memory_space<vmem>>, vector<8x256xbf16>,
    %c0_341 = arith.constant 0 : index
    %c113_342 = arith.constant 113 : index
    %397 = vector.load %arg16[%c0_341, %c113_342] : memref<8x512xbf16, #tpu.memory_space<vmem>>, vector<8x256xbf16>
    %cst_343 = arith.constant 0.000000e+00 : f32
    %398 = arith.truncf %cst_343 : f32 to bf16
    %399 = vector.broadcast %398 : bf16 to vector<8x256xbf16>
    %400 = arith.select %45, %397, %399 : vector<8x256xi1>, vector<8x256xbf16>
    %c16_344 = arith.constant 16 : index
    %c0_345 = arith.constant 0 : index
    %401 = vector.load %arg15[%c16_344, %c0_345] : memref<200x512xbf16, #tpu.memory_space<vmem>>, vector<8x256xbf16>
    tpu.vector_store %arg15[%c16_344, %c0_345], %400 {strides = array<i32>} : memref<200x512xbf16, #tpu.memory_space<vmem>>, vector<8x256xbf16>,
    %c0_346 = arith.constant 0 : index
    %c127_347 = arith.constant 127 : index
    %402 = vector.load %arg16[%c0_346, %c127_347] : memref<8x512xbf16, #tpu.memory_space<vmem>>, vector<8x256xbf16>
    %cst_348 = arith.constant 0.000000e+00 : f32
    %403 = arith.truncf %cst_348 : f32 to bf16
    %404 = vector.broadcast %403 : bf16 to vector<8x256xbf16>
    %405 = arith.select %36, %402, %404 : vector<8x256xi1>, vector<8x256xbf16>
    %c24_349 = arith.constant 24 : index
    %c0_350 = arith.constant 0 : index
    %406 = vector.load %arg15[%c24_349, %c0_350] : memref<200x512xbf16, #tpu.memory_space<vmem>>, vector<8x256xbf16>
    tpu.vector_store %arg15[%c24_349, %c0_350], %405 {strides = array<i32>} : memref<200x512xbf16, #tpu.memory_space<vmem>>, vector<8x256xbf16>,
    %c0_351 = arith.constant 0 : index
    %c128_352 = arith.constant 128 : index
    %407 = vector.load %arg16[%c0_351, %c128_352] : memref<8x512xbf16, #tpu.memory_space<vmem>>, vector<8x256xbf16>
    %c32_353 = arith.constant 32 : index
    %c0_354 = arith.constant 0 : index
    %408 = vector.load %arg15[%c32_353, %c0_354] : memref<200x512xbf16, #tpu.memory_space<vmem>>, vector<8x256xbf16>
    tpu.vector_store %arg15[%c32_353, %c0_354], %407 {strides = array<i32>} : memref<200x512xbf16, #tpu.memory_space<vmem>>, vector<8x256xbf16>,
    %c0_355 = arith.constant 0 : index
    %c129_356 = arith.constant 129 : index
    %409 = vector.load %arg16[%c0_355, %c129_356] : memref<8x512xbf16, #tpu.memory_space<vmem>>, vector<8x256xbf16>
    %cst_357 = arith.constant 0.000000e+00 : f32
    %410 = arith.truncf %cst_357 : f32 to bf16
    %411 = vector.broadcast %410 : bf16 to vector<8x256xbf16>
    %412 = arith.select %45, %409, %411 : vector<8x256xi1>, vector<8x256xbf16>
    %c40_358 = arith.constant 40 : index
    %c0_359 = arith.constant 0 : index
    %413 = vector.load %arg15[%c40_358, %c0_359] : memref<200x512xbf16, #tpu.memory_space<vmem>>, vector<8x256xbf16>
    tpu.vector_store %arg15[%c40_358, %c0_359], %412 {strides = array<i32>} : memref<200x512xbf16, #tpu.memory_space<vmem>>, vector<8x256xbf16>,
    %c0_360 = arith.constant 0 : index
    %c143_361 = arith.constant 143 : index
    %414 = vector.load %arg16[%c0_360, %c143_361] : memref<8x512xbf16, #tpu.memory_space<vmem>>, vector<8x256xbf16>
    %cst_362 = arith.constant 0.000000e+00 : f32
    %415 = arith.truncf %cst_362 : f32 to bf16
    %416 = vector.broadcast %415 : bf16 to vector<8x256xbf16>
    %417 = arith.select %36, %414, %416 : vector<8x256xi1>, vector<8x256xbf16>
    %c48_363 = arith.constant 48 : index
    %c0_364 = arith.constant 0 : index
    %418 = vector.load %arg15[%c48_363, %c0_364] : memref<200x512xbf16, #tpu.memory_space<vmem>>, vector<8x256xbf16>
    tpu.vector_store %arg15[%c48_363, %c0_364], %417 {strides = array<i32>} : memref<200x512xbf16, #tpu.memory_space<vmem>>, vector<8x256xbf16>,
    %c0_365 = arith.constant 0 : index
    %c144_366 = arith.constant 144 : index
    %419 = vector.load %arg16[%c0_365, %c144_366] : memref<8x512xbf16, #tpu.memory_space<vmem>>, vector<8x256xbf16>
    %c56_367 = arith.constant 56 : index
    %c0_368 = arith.constant 0 : index
    %420 = vector.load %arg15[%c56_367, %c0_368] : memref<200x512xbf16, #tpu.memory_space<vmem>>, vector<8x256xbf16>
    tpu.vector_store %arg15[%c56_367, %c0_368], %419 {strides = array<i32>} : memref<200x512xbf16, #tpu.memory_space<vmem>>, vector<8x256xbf16>,
    %c0_369 = arith.constant 0 : index
    %c145_370 = arith.constant 145 : index
    %421 = vector.load %arg16[%c0_369, %c145_370] : memref<8x512xbf16, #tpu.memory_space<vmem>>, vector<8x256xbf16>
    %cst_371 = arith.constant 0.000000e+00 : f32
    %422 = arith.truncf %cst_371 : f32 to bf16
    %423 = vector.broadcast %422 : bf16 to vector<8x256xbf16>
    %424 = arith.select %45, %421, %423 : vector<8x256xi1>, vector<8x256xbf16>
    %c64_372 = arith.constant 64 : index
    %c0_373 = arith.constant 0 : index
    %425 = vector.load %arg15[%c64_372, %c0_373] : memref<200x512xbf16, #tpu.memory_space<vmem>>, vector<8x256xbf16>
    tpu.vector_store %arg15[%c64_372, %c0_373], %424 {strides = array<i32>} : memref<200x512xbf16, #tpu.memory_space<vmem>>, vector<8x256xbf16>,
    %426 = vector.extract_strided_slice %387 {offsets = [0, 256], sizes = [8, 256], strides = [1, 1]} : vector<8x512xbf16> to vector<8x256xbf16>
    %c0_374 = arith.constant 0 : index
    %c128_375 = arith.constant 128 : index
    %427 = vector.load %arg16[%c0_374, %c128_375] : memref<8x512xbf16, #tpu.memory_space<vmem>>, vector<8x256xbf16>
    tpu.vector_store %arg16[%c0_374, %c128_375], %426 {strides = array<i32>} : memref<8x512xbf16, #tpu.memory_space<vmem>>, vector<8x256xbf16>,
    %c0_376 = arith.constant 0 : index
    %c111_377 = arith.constant 111 : index
    %428 = vector.load %arg16[%c0_376, %c111_377] : memref<8x512xbf16, #tpu.memory_space<vmem>>, vector<8x256xbf16>
    %cst_378 = arith.constant 0.000000e+00 : f32
    %429 = arith.truncf %cst_378 : f32 to bf16
    %430 = vector.broadcast %429 : bf16 to vector<8x256xbf16>
    %431 = arith.select %36, %428, %430 : vector<8x256xi1>, vector<8x256xbf16>
    %c0_379 = arith.constant 0 : index
    %c256_380 = arith.constant 256 : index
    %432 = vector.load %arg15[%c0_379, %c256_380] : memref<200x512xbf16, #tpu.memory_space<vmem>>, vector<8x256xbf16>
    tpu.vector_store %arg15[%c0_379, %c256_380], %431 {strides = array<i32>} : memref<200x512xbf16, #tpu.memory_space<vmem>>, vector<8x256xbf16>,
    %c0_381 = arith.constant 0 : index
    %c112_382 = arith.constant 112 : index
    %433 = vector.load %arg16[%c0_381, %c112_382] : memref<8x512xbf16, #tpu.memory_space<vmem>>, vector<8x256xbf16>
    %c8_383 = arith.constant 8 : index
    %c256_384 = arith.constant 256 : index
    %434 = vector.load %arg15[%c8_383, %c256_384] : memref<200x512xbf16, #tpu.memory_space<vmem>>, vector<8x256xbf16>
    tpu.vector_store %arg15[%c8_383, %c256_384], %433 {strides = array<i32>} : memref<200x512xbf16, #tpu.memory_space<vmem>>, vector<8x256xbf16>,
    %c0_385 = arith.constant 0 : index
    %c113_386 = arith.constant 113 : index
    %435 = vector.load %arg16[%c0_385, %c113_386] : memref<8x512xbf16, #tpu.memory_space<vmem>>, vector<8x256xbf16>
    %cst_387 = arith.constant 0.000000e+00 : f32
    %436 = arith.truncf %cst_387 : f32 to bf16
    %437 = vector.broadcast %436 : bf16 to vector<8x256xbf16>
    %438 = arith.select %45, %435, %437 : vector<8x256xi1>, vector<8x256xbf16>
    %c16_388 = arith.constant 16 : index
    %c256_389 = arith.constant 256 : index
    %439 = vector.load %arg15[%c16_388, %c256_389] : memref<200x512xbf16, #tpu.memory_space<vmem>>, vector<8x256xbf16>
    tpu.vector_store %arg15[%c16_388, %c256_389], %438 {strides = array<i32>} : memref<200x512xbf16, #tpu.memory_space<vmem>>, vector<8x256xbf16>,
    %c0_390 = arith.constant 0 : index
    %c127_391 = arith.constant 127 : index
    %440 = vector.load %arg16[%c0_390, %c127_391] : memref<8x512xbf16, #tpu.memory_space<vmem>>, vector<8x256xbf16>
    %cst_392 = arith.constant 0.000000e+00 : f32
    %441 = arith.truncf %cst_392 : f32 to bf16
    %442 = vector.broadcast %441 : bf16 to vector<8x256xbf16>
    %443 = arith.select %36, %440, %442 : vector<8x256xi1>, vector<8x256xbf16>
    %c24_393 = arith.constant 24 : index
    %c256_394 = arith.constant 256 : index
    %444 = vector.load %arg15[%c24_393, %c256_394] : memref<200x512xbf16, #tpu.memory_space<vmem>>, vector<8x256xbf16>
    tpu.vector_store %arg15[%c24_393, %c256_394], %443 {strides = array<i32>} : memref<200x512xbf16, #tpu.memory_space<vmem>>, vector<8x256xbf16>,
    %c0_395 = arith.constant 0 : index
    %c128_396 = arith.constant 128 : index
    %445 = vector.load %arg16[%c0_395, %c128_396] : memref<8x512xbf16, #tpu.memory_space<vmem>>, vector<8x256xbf16>
    %c32_397 = arith.constant 32 : index
    %c256_398 = arith.constant 256 : index
    %446 = vector.load %arg15[%c32_397, %c256_398] : memref<200x512xbf16, #tpu.memory_space<vmem>>, vector<8x256xbf16>
    tpu.vector_store %arg15[%c32_397, %c256_398], %445 {strides = array<i32>} : memref<200x512xbf16, #tpu.memory_space<vmem>>, vector<8x256xbf16>,
    %c0_399 = arith.constant 0 : index
    %c129_400 = arith.constant 129 : index
    %447 = vector.load %arg16[%c0_399, %c129_400] : memref<8x512xbf16, #tpu.memory_space<vmem>>, vector<8x256xbf16>
    %cst_401 = arith.constant 0.000000e+00 : f32
    %448 = arith.truncf %cst_401 : f32 to bf16
    %449 = vector.broadcast %448 : bf16 to vector<8x256xbf16>
    %450 = arith.select %45, %447, %449 : vector<8x256xi1>, vector<8x256xbf16>
    %c40_402 = arith.constant 40 : index
    %c256_403 = arith.constant 256 : index
    %451 = vector.load %arg15[%c40_402, %c256_403] : memref<200x512xbf16, #tpu.memory_space<vmem>>, vector<8x256xbf16>
    tpu.vector_store %arg15[%c40_402, %c256_403], %450 {strides = array<i32>} : memref<200x512xbf16, #tpu.memory_space<vmem>>, vector<8x256xbf16>,
    %c0_404 = arith.constant 0 : index
    %c143_405 = arith.constant 143 : index
    %452 = vector.load %arg16[%c0_404, %c143_405] : memref<8x512xbf16, #tpu.memory_space<vmem>>, vector<8x256xbf16>
    %cst_406 = arith.constant 0.000000e+00 : f32
    %453 = arith.truncf %cst_406 : f32 to bf16
    %454 = vector.broadcast %453 : bf16 to vector<8x256xbf16>
    %455 = arith.select %36, %452, %454 : vector<8x256xi1>, vector<8x256xbf16>
    %c48_407 = arith.constant 48 : index
    %c256_408 = arith.constant 256 : index
    %456 = vector.load %arg15[%c48_407, %c256_408] : memref<200x512xbf16, #tpu.memory_space<vmem>>, vector<8x256xbf16>
    tpu.vector_store %arg15[%c48_407, %c256_408], %455 {strides = array<i32>} : memref<200x512xbf16, #tpu.memory_space<vmem>>, vector<8x256xbf16>,
    %c0_409 = arith.constant 0 : index
    %c144_410 = arith.constant 144 : index
    %457 = vector.load %arg16[%c0_409, %c144_410] : memref<8x512xbf16, #tpu.memory_space<vmem>>, vector<8x256xbf16>
    %c56_411 = arith.constant 56 : index
    %c256_412 = arith.constant 256 : index
    %458 = vector.load %arg15[%c56_411, %c256_412] : memref<200x512xbf16, #tpu.memory_space<vmem>>, vector<8x256xbf16>
    tpu.vector_store %arg15[%c56_411, %c256_412], %457 {strides = array<i32>} : memref<200x512xbf16, #tpu.memory_space<vmem>>, vector<8x256xbf16>,
    %c0_413 = arith.constant 0 : index
    %c145_414 = arith.constant 145 : index
    %459 = vector.load %arg16[%c0_413, %c145_414] : memref<8x512xbf16, #tpu.memory_space<vmem>>, vector<8x256xbf16>
    %cst_415 = arith.constant 0.000000e+00 : f32
    %460 = arith.truncf %cst_415 : f32 to bf16
    %461 = vector.broadcast %460 : bf16 to vector<8x256xbf16>
    %462 = arith.select %45, %459, %461 : vector<8x256xi1>, vector<8x256xbf16>
    %c64_416 = arith.constant 64 : index
    %c256_417 = arith.constant 256 : index
    %463 = vector.load %arg15[%c64_416, %c256_417] : memref<200x512xbf16, #tpu.memory_space<vmem>>, vector<8x256xbf16>
    tpu.vector_store %arg15[%c64_416, %c256_417], %462 {strides = array<i32>} : memref<200x512xbf16, #tpu.memory_space<vmem>>, vector<8x256xbf16>,
    %c0_418 = arith.constant 0 : index
    %c0_419 = arith.constant 0 : index
    %464 = vector.load %arg10[%c0_418, %c0_419] : memref<8x72xbf16, #tpu.memory_space<vmem>>, vector<8x72xbf16>
    %c0_420 = arith.constant 0 : index
    %c0_421 = arith.constant 0 : index
    %465 = vector.load %arg15[%c0_420, %c0_421] : memref<200x512xbf16, #tpu.memory_space<vmem>>, vector<72x512xbf16>
    %cst_422 = arith.constant dense<0.000000e+00> : vector<8x512xf32>
    %466 = tpu.matmul %464, %465, %cst_422 {dimension_numbers = #tpu.dot_dimension_numbers<[1], [0], [0], [1], [0, 0, 1, 1], [], []>} : vector<8x72xbf16>, vector<72x512xbf16>, vector<8x512xf32> -> vector<8x512xf32>
    %c0_423 = arith.constant 0 : index
    %c0_424 = arith.constant 0 : index
    %467 = vector.load %arg11[%c0_423, %c0_424] : memref<8x1xf32, #tpu.memory_space<vmem>>, vector<8x1xf32>
    %468 = vector.broadcast %467 : vector<8x1xf32> to vector<8x512xf32>
    %469 = arith.addf %466, %468 : vector<8x512xf32>
    %cst_425 = arith.constant 0.000000e+00 : f32
    %470 = vector.broadcast %cst_425 : f32 to vector<8x512xf32>
    %471 = arith.maximumf %469, %470 : vector<8x512xf32>
    %c0_426 = arith.constant 0 : index
    %c0_427 = arith.constant 0 : index
    %472 = vector.load %arg12[%c0_426, %c0_427] : memref<8x1xf32, #tpu.memory_space<vmem>>, vector<8x1xf32>
    %473 = vector.broadcast %472 : vector<8x1xf32> to vector<8x512xf32>
    %474 = arith.mulf %471, %473 : vector<8x512xf32>
    %c0_428 = arith.constant 0 : index
    %c0_429 = arith.constant 0 : index
    %475 = vector.load %arg13[%c0_428, %c0_429] : memref<8x1xf32, #tpu.memory_space<vmem>>, vector<8x1xf32>
    %476 = vector.broadcast %475 : vector<8x1xf32> to vector<8x512xf32>
    %477 = arith.addf %474, %476 : vector<8x512xf32>
    %478 = arith.addf %477, %386 : vector<8x512xf32>
    %c0_430 = arith.constant 0 : index
    %c0_431 = arith.constant 0 : index
    %479 = vector.load %arg14[%c0_430, %c0_431] : memref<8x512xf32, #tpu.memory_space<vmem>>, vector<8x512xf32>
    tpu.vector_store %arg14[%c0_430, %c0_431], %478 {strides = array<i32>} : memref<8x512xf32, #tpu.memory_space<vmem>>, vector<8x512xf32>,
    return
  }
  func.func @transform_0(%arg0: i32) -> (i32, i32) {
    %c0_i32 = arith.constant 0 : i32
    %c0_i32_0 = arith.constant 0 : i32
    return %c0_i32, %arg0 : i32, i32
  }
  func.func @transform_1(%arg0: i32) -> (i32, i32) {
    %c0_i32 = arith.constant 0 : i32
    %c0_i32_0 = arith.constant 0 : i32
    %c0_i32_1 = arith.constant 0 : i32
    return %c0_i32, %c0_i32_0 : i32, i32
  }
  func.func @transform_2(%arg0: i32) -> (i32, i32) {
    %c0_i32 = arith.constant 0 : i32
    %c0_i32_0 = arith.constant 0 : i32
    %c0_i32_1 = arith.constant 0 : i32
    return %c0_i32, %c0_i32_0 : i32, i32
  }
  func.func @transform_3(%arg0: i32) -> (i32, i32) {
    %c0_i32 = arith.constant 0 : i32
    %c0_i32_0 = arith.constant 0 : i32
    %c0_i32_1 = arith.constant 0 : i32
    return %c0_i32, %c0_i32_0 : i32, i32
  }
  func.func @transform_4(%arg0: i32) -> (i32, i32) {
    %c0_i32 = arith.constant 0 : i32
    %c0_i32_0 = arith.constant 0 : i32
    %c0_i32_1 = arith.constant 0 : i32
    return %c0_i32, %c0_i32_0 : i32, i32
  }
  func.func @transform_5(%arg0: i32) -> (i32, i32) {
    %c0_i32 = arith.constant 0 : i32
    %c0_i32_0 = arith.constant 0 : i32
    %c0_i32_1 = arith.constant 0 : i32
    return %c0_i32, %c0_i32_0 : i32, i32
  }
  func.func @transform_6(%arg0: i32) -> (i32, i32) {
    %c0_i32 = arith.constant 0 : i32
    %c0_i32_0 = arith.constant 0 : i32
    %c0_i32_1 = arith.constant 0 : i32
    return %c0_i32, %c0_i32_0 : i32, i32
  }
  func.func @transform_7(%arg0: i32) -> (i32, i32) {
    %c0_i32 = arith.constant 0 : i32
    %c0_i32_0 = arith.constant 0 : i32
    %c0_i32_1 = arith.constant 0 : i32
    return %c0_i32, %c0_i32_0 : i32, i32
  }
  func.func @transform_8(%arg0: i32) -> (i32, i32) {
    %c0_i32 = arith.constant 0 : i32
    %c0_i32_0 = arith.constant 0 : i32
    %c0_i32_1 = arith.constant 0 : i32
    return %c0_i32, %c0_i32_0 : i32, i32
  }
  func.func @transform_9(%arg0: i32) -> (i32, i32) {
    %c0_i32 = arith.constant 0 : i32
    %c0_i32_0 = arith.constant 0 : i32
    %c0_i32_1 = arith.constant 0 : i32
    return %c0_i32, %c0_i32_0 : i32, i32
  }
  func.func @transform_10(%arg0: i32) -> (i32, i32) {
    %c0_i32 = arith.constant 0 : i32
    %c0_i32_0 = arith.constant 0 : i32
    %c0_i32_1 = arith.constant 0 : i32
    return %c0_i32, %c0_i32_0 : i32, i32
  }
  func.func @transform_11(%arg0: i32) -> (i32, i32) {
    %c0_i32 = arith.constant 0 : i32
    %c0_i32_0 = arith.constant 0 : i32
    %c0_i32_1 = arith.constant 0 : i32
    return %c0_i32, %c0_i32_0 : i32, i32
  }
  func.func @transform_12(%arg0: i32) -> (i32, i32) {
    %c0_i32 = arith.constant 0 : i32
    %c0_i32_0 = arith.constant 0 : i32
    %c0_i32_1 = arith.constant 0 : i32
    return %c0_i32, %c0_i32_0 : i32, i32
  }
  func.func @transform_13(%arg0: i32) -> (i32, i32) {
    %c0_i32 = arith.constant 0 : i32
    %c0_i32_0 = arith.constant 0 : i32
    return %c0_i32, %arg0 : i32, i32
  }
}

</mosaic_0001>

<llo_original>
// kernel: forward.1
$region0: #{forward.1}
  #allocation0 [shape = 'u32[]', space=smem, size = 0x4, offset = 0x4, fixed_abs, tag = 'smem constant byte address 0x4 - core index']
  #allocation1 [shape = 'u32[144,128]{1,0:T(1,128)}', space=vmem, size = 0x12000, scoped, tag = 'internal scratch']
  #allocation2 [shape = 'bf16[200,512]{1,0:T(8,128)(2,1)}', space=vmem, size = 0x32000, scoped, tag = 'scratch operand']
  #allocation3 [shape = 'bf16[8,512]{1,0:T(8,128)(2,1)}', space=vmem, size = 0x2000, scoped, tag = 'scratch operand']
  %s0 = inlined_call_operand.vmem [shape: f32[8,512], index: 0, kind: input, shape index: {}]
  %s1 = inlined_call_operand.vmem [shape: bf16[8,200], index: 1, kind: input, shape index: {}]
  %s2 = inlined_call_operand.vmem [shape: f32[8,1], index: 2, kind: input, shape index: {}]
  %s3 = inlined_call_operand.vmem [shape: f32[8,1], index: 3, kind: input, shape index: {}]
  %s4 = inlined_call_operand.vmem [shape: f32[8,1], index: 4, kind: input, shape index: {}]
  %s5 = inlined_call_operand.vmem [shape: bf16[8,72], index: 5, kind: input, shape index: {}]
  %s6 = inlined_call_operand.vmem [shape: f32[8,1], index: 6, kind: input, shape index: {}]
  %s7 = inlined_call_operand.vmem [shape: f32[8,1], index: 7, kind: input, shape index: {}]
  %s8 = inlined_call_operand.vmem [shape: f32[8,1], index: 8, kind: input, shape index: {}]
  %s9 = inlined_call_operand.vmem [shape: bf16[8,72], index: 9, kind: input, shape index: {}]
  %s10 = inlined_call_operand.vmem [shape: f32[8,1], index: 10, kind: input, shape index: {}]
  %s11 = inlined_call_operand.vmem [shape: f32[8,1], index: 11, kind: input, shape index: {}]
  %s12 = inlined_call_operand.vmem [shape: f32[8,1], index: 12, kind: input, shape index: {}]
  %s13 = inlined_call_operand.vmem [shape: f32[8,512], index: 13, kind: output, shape index: {}]
  %s14 = sld [smem:[#allocation0]]
  $region62: #{forward.1} parent=0
    _
  %s16 = ssub.s32 1, %s14
  %s17 = scalar_select 0, %s16, %s14
  // Predicated region
  $region2: #{forward.1} parent=0 // pred_check
    _
  $region3: #{forward.1} parent=0 // pred_check_branch
    %19 = sbr.rel (0) target = $region5
  $region4: #{forward.1} parent=0 // pred_region
    _
  $region5: #{forward.1} parent=0 // pred_fallthru
    _
  // Predicated region
  $region6: #{forward.1} parent=0 // pred_check
    _
  $region7: #{forward.1} parent=0 // pred_check_branch
    %21 = sbr.rel (0) target = $region9
  $region8: #{forward.1} parent=0 // pred_region
    _
  $region9: #{forward.1} parent=0 // pred_fallthru
    _
  // Predicated region
  $region10: #{forward.1} parent=0 // pred_check
    _
  $region11: #{forward.1} parent=0 // pred_check_branch
    %23 = sbr.rel (0) target = $region13
  $region12: #{forward.1} parent=0 // pred_region
    _
  $region13: #{forward.1} parent=0 // pred_fallthru
    _
  // Predicated region
  $region14: #{forward.1} parent=0 // pred_check
    _
  $region15: #{forward.1} parent=0 // pred_check_branch
    %25 = sbr.rel (0) target = $region17
  $region16: #{forward.1} parent=0 // pred_region
    _
  $region17: #{forward.1} parent=0 // pred_fallthru
    _
  // Predicated region
  $region18: #{forward.1} parent=0 // pred_check
    _
  $region19: #{forward.1} parent=0 // pred_check_branch
    %27 = sbr.rel (0) target = $region21
  $region20: #{forward.1} parent=0 // pred_region
    _
  $region21: #{forward.1} parent=0 // pred_fallthru
    _
  // Predicated region
  $region22: #{forward.1} parent=0 // pred_check
    _
  $region23: #{forward.1} parent=0 // pred_check_branch
    %29 = sbr.rel (0) target = $region25
  $region24: #{forward.1} parent=0 // pred_region
    _
  $region25: #{forward.1} parent=0 // pred_fallthru
    _
  // Predicated region
  $region26: #{forward.1} parent=0 // pred_check
    _
  $region27: #{forward.1} parent=0 // pred_check_branch
    %31 = sbr.rel (0) target = $region29
  $region28: #{forward.1} parent=0 // pred_region
    _
  $region29: #{forward.1} parent=0 // pred_fallthru
    _
  // Predicated region
  $region30: #{forward.1} parent=0 // pred_check
    _
  $region31: #{forward.1} parent=0 // pred_check_branch
    %33 = sbr.rel (0) target = $region33
  $region32: #{forward.1} parent=0 // pred_region
    _
  $region33: #{forward.1} parent=0 // pred_fallthru
    _
  // Predicated region
  $region34: #{forward.1} parent=0 // pred_check
    _
  $region35: #{forward.1} parent=0 // pred_check_branch
    %35 = sbr.rel (0) target = $region37
  $region36: #{forward.1} parent=0 // pred_region
    _
  $region37: #{forward.1} parent=0 // pred_fallthru
    _
  // Predicated region
  $region38: #{forward.1} parent=0 // pred_check
    _
  $region39: #{forward.1} parent=0 // pred_check_branch
    %37 = sbr.rel (0) target = $region41
  $region40: #{forward.1} parent=0 // pred_region
    _
  $region41: #{forward.1} parent=0 // pred_fallthru
    _
  // Predicated region
  $region42: #{forward.1} parent=0 // pred_check
    _
  $region43: #{forward.1} parent=0 // pred_check_branch
    %39 = sbr.rel (0) target = $region45
  $region44: #{forward.1} parent=0 // pred_region
    _
  $region45: #{forward.1} parent=0 // pred_fallthru
    _
  // Predicated region
  $region46: #{forward.1} parent=0 // pred_check
    _
  $region47: #{forward.1} parent=0 // pred_check_branch
    %41 = sbr.rel (0) target = $region49
  $region48: #{forward.1} parent=0 // pred_region
    _
  $region49: #{forward.1} parent=0 // pred_fallthru
    _
  // Predicated region
  $region50: #{forward.1} parent=0 // pred_check
    _
  $region51: #{forward.1} parent=0 // pred_check_branch
    %43 = sbr.rel (0) target = $region53
  $region52: #{forward.1} parent=0 // pred_region
    _
  $region53: #{forward.1} parent=0 // pred_fallthru
    _
  %47 = vst [vmem:[#allocation3] sm:$0xff] 0
  %48 = vst [vmem:[#allocation3 + $0x8] sm:$0xff] 0
  %v49 = vlaneseq
  %v50 = vand.u32 %v49, 127
  %v51 = vadd.s32 %v50, 128
  %vm52 = vcmp.lt.s32.totalorder %v50, 0
  %v53 = vsub.s32 0, %v50
  %v54 = vsel %vm52, %v53, %v50
  %v55 = vshrl.u32 %v54, 4
  %v56 = vand.u32 %v54, 15
  %v57 = vsub.s32 0, %v56
  %v58 = vsel %vm52, %v57, %v56
  %vm59 = vcmp.lt.s32.totalorder %v51, 0
  %v60 = vsub.s32 0, %v51
  %v61 = vsel %vm59, %v60, %v51
  %v62 = vshrl.u32 %v61, 4
  %v63 = vand.u32 %v61, 15
  %v64 = vsub.s32 0, %v63
  %v65 = vsel %vm59, %v64, %v63
  %vm66 = vcmp.ne.s32.totalorder %v58, 0
  %vm67 = vcmp.ne.s32.totalorder %v65, 0
  %vm68 = vcmp.lt.s32.totalorder %v58, 0
  %vm69 = vcmp.lt.s32.totalorder %v65, 0
  %vm70 = vmand %vm68, %vm66
  %vm71 = vmand %vm69, %vm67
  %v72 = vadd.s32 %v58, 16
  %v73 = vadd.s32 %v65, 16
  %v74 = vsel %vm70, %v72, %v58
  %v75 = vsel %vm71, %v73, %v65
  %v76 = vadd.s32 %v74, 4294967294
  %v77 = vadd.s32 %v75, 4294967294
  %vm78 = vcmp.ge.s32.totalorder %v76, 0
  %vm79 = vcmp.ge.s32.totalorder %v77, 0
  %vm80 = vcmp.lt.s32.totalorder %v76, 16
  %vm81 = vcmp.lt.s32.totalorder %v77, 16
  %vm82 = vmand %vm78, %vm80
  %vm83 = vmand %vm79, %vm81
  %v84 = vadd.s32 %v74, 4294967295
  %v85 = vadd.s32 %v75, 4294967295
  %vm86 = vcmp.ge.s32.totalorder %v84, 0
  %vm87 = vcmp.ge.s32.totalorder %v85, 0
  %vm88 = vcmp.lt.s32.totalorder %v84, 16
  %vm89 = vcmp.lt.s32.totalorder %v85, 16
  %vm90 = vmand %vm86, %vm88
  %vm91 = vmand %vm87, %vm89
  %v92 = vadd.s32 %v74, 1
  %v93 = vadd.s32 %v75, 1
  %vm94 = vcmp.ge.s32.totalorder %v92, 0
  %vm95 = vcmp.ge.s32.totalorder %v93, 0
  %vm96 = vcmp.lt.s32.totalorder %v92, 16
  %vm97 = vcmp.lt.s32.totalorder %v93, 16
  %vm98 = vmand %vm94, %vm96
  %vm99 = vmand %vm95, %vm97
  %v100 = vadd.s32 %v74, 2
  %v101 = vadd.s32 %v75, 2
  %vm102 = vcmp.ge.s32.totalorder %v100, 0
  %vm103 = vcmp.ge.s32.totalorder %v101, 0
  %vm104 = vcmp.lt.s32.totalorder %v100, 16
  %vm105 = vcmp.lt.s32.totalorder %v101, 16
  %vm106 = vmand %vm102, %vm104
  %vm107 = vmand %vm103, %vm105
  %v108 = vld [vmem:[%s0] sm:$0xff]
  %v109 = vld [vmem:[%s0 + $0x8] sm:$0xff]
  %v110 = vld [vmem:[%s0 + $0x10] sm:$0xff]
  %v111 = vld [vmem:[%s0 + $0x18] sm:$0xff]
  %v112 = vpack.c.bf16 %v108, %v108
  %v113 = vpack.c.bf16 %v109, %v109
  %v114 = vpack.c.bf16 %v110, %v110
  %v115 = vpack.c.bf16 %v111, %v111
  %v118 = vunpack.c.l.b16 %v112
  %v119 = vunpack.c.l.b16 %v113
  %v120 = vpack.c.b16 %v119, %v118
  %122 = vst [vmem:[#allocation3 + $0x4] sm:$0xff] %v120
  %v123 = vld [vmem:[#allocation3] sm:$0xff]
  %v124 = vld [vmem:[#allocation3 + $0x8] sm:$0xf]
  %vm125 = vmpackc.low %vm83, %vm82
  %v126 = vsel %vm125, 65537, 0
  %127 = vrot.lane.b32.xlu0 %v126, 94
  %v128 = vpop.permute.xlu0 %127
  %v129 = vrot.slane %v128, 4
  %vm130 = vcmask 769024
  %v131 = vsel %vm130, %v129, %v128
  %vm132 = vcmp.ne.s16.totalorder %v131, 0
  %vm133 = vcmp.ne.s16.totalorder %v129, 0
  %v134 = vsel %vm132, %v123, 0
  %v135 = vsel %vm133, %v124, 0
  %138 = vrot.lane.b32.xlu0 %v134, 34
  %v139 = vpop.permute.xlu0 %138
  %140 = vrot.lane.b32.xlu0 %v135, 34
  %v141 = vpop.permute.xlu0 %140
  %v142 = vrot.slane %v139, 4
  %v143 = vrot.slane %v141, 4
  %vm144 = vcmask 1043456
  %v145 = vsel %vm144, %v142, %v143
  %vm146 = vcmask 277504
  %v147 = vsel %vm146, %v139, %v145
  %149 = vst [vmem:[#allocation2] sm:$0xff] %v147
  %v150 = vld [vmem:[#allocation3] sm:$0xff]
  %v151 = vld [vmem:[#allocation3 + $0x8] sm:$0xf]
  %vm152 = vmpackc.low %vm91, %vm90
  %v153 = vsel %vm152, 65537, 0
  %154 = vrot.lane.b32.xlu0 %v153, 95
  %v155 = vpop.permute.xlu0 %154
  %v156 = vrot.slane %v155, 4
  %vm157 = vcmask 777216
  %v158 = vsel %vm157, %v156, %v155
  %vm159 = vcmp.ne.s16.totalorder %v158, 0
  %vm160 = vcmp.ne.s16.totalorder %v156, 0
  %v161 = vsel %vm159, %v150, 0
  %v162 = vsel %vm160, %v151, 0
  %165 = vrot.lane.b32.xlu0 %v161, 33
  %v166 = vpop.permute.xlu0 %165
  %167 = vrot.lane.b32.xlu0 %v162, 33
  %v168 = vpop.permute.xlu0 %167
  %v169 = vrot.slane %v166, 4
  %v170 = vrot.slane %v168, 4
  %v171 = vsel %vm144, %v169, %v170
  %vm172 = vcmask 269312
  %v173 = vsel %vm172, %v166, %v171
  %175 = vst [vmem:[#allocation2 + $0x10] sm:$0xff] %v173
  %v176 = vld [vmem:[#allocation3] sm:$0xff]
  %v177 = vld [vmem:[#allocation3 + $0x8] sm:$0xf]
  %180 = vrot.lane.b32.xlu0 %v176, 32
  %v181 = vpop.permute.xlu0 %180
  %182 = vrot.lane.b32.xlu0 %v177, 32
  %v183 = vpop.permute.xlu0 %182
  %v184 = vrot.slane %v181, 4
  %v185 = vrot.slane %v183, 4
  %v186 = vsel %vm144, %v184, %v185
  %vm187 = vcmask 261120
  %v188 = vsel %vm187, %v181, %v186
  %190 = vst [vmem:[#allocation2 + $0x20] sm:$0xff] %v188
  %v191 = vld [vmem:[#allocation3] sm:$0xff]
  %v192 = vld [vmem:[#allocation3 + $0x8] sm:$0xf]
  %vm193 = vmpackc.low %vm99, %vm98
  %v194 = vsel %vm193, 65537, 0
  %195 = vrot.lane.b32.xlu0 %v194, 97
  %v196 = vpop.permute.xlu0 %195
  %v197 = vrot.slane %v196, 4
  %vm198 = vcmask 793600
  %v199 = vsel %vm198, %v197, %v196
  %vm200 = vcmp.ne.s16.totalorder %v199, 0
  %vm201 = vcmp.ne.s16.totalorder %v197, 0
  %v202 = vsel %vm200, %v191, 0
  %v203 = vsel %vm201, %v192, 0
  %206 = vrot.lane.b32.xlu0 %v202, 31
  %v207 = vpop.permute.xlu0 %206
  %208 = vrot.lane.b32.xlu0 %v203, 31
  %v209 = vpop.permute.xlu0 %208
  %v210 = vrot.slane %v207, 4
  %v211 = vrot.slane %v209, 4
  %v212 = vsel %vm144, %v210, %v211
  %vm213 = vcmask 252928
  %v214 = vsel %vm213, %v207, %v212
  %216 = vst [vmem:[#allocation2 + $0x30] sm:$0xff] %v214
  %v217 = vld [vmem:[#allocation3] sm:$0xff]
  %v218 = vld [vmem:[#allocation3 + $0x8] sm:$0xf]
  %vm219 = vmpackc.low %vm107, %vm106
  %v220 = vsel %vm219, 65537, 0
  %221 = vrot.lane.b32.xlu0 %v220, 98
  %v222 = vpop.permute.xlu0 %221
  %v223 = vrot.slane %v222, 4
  %vm224 = vcmask 801792
  %v225 = vsel %vm224, %v223, %v222
  %vm226 = vcmp.ne.s16.totalorder %v225, 0
  %vm227 = vcmp.ne.s16.totalorder %v223, 0
  %v228 = vsel %vm226, %v217, 0
  %v229 = vsel %vm227, %v218, 0
  %232 = vrot.lane.b32.xlu0 %v228, 30
  %v233 = vpop.permute.xlu0 %232
  %234 = vrot.lane.b32.xlu0 %v229, 30
  %v235 = vpop.permute.xlu0 %234
  %v236 = vrot.slane %v233, 4
  %v237 = vrot.slane %v235, 4
  %v238 = vsel %vm144, %v236, %v237
  %vm239 = vcmask 244736
  %v240 = vsel %vm239, %v233, %v238
  %242 = vst [vmem:[#allocation2 + $0x40] sm:$0xff] %v240
  %v243 = vld [vmem:[#allocation3] sm:$0xff]
  %v244 = vld [vmem:[#allocation3 + $0x8] sm:$0xf]
  %245 = vrot.lane.b32.xlu0 %v126, 110
  %v246 = vpop.permute.xlu0 %245
  %v247 = vrot.slane %v246, 4
  %vm248 = vcmask 900096
  %v249 = vsel %vm248, %v247, %v246
  %vm250 = vcmp.ne.s16.totalorder %v249, 0
  %vm251 = vcmp.ne.s16.totalorder %v247, 0
  %v252 = vsel %vm250, %v243, 0
  %v253 = vsel %vm251, %v244, 0
  %256 = vrot.lane.b32.xlu0 %v252, 18
  %v257 = vpop.permute.xlu0 %256
  %258 = vrot.lane.b32.xlu0 %v253, 18
  %v259 = vpop.permute.xlu0 %258
  %v260 = vrot.slane %v257, 4
  %v261 = vrot.slane %v259, 4
  %v262 = vsel %vm144, %v260, %v261
  %vm263 = vcmask 146432
  %v264 = vsel %vm263, %v257, %v262
  %266 = vst [vmem:[#allocation2 + $0x50] sm:$0xff] %v264
  %v267 = vld [vmem:[#allocation3] sm:$0xff]
  %v268 = vld [vmem:[#allocation3 + $0x8] sm:$0xf]
  %269 = vrot.lane.b32.xlu0 %v153, 111
  %v270 = vpop.permute.xlu0 %269
  %v271 = vrot.slane %v270, 4
  %vm272 = vcmask 908288
  %v273 = vsel %vm272, %v271, %v270
  %vm274 = vcmp.ne.s16.totalorder %v273, 0
  %vm275 = vcmp.ne.s16.totalorder %v271, 0
  %v276 = vsel %vm274, %v267, 0
  %v277 = vsel %vm275, %v268, 0
  %280 = vrot.lane.b32.xlu0 %v276, 17
  %v281 = vpop.permute.xlu0 %280
  %282 = vrot.lane.b32.xlu0 %v277, 17
  %v283 = vpop.permute.xlu0 %282
  %v284 = vrot.slane %v281, 4
  %v285 = vrot.slane %v283, 4
  %v286 = vsel %vm144, %v284, %v285
  %vm287 = vcmask 138240
  %v288 = vsel %vm287, %v281, %v286
  %290 = vst [vmem:[#allocation2 + $0x60] sm:$0xff] %v288
  %v291 = vld [vmem:[#allocation3] sm:$0xff]
  %v292 = vld [vmem:[#allocation3 + $0x8] sm:$0xf]
  %295 = vrot.lane.b32.xlu0 %v291, 16
  %v296 = vpop.permute.xlu0 %295
  %297 = vrot.lane.b32.xlu0 %v292, 16
  %v298 = vpop.permute.xlu0 %297
  %v299 = vrot.slane %v296, 4
  %v300 = vrot.slane %v298, 4
  %v301 = vsel %vm144, %v299, %v300
  %vm302 = vcmask 130048
  %v303 = vsel %vm302, %v296, %v301
  %305 = vst [vmem:[#allocation2 + $0x70] sm:$0xff] %v303
  %v306 = vld [vmem:[#allocation3] sm:$0xff]
  %v307 = vld [vmem:[#allocation3 + $0x8] sm:$0xf]
  %308 = vrot.lane.b32.xlu0 %v194, 113
  %v309 = vpop.permute.xlu0 %308
  %v310 = vrot.slane %v309, 4
  %vm311 = vcmask 924672
  %v312 = vsel %vm311, %v310, %v309
  %vm313 = vcmp.ne.s16.totalorder %v312, 0
  %vm314 = vcmp.ne.s16.totalorder %v310, 0
  %v315 = vsel %vm313, %v306, 0
  %v316 = vsel %vm314, %v307, 0
  %319 = vrot.lane.b32.xlu0 %v315, 15
  %v320 = vpop.permute.xlu0 %319
  %321 = vrot.lane.b32.xlu0 %v316, 15
  %v322 = vpop.permute.xlu0 %321
  %v323 = vrot.slane %v320, 4
  %v324 = vrot.slane %v322, 4
  %v325 = vsel %vm144, %v323, %v324
  %vm326 = vcmask 121856
  %v327 = vsel %vm326, %v320, %v325
  %329 = vst [vmem:[#allocation2 + $0x80] sm:$0xff] %v327
  %v330 = vld [vmem:[#allocation3] sm:$0xff]
  %v331 = vld [vmem:[#allocation3 + $0x8] sm:$0xf]
  %332 = vrot.lane.b32.xlu0 %v220, 114
  %v333 = vpop.permute.xlu0 %332
  %v334 = vrot.slane %v333, 4
  %vm335 = vcmask 932864
  %v336 = vsel %vm335, %v334, %v333
  %vm337 = vcmp.ne.s16.totalorder %v336, 0
  %vm338 = vcmp.ne.s16.totalorder %v334, 0
  %v339 = vsel %vm337, %v330, 0
  %v340 = vsel %vm338, %v331, 0
  %343 = vrot.lane.b32.xlu0 %v339, 14
  %v344 = vpop.permute.xlu0 %343
  %345 = vrot.lane.b32.xlu0 %v340, 14
  %v346 = vpop.permute.xlu0 %345
  %v347 = vrot.slane %v344, 4
  %v348 = vrot.slane %v346, 4
  %v349 = vsel %vm144, %v347, %v348
  %vm350 = vcmask 113664
  %v351 = vsel %vm350, %v344, %v349
  %353 = vst [vmem:[#allocation2 + $0x90] sm:$0xff] %v351
  %v354 = vld [vmem:[#allocation3] sm:$0xff]
  %v355 = vld [vmem:[#allocation3 + $0x8] sm:$0xf]
  %356 = vrot.lane.b32.xlu0 %v126, 126
  %v357 = vpop.permute.xlu0 %356
  %v358 = vrot.slane %v357, 4
  %vm359 = vcmask 1031168
  %v360 = vsel %vm359, %v358, %v357
  %vm361 = vcmp.ne.s16.totalorder %v360, 0
  %vm362 = vcmp.ne.s16.totalorder %v358, 0
  %v363 = vsel %vm361, %v354, 0
  %v364 = vsel %vm362, %v355, 0
  %367 = vrot.lane.b32.xlu0 %v363, 2
  %v368 = vpop.permute.xlu0 %367
  %369 = vrot.lane.b32.xlu0 %v364, 2
  %v370 = vpop.permute.xlu0 %369
  %v371 = vrot.slane %v368, 4
  %v372 = vrot.slane %v370, 4
  %v373 = vsel %vm144, %v371, %v372
  %vm374 = vcmask 15360
  %v375 = vsel %vm374, %v368, %v373
  %377 = vst [vmem:[#allocation2 + $0xa0] sm:$0xff] %v375
  %v378 = vld [vmem:[#allocation3] sm:$0xff]
  %v379 = vld [vmem:[#allocation3 + $0x8] sm:$0xf]
  %380 = vrot.lane.b32.xlu0 %v153, 127
  %v381 = vpop.permute.xlu0 %380
  %v382 = vrot.slane %v381, 4
  %vm383 = vcmask 1039360
  %v384 = vsel %vm383, %v382, %v381
  %vm385 = vcmp.ne.s16.totalorder %v384, 0
  %vm386 = vcmp.ne.s16.totalorder %v382, 0
  %v387 = vsel %vm385, %v378, 0
  %v388 = vsel %vm386, %v379, 0
  %391 = vrot.lane.b32.xlu0 %v387, 1
  %v392 = vpop.permute.xlu0 %391
  %393 = vrot.lane.b32.xlu0 %v388, 1
  %v394 = vpop.permute.xlu0 %393
  %v395 = vrot.slane %v392, 4
  %v396 = vrot.slane %v394, 4
  %v397 = vsel %vm144, %v395, %v396
  %vm398 = vcmask 7168
  %v399 = vsel %vm398, %v392, %v397
  %401 = vst [vmem:[#allocation2 + $0xb0] sm:$0xff] %v399
  %v402 = vld [vmem:[#allocation3 + $0x4] sm:$0xff]
  %403 = vst [vmem:[#allocation2 + $0xc0] sm:$0xff] %v402
  %v404 = vld [vmem:[#allocation3 + $0x4] sm:$0xff]
  %v405 = vld [vmem:[#allocation3 + $0xc] sm:$0xf]
  %406 = vrot.lane.b32.xlu0 %v194, 1
  %v407 = vpop.permute.xlu0 %406
  %v408 = vrot.slane %v407, 4
  %v409 = vsel %vm398, %v408, %v407
  %vm410 = vcmp.ne.s16.totalorder %v409, 0
  %vm411 = vcmp.ne.s16.totalorder %v408, 0
  %v412 = vsel %vm410, %v404, 0
  %v413 = vsel %vm411, %v405, 0
  %416 = vrot.lane.b32.xlu0 %v412, 127
  %v417 = vpop.permute.xlu0 %416
  %418 = vrot.lane.b32.xlu0 %v413, 127
  %v419 = vpop.permute.xlu0 %418
  %v420 = vrot.slane %v417, 4
  %v421 = vrot.slane %v419, 4
  %v422 = vsel %vm144, %v420, %v421
  %v423 = vsel %vm383, %v417, %v422
  %425 = vst [vmem:[#allocation2 + $0xd0] sm:$0xff] %v423
  %v426 = vld [vmem:[#allocation3 + $0x4] sm:$0xff]
  %v427 = vld [vmem:[#allocation3 + $0xc] sm:$0xf]
  %428 = vrot.lane.b32.xlu0 %v220, 2
  %v429 = vpop.permute.xlu0 %428
  %v430 = vrot.slane %v429, 4
  %v431 = vsel %vm374, %v430, %v429
  %vm432 = vcmp.ne.s16.totalorder %v431, 0
  %vm433 = vcmp.ne.s16.totalorder %v430, 0
  %v434 = vsel %vm432, %v426, 0
  %v435 = vsel %vm433, %v427, 0
  %438 = vrot.lane.b32.xlu0 %v434, 126
  %v439 = vpop.permute.xlu0 %438
  %440 = vrot.lane.b32.xlu0 %v435, 126
  %v441 = vpop.permute.xlu0 %440
  %v442 = vrot.slane %v439, 4
  %v443 = vrot.slane %v441, 4
  %v444 = vsel %vm144, %v442, %v443
  %v445 = vsel %vm359, %v439, %v444
  %447 = vst [vmem:[#allocation2 + $0xe0] sm:$0xff] %v445
  %v448 = vld [vmem:[#allocation3 + $0x4] sm:$0xff]
  %v449 = vld [vmem:[#allocation3 + $0xc] sm:$0xf]
  %450 = vrot.lane.b32.xlu0 %v126, 14
  %v451 = vpop.permute.xlu0 %450
  %v452 = vrot.slane %v451, 4
  %v453 = vsel %vm350, %v452, %v451
  %vm454 = vcmp.ne.s16.totalorder %v453, 0
  %vm455 = vcmp.ne.s16.totalorder %v452, 0
  %v456 = vsel %vm454, %v448, 0
  %v457 = vsel %vm455, %v449, 0
  %460 = vrot.lane.b32.xlu0 %v456, 114
  %v461 = vpop.permute.xlu0 %460
  %462 = vrot.lane.b32.xlu0 %v457, 114
  %v463 = vpop.permute.xlu0 %462
  %v464 = vrot.slane %v461, 4
  %v465 = vrot.slane %v463, 4
  %v466 = vsel %vm144, %v464, %v465
  %v467 = vsel %vm335, %v461, %v466
  %469 = vst [vmem:[#allocation2 + $0xf0] sm:$0xff] %v467
  %v470 = vld [vmem:[#allocation3 + $0x4] sm:$0xff]
  %v471 = vld [vmem:[#allocation3 + $0xc] sm:$0xf]
  %472 = vrot.lane.b32.xlu0 %v153, 15
  %v473 = vpop.permute.xlu0 %472
  %v474 = vrot.slane %v473, 4
  %v475 = vsel %vm326, %v474, %v473
  %vm476 = vcmp.ne.s16.totalorder %v475, 0
  %vm477 = vcmp.ne.s16.totalorder %v474, 0
  %v478 = vsel %vm476, %v470, 0
  %v479 = vsel %vm477, %v471, 0
  %482 = vrot.lane.b32.xlu0 %v478, 113
  %v483 = vpop.permute.xlu0 %482
  %484 = vrot.lane.b32.xlu0 %v479, 113
  %v485 = vpop.permute.xlu0 %484
  %v486 = vrot.slane %v483, 4
  %v487 = vrot.slane %v485, 4
  %v488 = vsel %vm144, %v486, %v487
  %v489 = vsel %vm311, %v483, %v488
  %491 = vst [vmem:[#allocation2 + $0x100] sm:$0xff] %v489
  %v492 = vld [vmem:[#allocation3 + $0x4] sm:$0xff]
  %v493 = vld [vmem:[#allocation3 + $0xc] sm:$0xf]
  %496 = vrot.lane.b32.xlu0 %v492, 112
  %v497 = vpop.permute.xlu0 %496
  %498 = vrot.lane.b32.xlu0 %v493, 112
  %v499 = vpop.permute.xlu0 %498
  %v500 = vrot.slane %v497, 4
  %v501 = vrot.slane %v499, 4
  %v502 = vsel %vm144, %v500, %v501
  %vm503 = vcmask 916480
  %v504 = vsel %vm503, %v497, %v502
  %506 = vst [vmem:[#allocation2 + $0x110] sm:$0xff] %v504
  %v507 = vld [vmem:[#allocation3 + $0x4] sm:$0xff]
  %v508 = vld [vmem:[#allocation3 + $0xc] sm:$0xf]
  %509 = vrot.lane.b32.xlu0 %v194, 17
  %v510 = vpop.permute.xlu0 %509
  %v511 = vrot.slane %v510, 4
  %v512 = vsel %vm287, %v511, %v510
  %vm513 = vcmp.ne.s16.totalorder %v512, 0
  %vm514 = vcmp.ne.s16.totalorder %v511, 0
  %v515 = vsel %vm513, %v507, 0
  %v516 = vsel %vm514, %v508, 0
  %519 = vrot.lane.b32.xlu0 %v515, 111
  %v520 = vpop.permute.xlu0 %519
  %521 = vrot.lane.b32.xlu0 %v516, 111
  %v522 = vpop.permute.xlu0 %521
  %v523 = vrot.slane %v520, 4
  %v524 = vrot.slane %v522, 4
  %v525 = vsel %vm144, %v523, %v524
  %v526 = vsel %vm272, %v520, %v525
  %528 = vst [vmem:[#allocation2 + $0x120] sm:$0xff] %v526
  %v529 = vld [vmem:[#allocation3 + $0x4] sm:$0xff]
  %v530 = vld [vmem:[#allocation3 + $0xc] sm:$0xf]
  %531 = vrot.lane.b32.xlu0 %v220, 18
  %v532 = vpop.permute.xlu0 %531
  %v533 = vrot.slane %v532, 4
  %v534 = vsel %vm263, %v533, %v532
  %vm535 = vcmp.ne.s16.totalorder %v534, 0
  %vm536 = vcmp.ne.s16.totalorder %v533, 0
  %v537 = vsel %vm535, %v529, 0
  %v538 = vsel %vm536, %v530, 0
  %541 = vrot.lane.b32.xlu0 %v537, 110
  %v542 = vpop.permute.xlu0 %541
  %543 = vrot.lane.b32.xlu0 %v538, 110
  %v544 = vpop.permute.xlu0 %543
  %v545 = vrot.slane %v542, 4
  %v546 = vrot.slane %v544, 4
  %v547 = vsel %vm144, %v545, %v546
  %v548 = vsel %vm248, %v542, %v547
  %550 = vst [vmem:[#allocation2 + $0x130] sm:$0xff] %v548
  %v551 = vld [vmem:[#allocation3 + $0x4] sm:$0xff]
  %v552 = vld [vmem:[#allocation3 + $0xc] sm:$0xf]
  %553 = vrot.lane.b32.xlu0 %v126, 30
  %v554 = vpop.permute.xlu0 %553
  %v555 = vrot.slane %v554, 4
  %v556 = vsel %vm239, %v555, %v554
  %vm557 = vcmp.ne.s16.totalorder %v556, 0
  %vm558 = vcmp.ne.s16.totalorder %v555, 0
  %v559 = vsel %vm557, %v551, 0
  %v560 = vsel %vm558, %v552, 0
  %563 = vrot.lane.b32.xlu0 %v559, 98
  %v564 = vpop.permute.xlu0 %563
  %565 = vrot.lane.b32.xlu0 %v560, 98
  %v566 = vpop.permute.xlu0 %565
  %v567 = vrot.slane %v564, 4
  %v568 = vrot.slane %v566, 4
  %v569 = vsel %vm144, %v567, %v568
  %v570 = vsel %vm224, %v564, %v569
  %572 = vst [vmem:[#allocation2 + $0x140] sm:$0xff] %v570
  %v573 = vld [vmem:[#allocation3 + $0x4] sm:$0xff]
  %v574 = vld [vmem:[#allocation3 + $0xc] sm:$0xf]
  %575 = vrot.lane.b32.xlu0 %v153, 31
  %v576 = vpop.permute.xlu0 %575
  %v577 = vrot.slane %v576, 4
  %v578 = vsel %vm213, %v577, %v576
  %vm579 = vcmp.ne.s16.totalorder %v578, 0
  %vm580 = vcmp.ne.s16.totalorder %v577, 0
  %v581 = vsel %vm579, %v573, 0
  %v582 = vsel %vm580, %v574, 0
  %585 = vrot.lane.b32.xlu0 %v581, 97
  %v586 = vpop.permute.xlu0 %585
  %587 = vrot.lane.b32.xlu0 %v582, 97
  %v588 = vpop.permute.xlu0 %587
  %v589 = vrot.slane %v586, 4
  %v590 = vrot.slane %v588, 4
  %v591 = vsel %vm144, %v589, %v590
  %v592 = vsel %vm198, %v586, %v591
  %594 = vst [vmem:[#allocation2 + $0x150] sm:$0xff] %v592
  %v595 = vld [vmem:[#allocation3 + $0x4] sm:$0xff]
  %v596 = vld [vmem:[#allocation3 + $0xc] sm:$0xf]
  %599 = vrot.lane.b32.xlu0 %v595, 96
  %v600 = vpop.permute.xlu0 %599
  %601 = vrot.lane.b32.xlu0 %v596, 96
  %v602 = vpop.permute.xlu0 %601
  %v603 = vrot.slane %v600, 4
  %v604 = vrot.slane %v602, 4
  %v605 = vsel %vm144, %v603, %v604
  %vm606 = vcmask 785408
  %v607 = vsel %vm606, %v600, %v605
  %609 = vst [vmem:[#allocation2 + $0x160] sm:$0xff] %v607
  %v610 = vld [vmem:[#allocation3 + $0x4] sm:$0xff]
  %v611 = vld [vmem:[#allocation3 + $0xc] sm:$0xf]
  %612 = vrot.lane.b32.xlu0 %v194, 33
  %v613 = vpop.permute.xlu0 %612
  %v614 = vrot.slane %v613, 4
  %v615 = vsel %vm172, %v614, %v613
  %vm616 = vcmp.ne.s16.totalorder %v615, 0
  %vm617 = vcmp.ne.s16.totalorder %v614, 0
  %v618 = vsel %vm616, %v610, 0
  %v619 = vsel %vm617, %v611, 0
  %622 = vrot.lane.b32.xlu0 %v618, 95
  %v623 = vpop.permute.xlu0 %622
  %624 = vrot.lane.b32.xlu0 %v619, 95
  %v625 = vpop.permute.xlu0 %624
  %v626 = vrot.slane %v623, 4
  %v627 = vrot.slane %v625, 4
  %v628 = vsel %vm144, %v626, %v627
  %v629 = vsel %vm157, %v623, %v628
  %631 = vst [vmem:[#allocation2 + $0x170] sm:$0xff] %v629
  %v632 = vld [vmem:[#allocation3 + $0x4] sm:$0xff]
  %v633 = vld [vmem:[#allocation3 + $0xc] sm:$0xf]
  %634 = vrot.lane.b32.xlu0 %v220, 34
  %v635 = vpop.permute.xlu0 %634
  %v636 = vrot.slane %v635, 4
  %v637 = vsel %vm146, %v636, %v635
  %vm638 = vcmp.ne.s16.totalorder %v637, 0
  %vm639 = vcmp.ne.s16.totalorder %v636, 0
  %v640 = vsel %vm638, %v632, 0
  %v641 = vsel %vm639, %v633, 0
  %644 = vrot.lane.b32.xlu0 %v640, 94
  %v645 = vpop.permute.xlu0 %644
  %646 = vrot.lane.b32.xlu0 %v641, 94
  %v647 = vpop.permute.xlu0 %646
  %v648 = vrot.slane %v645, 4
  %v649 = vrot.slane %v647, 4
  %v650 = vsel %vm144, %v648, %v649
  %v651 = vsel %vm130, %v645, %v650
  %653 = vst [vmem:[#allocation2 + $0x180] sm:$0xff] %v651
  %v656 = vunpack.c.l.b16 %v114
  %v657 = vunpack.c.l.b16 %v115
  %v658 = vpack.c.b16 %v657, %v656
  %660 = vst [vmem:[#allocation3 + $0x4] sm:$0xff] %v658
  %v661 = vld [vmem:[#allocation3] sm:$0xff]
  %v662 = vld [vmem:[#allocation3 + $0x8] sm:$0xf]
  %v663 = vsel %vm132, %v661, 0
  %v664 = vsel %vm133, %v662, 0
  %667 = vrot.lane.b32.xlu0 %v663, 34
  %v668 = vpop.permute.xlu0 %667
  %669 = vrot.lane.b32.xlu0 %v664, 34
  %v670 = vpop.permute.xlu0 %669
  %v671 = vrot.slane %v668, 4
  %v672 = vrot.slane %v670, 4
  %v673 = vsel %vm144, %v671, %v672
  %v674 = vsel %vm146, %v668, %v673
  %676 = vst [vmem:[#allocation2 + $0x8] sm:$0xff] %v674
  %v677 = vld [vmem:[#allocation3] sm:$0xff]
  %v678 = vld [vmem:[#allocation3 + $0x8] sm:$0xf]
  %v679 = vsel %vm159, %v677, 0
  %v680 = vsel %vm160, %v678, 0
  %683 = vrot.lane.b32.xlu0 %v679, 33
  %v684 = vpop.permute.xlu0 %683
  %685 = vrot.lane.b32.xlu0 %v680, 33
  %v686 = vpop.permute.xlu0 %685
  %v687 = vrot.slane %v684, 4
  %v688 = vrot.slane %v686, 4
  %v689 = vsel %vm144, %v687, %v688
  %v690 = vsel %vm172, %v684, %v689
  %692 = vst [vmem:[#allocation2 + $0x18] sm:$0xff] %v690
  %v693 = vld [vmem:[#allocation3] sm:$0xff]
  %v694 = vld [vmem:[#allocation3 + $0x8] sm:$0xf]
  %697 = vrot.lane.b32.xlu0 %v693, 32
  %v698 = vpop.permute.xlu0 %697
  %699 = vrot.lane.b32.xlu0 %v694, 32
  %v700 = vpop.permute.xlu0 %699
  %v701 = vrot.slane %v698, 4
  %v702 = vrot.slane %v700, 4
  %v703 = vsel %vm144, %v701, %v702
  %v704 = vsel %vm187, %v698, %v703
  %706 = vst [vmem:[#allocation2 + $0x28] sm:$0xff] %v704
  %v707 = vld [vmem:[#allocation3] sm:$0xff]
  %v708 = vld [vmem:[#allocation3 + $0x8] sm:$0xf]
  %v709 = vsel %vm200, %v707, 0
  %v710 = vsel %vm201, %v708, 0
  %713 = vrot.lane.b32.xlu0 %v709, 31
  %v714 = vpop.permute.xlu0 %713
  %715 = vrot.lane.b32.xlu0 %v710, 31
  %v716 = vpop.permute.xlu0 %715
  %v717 = vrot.slane %v714, 4
  %v718 = vrot.slane %v716, 4
  %v719 = vsel %vm144, %v717, %v718
  %v720 = vsel %vm213, %v714, %v719
  %722 = vst [vmem:[#allocation2 + $0x38] sm:$0xff] %v720
  %v723 = vld [vmem:[#allocation3] sm:$0xff]
  %v724 = vld [vmem:[#allocation3 + $0x8] sm:$0xf]
  %v725 = vsel %vm226, %v723, 0
  %v726 = vsel %vm227, %v724, 0
  %729 = vrot.lane.b32.xlu0 %v725, 30
  %v730 = vpop.permute.xlu0 %729
  %731 = vrot.lane.b32.xlu0 %v726, 30
  %v732 = vpop.permute.xlu0 %731
  %v733 = vrot.slane %v730, 4
  %v734 = vrot.slane %v732, 4
  %v735 = vsel %vm144, %v733, %v734
  %v736 = vsel %vm239, %v730, %v735
  %738 = vst [vmem:[#allocation2 + $0x48] sm:$0xff] %v736
  %v739 = vld [vmem:[#allocation3] sm:$0xff]
  %v740 = vld [vmem:[#allocation3 + $0x8] sm:$0xf]
  %v741 = vsel %vm250, %v739, 0
  %v742 = vsel %vm251, %v740, 0
  %745 = vrot.lane.b32.xlu0 %v741, 18
  %v746 = vpop.permute.xlu0 %745
  %747 = vrot.lane.b32.xlu0 %v742, 18
  %v748 = vpop.permute.xlu0 %747
  %v749 = vrot.slane %v746, 4
  %v750 = vrot.slane %v748, 4
  %v751 = vsel %vm144, %v749, %v750
  %v752 = vsel %vm263, %v746, %v751
  %754 = vst [vmem:[#allocation2 + $0x58] sm:$0xff] %v752
  %v755 = vld [vmem:[#allocation3] sm:$0xff]
  %v756 = vld [vmem:[#allocation3 + $0x8] sm:$0xf]
  %v757 = vsel %vm274, %v755, 0
  %v758 = vsel %vm275, %v756, 0
  %761 = vrot.lane.b32.xlu0 %v757, 17
  %v762 = vpop.permute.xlu0 %761
  %763 = vrot.lane.b32.xlu0 %v758, 17
  %v764 = vpop.permute.xlu0 %763
  %v765 = vrot.slane %v762, 4
  %v766 = vrot.slane %v764, 4
  %v767 = vsel %vm144, %v765, %v766
  %v768 = vsel %vm287, %v762, %v767
  %770 = vst [vmem:[#allocation2 + $0x68] sm:$0xff] %v768
  %v771 = vld [vmem:[#allocation3] sm:$0xff]
  %v772 = vld [vmem:[#allocation3 + $0x8] sm:$0xf]
  %775 = vrot.lane.b32.xlu0 %v771, 16
  %v776 = vpop.permute.xlu0 %775
  %777 = vrot.lane.b32.xlu0 %v772, 16
  %v778 = vpop.permute.xlu0 %777
  %v779 = vrot.slane %v776, 4
  %v780 = vrot.slane %v778, 4
  %v781 = vsel %vm144, %v779, %v780
  %v782 = vsel %vm302, %v776, %v781
  %784 = vst [vmem:[#allocation2 + $0x78] sm:$0xff] %v782
  %v785 = vld [vmem:[#allocation3] sm:$0xff]
  %v786 = vld [vmem:[#allocation3 + $0x8] sm:$0xf]
  %v787 = vsel %vm313, %v785, 0
  %v788 = vsel %vm314, %v786, 0
  %791 = vrot.lane.b32.xlu0 %v787, 15
  %v792 = vpop.permute.xlu0 %791
  %793 = vrot.lane.b32.xlu0 %v788, 15
  %v794 = vpop.permute.xlu0 %793
  %v795 = vrot.slane %v792, 4
  %v796 = vrot.slane %v794, 4
  %v797 = vsel %vm144, %v795, %v796
  %v798 = vsel %vm326, %v792, %v797
  %800 = vst [vmem:[#allocation2 + $0x88] sm:$0xff] %v798
  %v801 = vld [vmem:[#allocation3] sm:$0xff]
  %v802 = vld [vmem:[#allocation3 + $0x8] sm:$0xf]
  %v803 = vsel %vm337, %v801, 0
  %v804 = vsel %vm338, %v802, 0
  %807 = vrot.lane.b32.xlu0 %v803, 14
  %v808 = vpop.permute.xlu0 %807
  %809 = vrot.lane.b32.xlu0 %v804, 14
  %v810 = vpop.permute.xlu0 %809
  %v811 = vrot.slane %v808, 4
  %v812 = vrot.slane %v810, 4
  %v813 = vsel %vm144, %v811, %v812
  %v814 = vsel %vm350, %v808, %v813
  %816 = vst [vmem:[#allocation2 + $0x98] sm:$0xff] %v814
  %v817 = vld [vmem:[#allocation3] sm:$0xff]
  %v818 = vld [vmem:[#allocation3 + $0x8] sm:$0xf]
  %v819 = vsel %vm361, %v817, 0
  %v820 = vsel %vm362, %v818, 0
  %823 = vrot.lane.b32.xlu0 %v819, 2
  %v824 = vpop.permute.xlu0 %823
  %825 = vrot.lane.b32.xlu0 %v820, 2
  %v826 = vpop.permute.xlu0 %825
  %v827 = vrot.slane %v824, 4
  %v828 = vrot.slane %v826, 4
  %v829 = vsel %vm144, %v827, %v828
  %v830 = vsel %vm374, %v824, %v829
  %832 = vst [vmem:[#allocation2 + $0xa8] sm:$0xff] %v830
  %v833 = vld [vmem:[#allocation3] sm:$0xff]
  %v834 = vld [vmem:[#allocation3 + $0x8] sm:$0xf]
  %v835 = vsel %vm385, %v833, 0
  %v836 = vsel %vm386, %v834, 0
  %839 = vrot.lane.b32.xlu0 %v835, 1
  %v840 = vpop.permute.xlu0 %839
  %841 = vrot.lane.b32.xlu0 %v836, 1
  %v842 = vpop.permute.xlu0 %841
  %v843 = vrot.slane %v840, 4
  %v844 = vrot.slane %v842, 4
  %v845 = vsel %vm144, %v843, %v844
  %v846 = vsel %vm398, %v840, %v845
  %848 = vst [vmem:[#allocation2 + $0xb8] sm:$0xff] %v846
  %v849 = vld [vmem:[#allocation3 + $0x4] sm:$0xff]
  %850 = vst [vmem:[#allocation2 + $0xc8] sm:$0xff] %v849
  %v851 = vld [vmem:[#allocation3 + $0x4] sm:$0xff]
  %v852 = vld [vmem:[#allocation3 + $0xc] sm:$0xf]
  %v853 = vsel %vm410, %v851, 0
  %v854 = vsel %vm411, %v852, 0
  %857 = vrot.lane.b32.xlu0 %v853, 127
  %v858 = vpop.permute.xlu0 %857
  %859 = vrot.lane.b32.xlu0 %v854, 127
  %v860 = vpop.permute.xlu0 %859
  %v861 = vrot.slane %v858, 4
  %v862 = vrot.slane %v860, 4
  %v863 = vsel %vm144, %v861, %v862
  %v864 = vsel %vm383, %v858, %v863
  %866 = vst [vmem:[#allocation2 + $0xd8] sm:$0xff] %v864
  %v867 = vld [vmem:[#allocation3 + $0x4] sm:$0xff]
  %v868 = vld [vmem:[#allocation3 + $0xc] sm:$0xf]
  %v869 = vsel %vm432, %v867, 0
  %v870 = vsel %vm433, %v868, 0
  %873 = vrot.lane.b32.xlu0 %v869, 126
  %v874 = vpop.permute.xlu0 %873
  %875 = vrot.lane.b32.xlu0 %v870, 126
  %v876 = vpop.permute.xlu0 %875
  %v877 = vrot.slane %v874, 4
  %v878 = vrot.slane %v876, 4
  %v879 = vsel %vm144, %v877, %v878
  %v880 = vsel %vm359, %v874, %v879
  %882 = vst [vmem:[#allocation2 + $0xe8] sm:$0xff] %v880
  %v883 = vld [vmem:[#allocation3 + $0x4] sm:$0xff]
  %v884 = vld [vmem:[#allocation3 + $0xc] sm:$0xf]
  %v885 = vsel %vm454, %v883, 0
  %v886 = vsel %vm455, %v884, 0
  %889 = vrot.lane.b32.xlu0 %v885, 114
  %v890 = vpop.permute.xlu0 %889
  %891 = vrot.lane.b32.xlu0 %v886, 114
  %v892 = vpop.permute.xlu0 %891
  %v893 = vrot.slane %v890, 4
  %v894 = vrot.slane %v892, 4
  %v895 = vsel %vm144, %v893, %v894
  %v896 = vsel %vm335, %v890, %v895
  %898 = vst [vmem:[#allocation2 + $0xf8] sm:$0xff] %v896
  %v899 = vld [vmem:[#allocation3 + $0x4] sm:$0xff]
  %v900 = vld [vmem:[#allocation3 + $0xc] sm:$0xf]
  %v901 = vsel %vm476, %v899, 0
  %v902 = vsel %vm477, %v900, 0
  %905 = vrot.lane.b32.xlu0 %v901, 113
  %v906 = vpop.permute.xlu0 %905
  %907 = vrot.lane.b32.xlu0 %v902, 113
  %v908 = vpop.permute.xlu0 %907
  %v909 = vrot.slane %v906, 4
  %v910 = vrot.slane %v908, 4
  %v911 = vsel %vm144, %v909, %v910
  %v912 = vsel %vm311, %v906, %v911
  %914 = vst [vmem:[#allocation2 + $0x108] sm:$0xff] %v912
  %v915 = vld [vmem:[#allocation3 + $0x4] sm:$0xff]
  %v916 = vld [vmem:[#allocation3 + $0xc] sm:$0xf]
  %919 = vrot.lane.b32.xlu0 %v915, 112
  %v920 = vpop.permute.xlu0 %919
  %921 = vrot.lane.b32.xlu0 %v916, 112
  %v922 = vpop.permute.xlu0 %921
  %v923 = vrot.slane %v920, 4
  %v924 = vrot.slane %v922, 4
  %v925 = vsel %vm144, %v923, %v924
  %v926 = vsel %vm503, %v920, %v925
  %928 = vst [vmem:[#allocation2 + $0x118] sm:$0xff] %v926
  %v929 = vld [vmem:[#allocation3 + $0x4] sm:$0xff]
  %v930 = vld [vmem:[#allocation3 + $0xc] sm:$0xf]
  %v931 = vsel %vm513, %v929, 0
  %v932 = vsel %vm514, %v930, 0
  %935 = vrot.lane.b32.xlu0 %v931, 111
  %v936 = vpop.permute.xlu0 %935
  %937 = vrot.lane.b32.xlu0 %v932, 111
  %v938 = vpop.permute.xlu0 %937
  %v939 = vrot.slane %v936, 4
  %v940 = vrot.slane %v938, 4
  %v941 = vsel %vm144, %v939, %v940
  %v942 = vsel %vm272, %v936, %v941
  %944 = vst [vmem:[#allocation2 + $0x128] sm:$0xff] %v942
  %v945 = vld [vmem:[#allocation3 + $0x4] sm:$0xff]
  %v946 = vld [vmem:[#allocation3 + $0xc] sm:$0xf]
  %v947 = vsel %vm535, %v945, 0
  %v948 = vsel %vm536, %v946, 0
  %951 = vrot.lane.b32.xlu0 %v947, 110
  %v952 = vpop.permute.xlu0 %951
  %953 = vrot.lane.b32.xlu0 %v948, 110
  %v954 = vpop.permute.xlu0 %953
  %v955 = vrot.slane %v952, 4
  %v956 = vrot.slane %v954, 4
  %v957 = vsel %vm144, %v955, %v956
  %v958 = vsel %vm248, %v952, %v957
  %960 = vst [vmem:[#allocation2 + $0x138] sm:$0xff] %v958
  %v961 = vld [vmem:[#allocation3 + $0x4] sm:$0xff]
  %v962 = vld [vmem:[#allocation3 + $0xc] sm:$0xf]
  %v963 = vsel %vm557, %v961, 0
  %v964 = vsel %vm558, %v962, 0
  %967 = vrot.lane.b32.xlu0 %v963, 98
  %v968 = vpop.permute.xlu0 %967
  %969 = vrot.lane.b32.xlu0 %v964, 98
  %v970 = vpop.permute.xlu0 %969
  %v971 = vrot.slane %v968, 4
  %v972 = vrot.slane %v970, 4
  %v973 = vsel %vm144, %v971, %v972
  %v974 = vsel %vm224, %v968, %v973
  %976 = vst [vmem:[#allocation2 + $0x148] sm:$0xff] %v974
  %v977 = vld [vmem:[#allocation3 + $0x4] sm:$0xff]
  %v978 = vld [vmem:[#allocation3 + $0xc] sm:$0xf]
  %v979 = vsel %vm579, %v977, 0
  %v980 = vsel %vm580, %v978, 0
  %983 = vrot.lane.b32.xlu0 %v979, 97
  %v984 = vpop.permute.xlu0 %983
  %985 = vrot.lane.b32.xlu0 %v980, 97
  %v986 = vpop.permute.xlu0 %985
  %v987 = vrot.slane %v984, 4
  %v988 = vrot.slane %v986, 4
  %v989 = vsel %vm144, %v987, %v988
  %v990 = vsel %vm198, %v984, %v989
  %992 = vst [vmem:[#allocation2 + $0x158] sm:$0xff] %v990
  %v993 = vld [vmem:[#allocation3 + $0x4] sm:$0xff]
  %v994 = vld [vmem:[#allocation3 + $0xc] sm:$0xf]
  %997 = vrot.lane.b32.xlu0 %v993, 96
  %v998 = vpop.permute.xlu0 %997
  %999 = vrot.lane.b32.xlu0 %v994, 96
  %v1000 = vpop.permute.xlu0 %999
  %v1001 = vrot.slane %v998, 4
  %v1002 = vrot.slane %v1000, 4
  %v1003 = vsel %vm144, %v1001, %v1002
  %v1004 = vsel %vm606, %v998, %v1003
  %1006 = vst [vmem:[#allocation2 + $0x168] sm:$0xff] %v1004
  %v1007 = vld [vmem:[#allocation3 + $0x4] sm:$0xff]
  %v1008 = vld [vmem:[#allocation3 + $0xc] sm:$0xf]
  %v1009 = vsel %vm616, %v1007, 0
  %v1010 = vsel %vm617, %v1008, 0
  %1013 = vrot.lane.b32.xlu0 %v1009, 95
  %v1014 = vpop.permute.xlu0 %1013
  %1015 = vrot.lane.b32.xlu0 %v1010, 95
  %v1016 = vpop.permute.xlu0 %1015
  %v1017 = vrot.slane %v1014, 4
  %v1018 = vrot.slane %v1016, 4
  %v1019 = vsel %vm144, %v1017, %v1018
  %v1020 = vsel %vm157, %v1014, %v1019
  %1022 = vst [vmem:[#allocation2 + $0x178] sm:$0xff] %v1020
  %v1023 = vld [vmem:[#allocation3 + $0x4] sm:$0xff]
  %v1024 = vld [vmem:[#allocation3 + $0xc] sm:$0xf]
  %v1025 = vsel %vm638, %v1023, 0
  %v1026 = vsel %vm639, %v1024, 0
  %1029 = vrot.lane.b32.xlu0 %v1025, 94
  %v1030 = vpop.permute.xlu0 %1029
  %1031 = vrot.lane.b32.xlu0 %v1026, 94
  %v1032 = vpop.permute.xlu0 %1031
  %v1033 = vrot.slane %v1030, 4
  %v1034 = vrot.slane %v1032, 4
  %v1035 = vsel %vm144, %v1033, %v1034
  %v1036 = vsel %vm130, %v1030, %v1035
  %1038 = vst [vmem:[#allocation2 + $0x188] sm:$0xff] %v1036
  %v1039 = vld [vmem:[%s1] sm:$0xff]
  %v1040 = vld [vmem:[#allocation2] sm:$0xff]
  %v1041 = vld [vmem:[#allocation2 + $0x8] sm:$0xff]
  %v1042 = vld [vmem:[#allocation2 + $0x10] sm:$0xff]
  %v1043 = vld [vmem:[#allocation2 + $0x18] sm:$0xff]
  %v1044 = vld [vmem:[#allocation2 + $0x20] sm:$0xff]
  %v1045 = vld [vmem:[#allocation2 + $0x28] sm:$0xff]
  %v1046 = vld [vmem:[#allocation2 + $0x30] sm:$0xff]
  %v1047 = vld [vmem:[#allocation2 + $0x38] sm:$0xff]
  %v1048 = vld [vmem:[#allocation2 + $0x40] sm:$0xff]
  %v1049 = vld [vmem:[#allocation2 + $0x48] sm:$0xff]
  %v1050 = vld [vmem:[#allocation2 + $0x50] sm:$0xff]
  %v1051 = vld [vmem:[#allocation2 + $0x58] sm:$0xff]
  %v1052 = vld [vmem:[#allocation2 + $0x60] sm:$0xff]
  %v1053 = vld [vmem:[#allocation2 + $0x68] sm:$0xff]
  %v1054 = vld [vmem:[#allocation2 + $0x70] sm:$0xff]
  %v1055 = vld [vmem:[#allocation2 + $0x78] sm:$0xff]
  %v1056 = vld [vmem:[#allocation2 + $0x80] sm:$0xff]
  %v1057 = vld [vmem:[#allocation2 + $0x88] sm:$0xff]
  %v1058 = vld [vmem:[#allocation2 + $0x90] sm:$0xff]
  %v1059 = vld [vmem:[#allocation2 + $0x98] sm:$0xff]
  %v1060 = vld [vmem:[#allocation2 + $0xa0] sm:$0xff]
  %v1061 = vld [vmem:[#allocation2 + $0xa8] sm:$0xff]
  %v1062 = vld [vmem:[#allocation2 + $0xb0] sm:$0xff]
  %v1063 = vld [vmem:[#allocation2 + $0xb8] sm:$0xff]
  %v1064 = vld [vmem:[#allocation2 + $0xc0] sm:$0xff]
  %v1065 = vld [vmem:[#allocation2 + $0xc8] sm:$0xff]
  %v1066 = vld [vmem:[#allocation2 + $0xd0] sm:$0xff]
  %v1067 = vld [vmem:[#allocation2 + $0xd8] sm:$0xff]
  %v1068 = vld [vmem:[#allocation2 + $0xe0] sm:$0xff]
  %v1069 = vld [vmem:[#allocation2 + $0xe8] sm:$0xff]
  %v1070 = vld [vmem:[#allocation2 + $0xf0] sm:$0xff]
  %v1071 = vld [vmem:[#allocation2 + $0xf8] sm:$0xff]
  %v1072 = vld [vmem:[#allocation2 + $0x100] sm:$0xff]
  %v1073 = vld [vmem:[#allocation2 + $0x108] sm:$0xff]
  %v1074 = vld [vmem:[#allocation2 + $0x110] sm:$0xff]
  %v1075 = vld [vmem:[#allocation2 + $0x118] sm:$0xff]
  %v1076 = vld [vmem:[#allocation2 + $0x120] sm:$0xff]
  %v1077 = vld [vmem:[#allocation2 + $0x128] sm:$0xff]
  %v1078 = vld [vmem:[#allocation2 + $0x130] sm:$0xff]
  %v1079 = vld [vmem:[#allocation2 + $0x138] sm:$0xff]
  %v1080 = vld [vmem:[#allocation2 + $0x140] sm:$0xff]
  %v1081 = vld [vmem:[#allocation2 + $0x148] sm:$0xff]
  %v1082 = vld [vmem:[#allocation2 + $0x150] sm:$0xff]
  %v1083 = vld [vmem:[#allocation2 + $0x158] sm:$0xff]
  %v1084 = vld [vmem:[#allocation2 + $0x160] sm:$0xff]
  %v1085 = vld [vmem:[#allocation2 + $0x168] sm:$0xff]
  %v1086 = vld [vmem:[#allocation2 + $0x170] sm:$0xff]
  %v1087 = vld [vmem:[#allocation2 + $0x178] sm:$0xff]
  %v1088 = vld [vmem:[#allocation2 + $0x180] sm:$0xff]
  %v1089 = vld [vmem:[#allocation2 + $0x188] sm:$0xff]
  %v1090 = vld [vmem:[%s2] sm:$0xff]
  %1092 = vset.pattern.permute.xlu0 0
  %1093 = vperm.xlu0 %1092, %v1090
  %v1094 = vpop.permute.xlu0 %1093
  %v1097 = vunpack.c.l.b16 %v1039
  %v1098 = vunpack.c.h.b16 %v1039
  %v1099 = vpack.c.b16 %v1097, %v1097
  %v1100 = vpack.c.b16 %v1098, %v1098
  %v1152 = vunpack.c.l.b16 %v1040
  %v1153 = vunpack.c.h.b16 %v1040
  %v1154 = vunpack.c.l.b16 %v1041
  %v1155 = vunpack.c.h.b16 %v1041
  %v1156 = vunpack.c.l.b16 %v1042
  %v1157 = vunpack.c.h.b16 %v1042
  %v1158 = vunpack.c.l.b16 %v1043
  %v1159 = vunpack.c.h.b16 %v1043
  %v1160 = vunpack.c.l.b16 %v1044
  %v1161 = vunpack.c.h.b16 %v1044
  %v1162 = vunpack.c.l.b16 %v1045
  %v1163 = vunpack.c.h.b16 %v1045
  %v1164 = vunpack.c.l.b16 %v1046
  %v1165 = vunpack.c.h.b16 %v1046
  %v1166 = vunpack.c.l.b16 %v1047
  %v1167 = vunpack.c.h.b16 %v1047
  %v1168 = vunpack.c.l.b16 %v1048
  %v1169 = vunpack.c.h.b16 %v1048
  %v1170 = vunpack.c.l.b16 %v1049
  %v1171 = vunpack.c.h.b16 %v1049
  %v1172 = vunpack.c.l.b16 %v1050
  %v1173 = vunpack.c.h.b16 %v1050
  %v1174 = vunpack.c.l.b16 %v1051
  %v1175 = vunpack.c.h.b16 %v1051
  %v1176 = vunpack.c.l.b16 %v1052
  %v1177 = vunpack.c.h.b16 %v1052
  %v1178 = vunpack.c.l.b16 %v1053
  %v1179 = vunpack.c.h.b16 %v1053
  %v1180 = vunpack.c.l.b16 %v1054
  %v1181 = vunpack.c.h.b16 %v1054
  %v1182 = vunpack.c.l.b16 %v1055
  %v1183 = vunpack.c.h.b16 %v1055
  %v1184 = vunpack.c.l.b16 %v1056
  %v1185 = vunpack.c.h.b16 %v1056
  %v1186 = vunpack.c.l.b16 %v1057
  %v1187 = vunpack.c.h.b16 %v1057
  %v1188 = vunpack.c.l.b16 %v1058
  %v1189 = vunpack.c.h.b16 %v1058
  %v1190 = vunpack.c.l.b16 %v1059
  %v1191 = vunpack.c.h.b16 %v1059
  %v1192 = vunpack.c.l.b16 %v1060
  %v1193 = vunpack.c.h.b16 %v1060
  %v1194 = vunpack.c.l.b16 %v1061
  %v1195 = vunpack.c.h.b16 %v1061
  %v1196 = vunpack.c.l.b16 %v1062
  %v1197 = vunpack.c.h.b16 %v1062
  %v1198 = vunpack.c.l.b16 %v1063
  %v1199 = vunpack.c.h.b16 %v1063
  %v1200 = vunpack.c.l.b16 %v1064
  %v1201 = vunpack.c.h.b16 %v1064
  %v1202 = vunpack.c.l.b16 %v1065
  %v1203 = vunpack.c.h.b16 %v1065
  %v1204 = vunpack.c.l.b16 %v1066
  %v1205 = vunpack.c.h.b16 %v1066
  %v1206 = vunpack.c.l.b16 %v1067
  %v1207 = vunpack.c.h.b16 %v1067
  %v1208 = vunpack.c.l.b16 %v1068
  %v1209 = vunpack.c.h.b16 %v1068
  %v1210 = vunpack.c.l.b16 %v1069
  %v1211 = vunpack.c.h.b16 %v1069
  %v1212 = vunpack.c.l.b16 %v1070
  %v1213 = vunpack.c.h.b16 %v1070
  %v1214 = vunpack.c.l.b16 %v1071
  %v1215 = vunpack.c.h.b16 %v1071
  %v1216 = vunpack.c.l.b16 %v1072
  %v1217 = vunpack.c.h.b16 %v1072
  %v1218 = vunpack.c.l.b16 %v1073
  %v1219 = vunpack.c.h.b16 %v1073
  %v1220 = vunpack.c.l.b16 %v1074
  %v1221 = vunpack.c.h.b16 %v1074
  %v1222 = vunpack.c.l.b16 %v1075
  %v1223 = vunpack.c.h.b16 %v1075
  %v1224 = vunpack.c.l.b16 %v1076
  %v1225 = vunpack.c.h.b16 %v1076
  %v1226 = vunpack.c.l.b16 %v1077
  %v1227 = vunpack.c.h.b16 %v1077
  %v1228 = vunpack.c.l.b16 %v1078
  %v1229 = vunpack.c.h.b16 %v1078
  %v1230 = vunpack.c.l.b16 %v1079
  %v1231 = vunpack.c.h.b16 %v1079
  %v1232 = vunpack.c.l.b16 %v1080
  %v1233 = vunpack.c.h.b16 %v1080
  %v1234 = vunpack.c.l.b16 %v1081
  %v1235 = vunpack.c.h.b16 %v1081
  %v1236 = vunpack.c.l.b16 %v1082
  %v1237 = vunpack.c.h.b16 %v1082
  %v1238 = vunpack.c.l.b16 %v1083
  %v1239 = vunpack.c.h.b16 %v1083
  %v1240 = vunpack.c.l.b16 %v1084
  %v1241 = vunpack.c.h.b16 %v1084
  %v1242 = vunpack.c.l.b16 %v1085
  %v1243 = vunpack.c.h.b16 %v1085
  %v1244 = vunpack.c.l.b16 %v1086
  %v1245 = vunpack.c.h.b16 %v1086
  %v1246 = vunpack.c.l.b16 %v1087
  %v1247 = vunpack.c.h.b16 %v1087
  %v1248 = vunpack.c.l.b16 %v1088
  %v1249 = vunpack.c.h.b16 %v1088
  %v1250 = vunpack.c.l.b16 %v1089
  %v1251 = vunpack.c.h.b16 %v1089
  %v1252 = vpack.c.b16 %v1156, %v1152
  %v1253 = vpack.c.b16 %v1157, %v1153
  %v1254 = vpack.c.b16 %v1158, %v1154
  %v1255 = vpack.c.b16 %v1159, %v1155
  %v1256 = vpack.c.b16 %v1164, %v1160
  %v1257 = vpack.c.b16 %v1165, %v1161
  %v1258 = vpack.c.b16 %v1166, %v1162
  %v1259 = vpack.c.b16 %v1167, %v1163
  %v1260 = vpack.c.b16 %v1172, %v1168
  %v1261 = vpack.c.b16 %v1173, %v1169
  %v1262 = vpack.c.b16 %v1174, %v1170
  %v1263 = vpack.c.b16 %v1175, %v1171
  %v1264 = vpack.c.b16 %v1180, %v1176
  %v1265 = vpack.c.b16 %v1181, %v1177
  %v1266 = vpack.c.b16 %v1182, %v1178
  %v1267 = vpack.c.b16 %v1183, %v1179
  %v1268 = vpack.c.b16 %v1188, %v1184
  %v1269 = vpack.c.b16 %v1189, %v1185
  %v1270 = vpack.c.b16 %v1190, %v1186
  %v1271 = vpack.c.b16 %v1191, %v1187
  %v1272 = vpack.c.b16 %v1196, %v1192
  %v1273 = vpack.c.b16 %v1197, %v1193
  %v1274 = vpack.c.b16 %v1198, %v1194
  %v1275 = vpack.c.b16 %v1199, %v1195
  %v1276 = vpack.c.b16 %v1204, %v1200
  %v1277 = vpack.c.b16 %v1205, %v1201
  %v1278 = vpack.c.b16 %v1206, %v1202
  %v1279 = vpack.c.b16 %v1207, %v1203
  %v1280 = vpack.c.b16 %v1212, %v1208
  %v1281 = vpack.c.b16 %v1213, %v1209
  %v1282 = vpack.c.b16 %v1214, %v1210
  %v1283 = vpack.c.b16 %v1215, %v1211
  %v1284 = vpack.c.b16 %v1220, %v1216
  %v1285 = vpack.c.b16 %v1221, %v1217
  %v1286 = vpack.c.b16 %v1222, %v1218
  %v1287 = vpack.c.b16 %v1223, %v1219
  %v1288 = vpack.c.b16 %v1228, %v1224
  %v1289 = vpack.c.b16 %v1229, %v1225
  %v1290 = vpack.c.b16 %v1230, %v1226
  %v1291 = vpack.c.b16 %v1231, %v1227
  %v1292 = vpack.c.b16 %v1236, %v1232
  %v1293 = vpack.c.b16 %v1237, %v1233
  %v1294 = vpack.c.b16 %v1238, %v1234
  %v1295 = vpack.c.b16 %v1239, %v1235
  %v1296 = vpack.c.b16 %v1244, %v1240
  %v1297 = vpack.c.b16 %v1245, %v1241
  %v1298 = vpack.c.b16 %v1246, %v1242
  %v1299 = vpack.c.b16 %v1247, %v1243
  %v1300 = vpack.c.b16 %v1248, %v1248
  %v1301 = vpack.c.b16 %v1249, %v1249
  %v1302 = vpack.c.b16 %v1250, %v1250
  %v1303 = vpack.c.b16 %v1251, %v1251
  %vm1352 = vcmask 588800
  %v1354 = vsel %vm1352, %v1100, 0
  %vm1356 = vcmask 1043456
  %v1358 = vsel %vm1356, %v1300, 0
  %v1361 = vsel %vm1356, %v1301, 0
  %v1364 = vsel %vm1356, %v1302, 0
  %v1367 = vsel %vm1356, %v1303, 0
  %1369 = vmatprep.subr.bf16.mxu0 %v1253
  %1370 = vmatpush1.bf16.msra.mxu0 %v1252
  %1371 = vmatprep.subr.bf16.mxu0 %v1257
  %1372 = vmatpush1.bf16.msra.mxu0 %v1256
  %1373 = vmatprep.subr.bf16.mxu0 %v1261
  %1374 = vmatpush1.bf16.msra.mxu0 %v1260
  %1375 = vmatprep.subr.bf16.mxu0 %v1265
  %1376 = vmatpush1.bf16.msra.mxu0 %v1264
  %1377 = vmatprep.subr.bf16.mxu0 %v1269
  %1378 = vmatpush1.bf16.msra.mxu0 %v1268
  %1379 = vmatprep.subr.bf16.mxu0 %v1273
  %1380 = vmatpush1.bf16.msra.mxu0 %v1272
  %1381 = vmatprep.subr.bf16.mxu0 %v1277
  %1382 = vmatpush1.bf16.msra.mxu0 %v1276
  %1383 = vmatprep.subr.bf16.mxu0 %v1281
  %1384 = vmatpush1.bf16.msra.mxu0 %v1280
  %1385 = vmatprep.subr.bf16.mxu0 %v1285
  %1386 = vmatpush1.bf16.msra.mxu0 %v1284
  %1387 = vmatprep.subr.bf16.mxu0 %v1289
  %1388 = vmatpush1.bf16.msra.mxu0 %v1288
  %1389 = vmatprep.subr.bf16.mxu0 %v1293
  %1390 = vmatpush1.bf16.msra.mxu0 %v1292
  %1391 = vmatprep.subr.bf16.mxu0 %v1297
  %1392 = vmatpush1.bf16.msra.mxu0 %v1296
  %1393 = vmatprep.subr.bf16.mxu0 %v1361
  %1394 = vmatpush1.bf16.msra.mxu0 %v1358
  %1395 = vmatprep.subr.bf16.mxu0 0
  %1396 = vmatpush1.bf16.msra.mxu0 0
  %1397 = vmatprep.subr.bf16.mxu0 0
  %1398 = vmatpush1.bf16.msra.mxu0 0
  %1399 = vmatprep.subr.bf16.mxu0 0
  %1400 = vmatpush1.bf16.msra.mxu0 0
  %1401 = vmatprep.mubr.bf16.mxu0 %v1354
  %1402 = vmatmul.mubr.bf16.gmra.mrb[0].mxu0 %v1099
  %v1403 = vpop.f32.mrb[0].mxu0
  %v1404 = vadd.f32 %v1094, %v1403
  %v1405 = vpop.f32.mrb[0].mxu0
  %v1406 = vadd.f32 %v1094, %v1405
  %v1407 = vpop.f32.mrb[0].mxu0
  %v1408 = vpop.f32.mrb[0].mxu0
  %1409 = vdwg.mxu0
  %1410 = vmatprep.subr.bf16.mxu0 %v1255
  %1411 = vmatpush1.bf16.msra.mxu0 %v1254
  %1412 = vmatprep.subr.bf16.mxu0 %v1259
  %1413 = vmatpush1.bf16.msra.mxu0 %v1258
  %1414 = vmatprep.subr.bf16.mxu0 %v1263
  %1415 = vmatpush1.bf16.msra.mxu0 %v1262
  %1416 = vmatprep.subr.bf16.mxu0 %v1267
  %1417 = vmatpush1.bf16.msra.mxu0 %v1266
  %1418 = vmatprep.subr.bf16.mxu0 %v1271
  %1419 = vmatpush1.bf16.msra.mxu0 %v1270
  %1420 = vmatprep.subr.bf16.mxu0 %v1275
  %1421 = vmatpush1.bf16.msra.mxu0 %v1274
  %1422 = vmatprep.subr.bf16.mxu0 %v1279
  %1423 = vmatpush1.bf16.msra.mxu0 %v1278
  %1424 = vmatprep.subr.bf16.mxu0 %v1283
  %1425 = vmatpush1.bf16.msra.mxu0 %v1282
  %1426 = vmatprep.subr.bf16.mxu0 %v1287
  %1427 = vmatpush1.bf16.msra.mxu0 %v1286
  %1428 = vmatprep.subr.bf16.mxu0 %v1291
  %1429 = vmatpush1.bf16.msra.mxu0 %v1290
  %1430 = vmatprep.subr.bf16.mxu0 %v1295
  %1431 = vmatpush1.bf16.msra.mxu0 %v1294
  %1432 = vmatprep.subr.bf16.mxu0 %v1299
  %1433 = vmatpush1.bf16.msra.mxu0 %v1298
  %1434 = vmatprep.subr.bf16.mxu0 %v1367
  %1435 = vmatpush1.bf16.msra.mxu0 %v1364
  %1436 = vmatprep.subr.bf16.mxu0 0
  %1437 = vmatpush1.bf16.msra.mxu0 0
  %1438 = vmatprep.subr.bf16.mxu0 0
  %1439 = vmatpush1.bf16.msra.mxu0 0
  %1440 = vmatprep.subr.bf16.mxu0 0
  %1441 = vmatpush1.bf16.msra.mxu0 0
  %1442 = vmatprep.mubr.bf16.mxu0 %v1354
  %1443 = vmatmul.mubr.bf16.gmra.mrb[0].mxu0 %v1099
  %v1444 = vpop.f32.mrb[0].mxu0
  %v1445 = vadd.f32 %v1094, %v1444
  %v1446 = vpop.f32.mrb[0].mxu0
  %v1447 = vadd.f32 %v1094, %v1446
  %v1448 = vpop.f32.mrb[0].mxu0
  %v1449 = vpop.f32.mrb[0].mxu0
  %1450 = vdwg.mxu0
  %v1451 = vmax.f32 %v1404, 0.0
  %v1452 = vmax.f32 %v1406, 0.0
  %v1453 = vmax.f32 %v1445, 0.0
  %v1454 = vmax.f32 %v1447, 0.0
  %v1455 = vld [vmem:[%s3] sm:$0xff]
  %1457 = vset.pattern.permute.xlu0 0
  %1458 = vperm.xlu0 %1457, %v1455
  %v1459 = vpop.permute.xlu0 %1458
  %v1461 = vmul.f32 %v1451, %v1459
  %v1462 = vmul.f32 %v1452, %v1459
  %v1463 = vmul.f32 %v1453, %v1459
  %v1464 = vmul.f32 %v1454, %v1459
  %v1465 = vld [vmem:[%s4] sm:$0xff]
  %1467 = vset.pattern.permute.xlu0 0
  %1468 = vperm.xlu0 %1467, %v1465
  %v1469 = vpop.permute.xlu0 %1468
  %v1471 = vadd.f32 %v1461, %v1469
  %v1472 = vadd.f32 %v1462, %v1469
  %v1473 = vadd.f32 %v1463, %v1469
  %v1474 = vadd.f32 %v1464, %v1469
  %v1475 = vpack.c.bf16 %v1471, %v1471
  %v1476 = vpack.c.bf16 %v1472, %v1472
  %v1477 = vpack.c.bf16 %v1473, %v1473
  %v1478 = vpack.c.bf16 %v1474, %v1474
  %v1481 = vunpack.c.l.b16 %v1475
  %v1482 = vunpack.c.l.b16 %v1476
  %v1483 = vpack.c.b16 %v1482, %v1481
  %1485 = vst [vmem:[#allocation3 + $0x4] sm:$0xff] %v1483
  %v1486 = vld [vmem:[#allocation3] sm:$0xff]
  %v1487 = vld [vmem:[#allocation3 + $0x8] sm:$0xf]
  %v1488 = vsel %vm274, %v1486, 0
  %v1489 = vsel %vm275, %v1487, 0
  %1492 = vrot.lane.b32.xlu0 %v1488, 17
  %v1493 = vpop.permute.xlu0 %1492
  %1494 = vrot.lane.b32.xlu0 %v1489, 17
  %v1495 = vpop.permute.xlu0 %1494
  %v1496 = vrot.slane %v1493, 4
  %v1497 = vrot.slane %v1495, 4
  %v1498 = vsel %vm144, %v1496, %v1497
  %v1499 = vsel %vm287, %v1493, %v1498
  %1501 = vst [vmem:[#allocation2] sm:$0xff] %v1499
  %v1502 = vld [vmem:[#allocation3] sm:$0xff]
  %v1503 = vld [vmem:[#allocation3 + $0x8] sm:$0xf]
  %1506 = vrot.lane.b32.xlu0 %v1502, 16
  %v1507 = vpop.permute.xlu0 %1506
  %1508 = vrot.lane.b32.xlu0 %v1503, 16
  %v1509 = vpop.permute.xlu0 %1508
  %v1510 = vrot.slane %v1507, 4
  %v1511 = vrot.slane %v1509, 4
  %v1512 = vsel %vm144, %v1510, %v1511
  %v1513 = vsel %vm302, %v1507, %v1512
  %1515 = vst [vmem:[#allocation2 + $0x10] sm:$0xff] %v1513
  %v1516 = vld [vmem:[#allocation3] sm:$0xff]
  %v1517 = vld [vmem:[#allocation3 + $0x8] sm:$0xf]
  %v1518 = vsel %vm313, %v1516, 0
  %v1519 = vsel %vm314, %v1517, 0
  %1522 = vrot.lane.b32.xlu0 %v1518, 15
  %v1523 = vpop.permute.xlu0 %1522
  %1524 = vrot.lane.b32.xlu0 %v1519, 15
  %v1525 = vpop.permute.xlu0 %1524
  %v1526 = vrot.slane %v1523, 4
  %v1527 = vrot.slane %v1525, 4
  %v1528 = vsel %vm144, %v1526, %v1527
  %v1529 = vsel %vm326, %v1523, %v1528
  %1531 = vst [vmem:[#allocation2 + $0x20] sm:$0xff] %v1529
  %v1532 = vld [vmem:[#allocation3] sm:$0xff]
  %v1533 = vld [vmem:[#allocation3 + $0x8] sm:$0xf]
  %v1534 = vsel %vm385, %v1532, 0
  %v1535 = vsel %vm386, %v1533, 0
  %1538 = vrot.lane.b32.xlu0 %v1534, 1
  %v1539 = vpop.permute.xlu0 %1538
  %1540 = vrot.lane.b32.xlu0 %v1535, 1
  %v1541 = vpop.permute.xlu0 %1540
  %v1542 = vrot.slane %v1539, 4
  %v1543 = vrot.slane %v1541, 4
  %v1544 = vsel %vm144, %v1542, %v1543
  %v1545 = vsel %vm398, %v1539, %v1544
  %1547 = vst [vmem:[#allocation2 + $0x30] sm:$0xff] %v1545
  %v1548 = vld [vmem:[#allocation3 + $0x4] sm:$0xff]
  %1549 = vst [vmem:[#allocation2 + $0x40] sm:$0xff] %v1548
  %v1550 = vld [vmem:[#allocation3 + $0x4] sm:$0xff]
  %v1551 = vld [vmem:[#allocation3 + $0xc] sm:$0xf]
  %v1552 = vsel %vm410, %v1550, 0
  %v1553 = vsel %vm411, %v1551, 0
  %1556 = vrot.lane.b32.xlu0 %v1552, 127
  %v1557 = vpop.permute.xlu0 %1556
  %1558 = vrot.lane.b32.xlu0 %v1553, 127
  %v1559 = vpop.permute.xlu0 %1558
  %v1560 = vrot.slane %v1557, 4
  %v1561 = vrot.slane %v1559, 4
  %v1562 = vsel %vm144, %v1560, %v1561
  %v1563 = vsel %vm383, %v1557, %v1562
  %1565 = vst [vmem:[#allocation2 + $0x50] sm:$0xff] %v1563
  %v1566 = vld [vmem:[#allocation3 + $0x4] sm:$0xff]
  %v1567 = vld [vmem:[#allocation3 + $0xc] sm:$0xf]
  %v1568 = vsel %vm476, %v1566, 0
  %v1569 = vsel %vm477, %v1567, 0
  %1572 = vrot.lane.b32.xlu0 %v1568, 113
  %v1573 = vpop.permute.xlu0 %1572
  %1574 = vrot.lane.b32.xlu0 %v1569, 113
  %v1575 = vpop.permute.xlu0 %1574
  %v1576 = vrot.slane %v1573, 4
  %v1577 = vrot.slane %v1575, 4
  %v1578 = vsel %vm144, %v1576, %v1577
  %v1579 = vsel %vm311, %v1573, %v1578
  %1581 = vst [vmem:[#allocation2 + $0x60] sm:$0xff] %v1579
  %v1582 = vld [vmem:[#allocation3 + $0x4] sm:$0xff]
  %v1583 = vld [vmem:[#allocation3 + $0xc] sm:$0xf]
  %1586 = vrot.lane.b32.xlu0 %v1582, 112
  %v1587 = vpop.permute.xlu0 %1586
  %1588 = vrot.lane.b32.xlu0 %v1583, 112
  %v1589 = vpop.permute.xlu0 %1588
  %v1590 = vrot.slane %v1587, 4
  %v1591 = vrot.slane %v1589, 4
  %v1592 = vsel %vm144, %v1590, %v1591
  %v1593 = vsel %vm503, %v1587, %v1592
  %1595 = vst [vmem:[#allocation2 + $0x70] sm:$0xff] %v1593
  %v1596 = vld [vmem:[#allocation3 + $0x4] sm:$0xff]
  %v1597 = vld [vmem:[#allocation3 + $0xc] sm:$0xf]
  %v1598 = vsel %vm513, %v1596, 0
  %v1599 = vsel %vm514, %v1597, 0
  %1602 = vrot.lane.b32.xlu0 %v1598, 111
  %v1603 = vpop.permute.xlu0 %1602
  %1604 = vrot.lane.b32.xlu0 %v1599, 111
  %v1605 = vpop.permute.xlu0 %1604
  %v1606 = vrot.slane %v1603, 4
  %v1607 = vrot.slane %v1605, 4
  %v1608 = vsel %vm144, %v1606, %v1607
  %v1609 = vsel %vm272, %v1603, %v1608
  %1611 = vst [vmem:[#allocation2 + $0x80] sm:$0xff] %v1609
  %v1614 = vunpack.c.l.b16 %v1477
  %v1615 = vunpack.c.l.b16 %v1478
  %v1616 = vpack.c.b16 %v1615, %v1614
  %1618 = vst [vmem:[#allocation3 + $0x4] sm:$0xff] %v1616
  %v1619 = vld [vmem:[#allocation3] sm:$0xff]
  %v1620 = vld [vmem:[#allocation3 + $0x8] sm:$0xf]
  %v1621 = vsel %vm274, %v1619, 0
  %v1622 = vsel %vm275, %v1620, 0
  %1625 = vrot.lane.b32.xlu0 %v1621, 17
  %v1626 = vpop.permute.xlu0 %1625
  %1627 = vrot.lane.b32.xlu0 %v1622, 17
  %v1628 = vpop.permute.xlu0 %1627
  %v1629 = vrot.slane %v1626, 4
  %v1630 = vrot.slane %v1628, 4
  %v1631 = vsel %vm144, %v1629, %v1630
  %v1632 = vsel %vm287, %v1626, %v1631
  %1634 = vst [vmem:[#allocation2 + $0x8] sm:$0xff] %v1632
  %v1635 = vld [vmem:[#allocation3] sm:$0xff]
  %v1636 = vld [vmem:[#allocation3 + $0x8] sm:$0xf]
  %1639 = vrot.lane.b32.xlu0 %v1635, 16
  %v1640 = vpop.permute.xlu0 %1639
  %1641 = vrot.lane.b32.xlu0 %v1636, 16
  %v1642 = vpop.permute.xlu0 %1641
  %v1643 = vrot.slane %v1640, 4
  %v1644 = vrot.slane %v1642, 4
  %v1645 = vsel %vm144, %v1643, %v1644
  %v1646 = vsel %vm302, %v1640, %v1645
  %1648 = vst [vmem:[#allocation2 + $0x18] sm:$0xff] %v1646
  %v1649 = vld [vmem:[#allocation3] sm:$0xff]
  %v1650 = vld [vmem:[#allocation3 + $0x8] sm:$0xf]
  %v1651 = vsel %vm313, %v1649, 0
  %v1652 = vsel %vm314, %v1650, 0
  %1655 = vrot.lane.b32.xlu0 %v1651, 15
  %v1656 = vpop.permute.xlu0 %1655
  %1657 = vrot.lane.b32.xlu0 %v1652, 15
  %v1658 = vpop.permute.xlu0 %1657
  %v1659 = vrot.slane %v1656, 4
  %v1660 = vrot.slane %v1658, 4
  %v1661 = vsel %vm144, %v1659, %v1660
  %v1662 = vsel %vm326, %v1656, %v1661
  %1664 = vst [vmem:[#allocation2 + $0x28] sm:$0xff] %v1662
  %v1665 = vld [vmem:[#allocation3] sm:$0xff]
  %v1666 = vld [vmem:[#allocation3 + $0x8] sm:$0xf]
  %v1667 = vsel %vm385, %v1665, 0
  %v1668 = vsel %vm386, %v1666, 0
  %1671 = vrot.lane.b32.xlu0 %v1667, 1
  %v1672 = vpop.permute.xlu0 %1671
  %1673 = vrot.lane.b32.xlu0 %v1668, 1
  %v1674 = vpop.permute.xlu0 %1673
  %v1675 = vrot.slane %v1672, 4
  %v1676 = vrot.slane %v1674, 4
  %v1677 = vsel %vm144, %v1675, %v1676
  %v1678 = vsel %vm398, %v1672, %v1677
  %1680 = vst [vmem:[#allocation2 + $0x38] sm:$0xff] %v1678
  %v1681 = vld [vmem:[#allocation3 + $0x4] sm:$0xff]
  %1682 = vst [vmem:[#allocation2 + $0x48] sm:$0xff] %v1681
  %v1683 = vld [vmem:[#allocation3 + $0x4] sm:$0xff]
  %v1684 = vld [vmem:[#allocation3 + $0xc] sm:$0xf]
  %v1685 = vsel %vm410, %v1683, 0
  %v1686 = vsel %vm411, %v1684, 0
  %1689 = vrot.lane.b32.xlu0 %v1685, 127
  %v1690 = vpop.permute.xlu0 %1689
  %1691 = vrot.lane.b32.xlu0 %v1686, 127
  %v1692 = vpop.permute.xlu0 %1691
  %v1693 = vrot.slane %v1690, 4
  %v1694 = vrot.slane %v1692, 4
  %v1695 = vsel %vm144, %v1693, %v1694
  %v1696 = vsel %vm383, %v1690, %v1695
  %1698 = vst [vmem:[#allocation2 + $0x58] sm:$0xff] %v1696
  %v1699 = vld [vmem:[#allocation3 + $0x4] sm:$0xff]
  %v1700 = vld [vmem:[#allocation3 + $0xc] sm:$0xf]
  %v1701 = vsel %vm476, %v1699, 0
  %v1702 = vsel %vm477, %v1700, 0
  %1705 = vrot.lane.b32.xlu0 %v1701, 113
  %v1706 = vpop.permute.xlu0 %1705
  %1707 = vrot.lane.b32.xlu0 %v1702, 113
  %v1708 = vpop.permute.xlu0 %1707
  %v1709 = vrot.slane %v1706, 4
  %v1710 = vrot.slane %v1708, 4
  %v1711 = vsel %vm144, %v1709, %v1710
  %v1712 = vsel %vm311, %v1706, %v1711
  %1714 = vst [vmem:[#allocation2 + $0x68] sm:$0xff] %v1712
  %v1715 = vld [vmem:[#allocation3 + $0x4] sm:$0xff]
  %v1716 = vld [vmem:[#allocation3 + $0xc] sm:$0xf]
  %1719 = vrot.lane.b32.xlu0 %v1715, 112
  %v1720 = vpop.permute.xlu0 %1719
  %1721 = vrot.lane.b32.xlu0 %v1716, 112
  %v1722 = vpop.permute.xlu0 %1721
  %v1723 = vrot.slane %v1720, 4
  %v1724 = vrot.slane %v1722, 4
  %v1725 = vsel %vm144, %v1723, %v1724
  %v1726 = vsel %vm503, %v1720, %v1725
  %1728 = vst [vmem:[#allocation2 + $0x78] sm:$0xff] %v1726
  %v1729 = vld [vmem:[#allocation3 + $0x4] sm:$0xff]
  %v1730 = vld [vmem:[#allocation3 + $0xc] sm:$0xf]
  %v1731 = vsel %vm513, %v1729, 0
  %v1732 = vsel %vm514, %v1730, 0
  %1735 = vrot.lane.b32.xlu0 %v1731, 111
  %v1736 = vpop.permute.xlu0 %1735
  %1737 = vrot.lane.b32.xlu0 %v1732, 111
  %v1738 = vpop.permute.xlu0 %1737
  %v1739 = vrot.slane %v1736, 4
  %v1740 = vrot.slane %v1738, 4
  %v1741 = vsel %vm144, %v1739, %v1740
  %v1742 = vsel %vm272, %v1736, %v1741
  %1744 = vst [vmem:[#allocation2 + $0x88] sm:$0xff] %v1742
  %v1745 = vld [vmem:[%s5] sm:$0xf]
  %v1746 = vld [vmem:[#allocation2] sm:$0xff]
  %v1747 = vld [vmem:[#allocation2 + $0x8] sm:$0xff]
  %v1748 = vld [vmem:[#allocation2 + $0x10] sm:$0xff]
  %v1749 = vld [vmem:[#allocation2 + $0x18] sm:$0xff]
  %v1750 = vld [vmem:[#allocation2 + $0x20] sm:$0xff]
  %v1751 = vld [vmem:[#allocation2 + $0x28] sm:$0xff]
  %v1752 = vld [vmem:[#allocation2 + $0x30] sm:$0xff]
  %v1753 = vld [vmem:[#allocation2 + $0x38] sm:$0xff]
  %v1754 = vld [vmem:[#allocation2 + $0x40] sm:$0xff]
  %v1755 = vld [vmem:[#allocation2 + $0x48] sm:$0xff]
  %v1756 = vld [vmem:[#allocation2 + $0x50] sm:$0xff]
  %v1757 = vld [vmem:[#allocation2 + $0x58] sm:$0xff]
  %v1758 = vld [vmem:[#allocation2 + $0x60] sm:$0xff]
  %v1759 = vld [vmem:[#allocation2 + $0x68] sm:$0xff]
  %v1760 = vld [vmem:[#allocation2 + $0x70] sm:$0xff]
  %v1761 = vld [vmem:[#allocation2 + $0x78] sm:$0xff]
  %v1762 = vld [vmem:[#allocation2 + $0x80] sm:$0xff]
  %v1763 = vld [vmem:[#allocation2 + $0x88] sm:$0xff]
  %v1764 = vld [vmem:[%s6] sm:$0xff]
  %1766 = vset.pattern.permute.xlu0 0
  %1767 = vperm.xlu0 %1766, %v1764
  %v1768 = vpop.permute.xlu0 %1767
  %v1788 = vunpack.c.l.b16 %v1746
  %v1789 = vunpack.c.h.b16 %v1746
  %v1790 = vunpack.c.l.b16 %v1747
  %v1791 = vunpack.c.h.b16 %v1747
  %v1792 = vunpack.c.l.b16 %v1748
  %v1793 = vunpack.c.h.b16 %v1748
  %v1794 = vunpack.c.l.b16 %v1749
  %v1795 = vunpack.c.h.b16 %v1749
  %v1796 = vunpack.c.l.b16 %v1750
  %v1797 = vunpack.c.h.b16 %v1750
  %v1798 = vunpack.c.l.b16 %v1751
  %v1799 = vunpack.c.h.b16 %v1751
  %v1800 = vunpack.c.l.b16 %v1752
  %v1801 = vunpack.c.h.b16 %v1752
  %v1802 = vunpack.c.l.b16 %v1753
  %v1803 = vunpack.c.h.b16 %v1753
  %v1804 = vunpack.c.l.b16 %v1754
  %v1805 = vunpack.c.h.b16 %v1754
  %v1806 = vunpack.c.l.b16 %v1755
  %v1807 = vunpack.c.h.b16 %v1755
  %v1808 = vunpack.c.l.b16 %v1756
  %v1809 = vunpack.c.h.b16 %v1756
  %v1810 = vunpack.c.l.b16 %v1757
  %v1811 = vunpack.c.h.b16 %v1757
  %v1812 = vunpack.c.l.b16 %v1758
  %v1813 = vunpack.c.h.b16 %v1758
  %v1814 = vunpack.c.l.b16 %v1759
  %v1815 = vunpack.c.h.b16 %v1759
  %v1816 = vunpack.c.l.b16 %v1760
  %v1817 = vunpack.c.h.b16 %v1760
  %v1818 = vunpack.c.l.b16 %v1761
  %v1819 = vunpack.c.h.b16 %v1761
  %v1820 = vunpack.c.l.b16 %v1762
  %v1821 = vunpack.c.h.b16 %v1762
  %v1822 = vunpack.c.l.b16 %v1763
  %v1823 = vunpack.c.h.b16 %v1763
  %v1824 = vpack.c.b16 %v1792, %v1788
  %v1825 = vpack.c.b16 %v1793, %v1789
  %v1826 = vpack.c.b16 %v1794, %v1790
  %v1827 = vpack.c.b16 %v1795, %v1791
  %v1828 = vpack.c.b16 %v1800, %v1796
  %v1829 = vpack.c.b16 %v1801, %v1797
  %v1830 = vpack.c.b16 %v1802, %v1798
  %v1831 = vpack.c.b16 %v1803, %v1799
  %v1832 = vpack.c.b16 %v1808, %v1804
  %v1833 = vpack.c.b16 %v1809, %v1805
  %v1834 = vpack.c.b16 %v1810, %v1806
  %v1835 = vpack.c.b16 %v1811, %v1807
  %v1836 = vpack.c.b16 %v1816, %v1812
  %v1837 = vpack.c.b16 %v1817, %v1813
  %v1838 = vpack.c.b16 %v1818, %v1814
  %v1839 = vpack.c.b16 %v1819, %v1815
  %v1840 = vpack.c.b16 %v1820, %v1820
  %v1841 = vpack.c.b16 %v1821, %v1821
  %v1842 = vpack.c.b16 %v1822, %v1822
  %v1843 = vpack.c.b16 %v1823, %v1823
  %v1861 = vsel %vm1352, %v1745, 0
  %v1864 = vsel %vm1356, %v1840, 0
  %v1867 = vsel %vm1356, %v1841, 0
  %v1870 = vsel %vm1356, %v1842, 0
  %v1873 = vsel %vm1356, %v1843, 0
  %1875 = vmatprep.subr.bf16.mxu0 %v1825
  %1876 = vmatpush1.bf16.msra.mxu0 %v1824
  %1877 = vmatprep.subr.bf16.mxu0 %v1829
  %1878 = vmatpush1.bf16.msra.mxu0 %v1828
  %1879 = vmatprep.subr.bf16.mxu0 %v1833
  %1880 = vmatpush1.bf16.msra.mxu0 %v1832
  %1881 = vmatprep.subr.bf16.mxu0 %v1837
  %1882 = vmatpush1.bf16.msra.mxu0 %v1836
  %1883 = vmatprep.subr.bf16.mxu0 %v1867
  %1884 = vmatpush1.bf16.msra.mxu0 %v1864
  %1885 = vmatprep.subr.bf16.mxu0 0
  %1886 = vmatpush1.bf16.msra.mxu0 0
  %1887 = vmatprep.subr.bf16.mxu0 0
  %1888 = vmatpush1.bf16.msra.mxu0 0
  %1889 = vmatprep.subr.bf16.mxu0 0
  %1890 = vmatpush1.bf16.msra.mxu0 0
  %1891 = vmatprep.subr.bf16.mxu0 0
  %1892 = vmatpush1.bf16.msra.mxu0 0
  %1893 = vmatprep.subr.bf16.mxu0 0
  %1894 = vmatpush1.bf16.msra.mxu0 0
  %1895 = vmatprep.subr.bf16.mxu0 0
  %1896 = vmatpush1.bf16.msra.mxu0 0
  %1897 = vmatprep.subr.bf16.mxu0 0
  %1898 = vmatpush1.bf16.msra.mxu0 0
  %1899 = vmatprep.subr.bf16.mxu0 0
  %1900 = vmatpush1.bf16.msra.mxu0 0
  %1901 = vmatprep.subr.bf16.mxu0 0
  %1902 = vmatpush1.bf16.msra.mxu0 0
  %1903 = vmatprep.subr.bf16.mxu0 0
  %1904 = vmatpush1.bf16.msra.mxu0 0
  %1905 = vmatprep.subr.bf16.mxu0 0
  %1906 = vmatpush1.bf16.msra.mxu0 0
  %1907 = vmatprep.mubr.bf16.mxu0 0
  %1908 = vmatmul.mubr.bf16.gmra.mrb[0].mxu0 %v1861
  %v1909 = vpop.f32.mrb[0].mxu0
  %v1910 = vadd.f32 %v1768, %v1909
  %v1911 = vpop.f32.mrb[0].mxu0
  %v1912 = vadd.f32 %v1768, %v1911
  %v1913 = vpop.f32.mrb[0].mxu0
  %v1914 = vpop.f32.mrb[0].mxu0
  %1915 = vdwg.mxu0
  %1916 = vmatprep.subr.bf16.mxu0 %v1827
  %1917 = vmatpush1.bf16.msra.mxu0 %v1826
  %1918 = vmatprep.subr.bf16.mxu0 %v1831
  %1919 = vmatpush1.bf16.msra.mxu0 %v1830
  %1920 = vmatprep.subr.bf16.mxu0 %v1835
  %1921 = vmatpush1.bf16.msra.mxu0 %v1834
  %1922 = vmatprep.subr.bf16.mxu0 %v1839
  %1923 = vmatpush1.bf16.msra.mxu0 %v1838
  %1924 = vmatprep.subr.bf16.mxu0 %v1873
  %1925 = vmatpush1.bf16.msra.mxu0 %v1870
  %1926 = vmatprep.subr.bf16.mxu0 0
  %1927 = vmatpush1.bf16.msra.mxu0 0
  %1928 = vmatprep.subr.bf16.mxu0 0
  %1929 = vmatpush1.bf16.msra.mxu0 0
  %1930 = vmatprep.subr.bf16.mxu0 0
  %1931 = vmatpush1.bf16.msra.mxu0 0
  %1932 = vmatprep.subr.bf16.mxu0 0
  %1933 = vmatpush1.bf16.msra.mxu0 0
  %1934 = vmatprep.subr.bf16.mxu0 0
  %1935 = vmatpush1.bf16.msra.mxu0 0
  %1936 = vmatprep.subr.bf16.mxu0 0
  %1937 = vmatpush1.bf16.msra.mxu0 0
  %1938 = vmatprep.subr.bf16.mxu0 0
  %1939 = vmatpush1.bf16.msra.mxu0 0
  %1940 = vmatprep.subr.bf16.mxu0 0
  %1941 = vmatpush1.bf16.msra.mxu0 0
  %1942 = vmatprep.subr.bf16.mxu0 0
  %1943 = vmatpush1.bf16.msra.mxu0 0
  %1944 = vmatprep.subr.bf16.mxu0 0
  %1945 = vmatpush1.bf16.msra.mxu0 0
  %1946 = vmatprep.subr.bf16.mxu0 0
  %1947 = vmatpush1.bf16.msra.mxu0 0
  %1948 = vmatprep.mubr.bf16.mxu0 0
  %1949 = vmatmul.mubr.bf16.gmra.mrb[0].mxu0 %v1861
  %v1950 = vpop.f32.mrb[0].mxu0
  %v1951 = vadd.f32 %v1768, %v1950
  %v1952 = vpop.f32.mrb[0].mxu0
  %v1953 = vadd.f32 %v1768, %v1952
  %v1954 = vpop.f32.mrb[0].mxu0
  %v1955 = vpop.f32.mrb[0].mxu0
  %1956 = vdwg.mxu0
  %v1957 = vmax.f32 %v1910, 0.0
  %v1958 = vmax.f32 %v1912, 0.0
  %v1959 = vmax.f32 %v1951, 0.0
  %v1960 = vmax.f32 %v1953, 0.0
  %v1961 = vld [vmem:[%s7] sm:$0xff]
  %1963 = vset.pattern.permute.xlu0 0
  %1964 = vperm.xlu0 %1963, %v1961
  %v1965 = vpop.permute.xlu0 %1964
  %v1967 = vmul.f32 %v1957, %v1965
  %v1968 = vmul.f32 %v1958, %v1965
  %v1969 = vmul.f32 %v1959, %v1965
  %v1970 = vmul.f32 %v1960, %v1965
  %v1971 = vld [vmem:[%s8] sm:$0xff]
  %1973 = vset.pattern.permute.xlu0 0
  %1974 = vperm.xlu0 %1973, %v1971
  %v1975 = vpop.permute.xlu0 %1974
  %v1977 = vadd.f32 %v1967, %v1975
  %v1978 = vadd.f32 %v1968, %v1975
  %v1979 = vadd.f32 %v1969, %v1975
  %v1980 = vadd.f32 %v1970, %v1975
  %v1981 = vadd.f32 %v1977, %v1471
  %v1982 = vadd.f32 %v1978, %v1472
  %v1983 = vadd.f32 %v1979, %v1473
  %v1984 = vadd.f32 %v1980, %v1474
  %v1985 = vpack.c.bf16 %v1981, %v1981
  %v1986 = vpack.c.bf16 %v1982, %v1982
  %v1987 = vpack.c.bf16 %v1983, %v1983
  %v1988 = vpack.c.bf16 %v1984, %v1984
  %v1991 = vunpack.c.l.b16 %v1985
  %v1992 = vunpack.c.l.b16 %v1986
  %v1993 = vpack.c.b16 %v1992, %v1991
  %1995 = vst [vmem:[#allocation3 + $0x4] sm:$0xff] %v1993
  %v1996 = vld [vmem:[#allocation3] sm:$0xff]
  %v1997 = vld [vmem:[#allocation3 + $0x8] sm:$0xf]
  %v1998 = vsel %vm274, %v1996, 0
  %v1999 = vsel %vm275, %v1997, 0
  %2002 = vrot.lane.b32.xlu0 %v1998, 17
  %v2003 = vpop.permute.xlu0 %2002
  %2004 = vrot.lane.b32.xlu0 %v1999, 17
  %v2005 = vpop.permute.xlu0 %2004
  %v2006 = vrot.slane %v2003, 4
  %v2007 = vrot.slane %v2005, 4
  %v2008 = vsel %vm144, %v2006, %v2007
  %v2009 = vsel %vm287, %v2003, %v2008
  %2011 = vst [vmem:[#allocation2] sm:$0xff] %v2009
  %v2012 = vld [vmem:[#allocation3] sm:$0xff]
  %v2013 = vld [vmem:[#allocation3 + $0x8] sm:$0xf]
  %2016 = vrot.lane.b32.xlu0 %v2012, 16
  %v2017 = vpop.permute.xlu0 %2016
  %2018 = vrot.lane.b32.xlu0 %v2013, 16
  %v2019 = vpop.permute.xlu0 %2018
  %v2020 = vrot.slane %v2017, 4
  %v2021 = vrot.slane %v2019, 4
  %v2022 = vsel %vm144, %v2020, %v2021
  %v2023 = vsel %vm302, %v2017, %v2022
  %2025 = vst [vmem:[#allocation2 + $0x10] sm:$0xff] %v2023
  %v2026 = vld [vmem:[#allocation3] sm:$0xff]
  %v2027 = vld [vmem:[#allocation3 + $0x8] sm:$0xf]
  %v2028 = vsel %vm313, %v2026, 0
  %v2029 = vsel %vm314, %v2027, 0
  %2032 = vrot.lane.b32.xlu0 %v2028, 15
  %v2033 = vpop.permute.xlu0 %2032
  %2034 = vrot.lane.b32.xlu0 %v2029, 15
  %v2035 = vpop.permute.xlu0 %2034
  %v2036 = vrot.slane %v2033, 4
  %v2037 = vrot.slane %v2035, 4
  %v2038 = vsel %vm144, %v2036, %v2037
  %v2039 = vsel %vm326, %v2033, %v2038
  %2041 = vst [vmem:[#allocation2 + $0x20] sm:$0xff] %v2039
  %v2042 = vld [vmem:[#allocation3] sm:$0xff]
  %v2043 = vld [vmem:[#allocation3 + $0x8] sm:$0xf]
  %v2044 = vsel %vm385, %v2042, 0
  %v2045 = vsel %vm386, %v2043, 0
  %2048 = vrot.lane.b32.xlu0 %v2044, 1
  %v2049 = vpop.permute.xlu0 %2048
  %2050 = vrot.lane.b32.xlu0 %v2045, 1
  %v2051 = vpop.permute.xlu0 %2050
  %v2052 = vrot.slane %v2049, 4
  %v2053 = vrot.slane %v2051, 4
  %v2054 = vsel %vm144, %v2052, %v2053
  %v2055 = vsel %vm398, %v2049, %v2054
  %2057 = vst [vmem:[#allocation2 + $0x30] sm:$0xff] %v2055
  %v2058 = vld [vmem:[#allocation3 + $0x4] sm:$0xff]
  %2059 = vst [vmem:[#allocation2 + $0x40] sm:$0xff] %v2058
  %v2060 = vld [vmem:[#allocation3 + $0x4] sm:$0xff]
  %v2061 = vld [vmem:[#allocation3 + $0xc] sm:$0xf]
  %v2062 = vsel %vm410, %v2060, 0
  %v2063 = vsel %vm411, %v2061, 0
  %2066 = vrot.lane.b32.xlu0 %v2062, 127
  %v2067 = vpop.permute.xlu0 %2066
  %2068 = vrot.lane.b32.xlu0 %v2063, 127
  %v2069 = vpop.permute.xlu0 %2068
  %v2070 = vrot.slane %v2067, 4
  %v2071 = vrot.slane %v2069, 4
  %v2072 = vsel %vm144, %v2070, %v2071
  %v2073 = vsel %vm383, %v2067, %v2072
  %2075 = vst [vmem:[#allocation2 + $0x50] sm:$0xff] %v2073
  %v2076 = vld [vmem:[#allocation3 + $0x4] sm:$0xff]
  %v2077 = vld [vmem:[#allocation3 + $0xc] sm:$0xf]
  %v2078 = vsel %vm476, %v2076, 0
  %v2079 = vsel %vm477, %v2077, 0
  %2082 = vrot.lane.b32.xlu0 %v2078, 113
  %v2083 = vpop.permute.xlu0 %2082
  %2084 = vrot.lane.b32.xlu0 %v2079, 113
  %v2085 = vpop.permute.xlu0 %2084
  %v2086 = vrot.slane %v2083, 4
  %v2087 = vrot.slane %v2085, 4
  %v2088 = vsel %vm144, %v2086, %v2087
  %v2089 = vsel %vm311, %v2083, %v2088
  %2091 = vst [vmem:[#allocation2 + $0x60] sm:$0xff] %v2089
  %v2092 = vld [vmem:[#allocation3 + $0x4] sm:$0xff]
  %v2093 = vld [vmem:[#allocation3 + $0xc] sm:$0xf]
  %2096 = vrot.lane.b32.xlu0 %v2092, 112
  %v2097 = vpop.permute.xlu0 %2096
  %2098 = vrot.lane.b32.xlu0 %v2093, 112
  %v2099 = vpop.permute.xlu0 %2098
  %v2100 = vrot.slane %v2097, 4
  %v2101 = vrot.slane %v2099, 4
  %v2102 = vsel %vm144, %v2100, %v2101
  %v2103 = vsel %vm503, %v2097, %v2102
  %2105 = vst [vmem:[#allocation2 + $0x70] sm:$0xff] %v2103
  %v2106 = vld [vmem:[#allocation3 + $0x4] sm:$0xff]
  %v2107 = vld [vmem:[#allocation3 + $0xc] sm:$0xf]
  %v2108 = vsel %vm513, %v2106, 0
  %v2109 = vsel %vm514, %v2107, 0
  %2112 = vrot.lane.b32.xlu0 %v2108, 111
  %v2113 = vpop.permute.xlu0 %2112
  %2114 = vrot.lane.b32.xlu0 %v2109, 111
  %v2115 = vpop.permute.xlu0 %2114
  %v2116 = vrot.slane %v2113, 4
  %v2117 = vrot.slane %v2115, 4
  %v2118 = vsel %vm144, %v2116, %v2117
  %v2119 = vsel %vm272, %v2113, %v2118
  %2121 = vst [vmem:[#allocation2 + $0x80] sm:$0xff] %v2119
  %v2124 = vunpack.c.l.b16 %v1987
  %v2125 = vunpack.c.l.b16 %v1988
  %v2126 = vpack.c.b16 %v2125, %v2124
  %2128 = vst [vmem:[#allocation3 + $0x4] sm:$0xff] %v2126
  %v2129 = vld [vmem:[#allocation3] sm:$0xff]
  %v2130 = vld [vmem:[#allocation3 + $0x8] sm:$0xf]
  %v2131 = vsel %vm274, %v2129, 0
  %v2132 = vsel %vm275, %v2130, 0
  %2135 = vrot.lane.b32.xlu0 %v2131, 17
  %v2136 = vpop.permute.xlu0 %2135
  %2137 = vrot.lane.b32.xlu0 %v2132, 17
  %v2138 = vpop.permute.xlu0 %2137
  %v2139 = vrot.slane %v2136, 4
  %v2140 = vrot.slane %v2138, 4
  %v2141 = vsel %vm144, %v2139, %v2140
  %v2142 = vsel %vm287, %v2136, %v2141
  %2144 = vst [vmem:[#allocation2 + $0x8] sm:$0xff] %v2142
  %v2145 = vld [vmem:[#allocation3] sm:$0xff]
  %v2146 = vld [vmem:[#allocation3 + $0x8] sm:$0xf]
  %2149 = vrot.lane.b32.xlu0 %v2145, 16
  %v2150 = vpop.permute.xlu0 %2149
  %2151 = vrot.lane.b32.xlu0 %v2146, 16
  %v2152 = vpop.permute.xlu0 %2151
  %v2153 = vrot.slane %v2150, 4
  %v2154 = vrot.slane %v2152, 4
  %v2155 = vsel %vm144, %v2153, %v2154
  %v2156 = vsel %vm302, %v2150, %v2155
  %2158 = vst [vmem:[#allocation2 + $0x18] sm:$0xff] %v2156
  %v2159 = vld [vmem:[#allocation3] sm:$0xff]
  %v2160 = vld [vmem:[#allocation3 + $0x8] sm:$0xf]
  %v2161 = vsel %vm313, %v2159, 0
  %v2162 = vsel %vm314, %v2160, 0
  %2165 = vrot.lane.b32.xlu0 %v2161, 15
  %v2166 = vpop.permute.xlu0 %2165
  %2167 = vrot.lane.b32.xlu0 %v2162, 15
  %v2168 = vpop.permute.xlu0 %2167
  %v2169 = vrot.slane %v2166, 4
  %v2170 = vrot.slane %v2168, 4
  %v2171 = vsel %vm144, %v2169, %v2170
  %v2172 = vsel %vm326, %v2166, %v2171
  %2174 = vst [vmem:[#allocation2 + $0x28] sm:$0xff] %v2172
  %v2175 = vld [vmem:[#allocation3] sm:$0xff]
  %v2176 = vld [vmem:[#allocation3 + $0x8] sm:$0xf]
  %v2177 = vsel %vm385, %v2175, 0
  %v2178 = vsel %vm386, %v2176, 0
  %2181 = vrot.lane.b32.xlu0 %v2177, 1
  %v2182 = vpop.permute.xlu0 %2181
  %2183 = vrot.lane.b32.xlu0 %v2178, 1
  %v2184 = vpop.permute.xlu0 %2183
  %v2185 = vrot.slane %v2182, 4
  %v2186 = vrot.slane %v2184, 4
  %v2187 = vsel %vm144, %v2185, %v2186
  %v2188 = vsel %vm398, %v2182, %v2187
  %2190 = vst [vmem:[#allocation2 + $0x38] sm:$0xff] %v2188
  %v2191 = vld [vmem:[#allocation3 + $0x4] sm:$0xff]
  %2192 = vst [vmem:[#allocation2 + $0x48] sm:$0xff] %v2191
  %v2193 = vld [vmem:[#allocation3 + $0x4] sm:$0xff]
  %v2194 = vld [vmem:[#allocation3 + $0xc] sm:$0xf]
  %v2195 = vsel %vm410, %v2193, 0
  %v2196 = vsel %vm411, %v2194, 0
  %2199 = vrot.lane.b32.xlu0 %v2195, 127
  %v2200 = vpop.permute.xlu0 %2199
  %2201 = vrot.lane.b32.xlu0 %v2196, 127
  %v2202 = vpop.permute.xlu0 %2201
  %v2203 = vrot.slane %v2200, 4
  %v2204 = vrot.slane %v2202, 4
  %v2205 = vsel %vm144, %v2203, %v2204
  %v2206 = vsel %vm383, %v2200, %v2205
  %2208 = vst [vmem:[#allocation2 + $0x58] sm:$0xff] %v2206
  %v2209 = vld [vmem:[#allocation3 + $0x4] sm:$0xff]
  %v2210 = vld [vmem:[#allocation3 + $0xc] sm:$0xf]
  %v2211 = vsel %vm476, %v2209, 0
  %v2212 = vsel %vm477, %v2210, 0
  %2215 = vrot.lane.b32.xlu0 %v2211, 113
  %v2216 = vpop.permute.xlu0 %2215
  %2217 = vrot.lane.b32.xlu0 %v2212, 113
  %v2218 = vpop.permute.xlu0 %2217
  %v2219 = vrot.slane %v2216, 4
  %v2220 = vrot.slane %v2218, 4
  %v2221 = vsel %vm144, %v2219, %v2220
  %v2222 = vsel %vm311, %v2216, %v2221
  %2224 = vst [vmem:[#allocation2 + $0x68] sm:$0xff] %v2222
  %v2225 = vld [vmem:[#allocation3 + $0x4] sm:$0xff]
  %v2226 = vld [vmem:[#allocation3 + $0xc] sm:$0xf]
  %2229 = vrot.lane.b32.xlu0 %v2225, 112
  %v2230 = vpop.permute.xlu0 %2229
  %2231 = vrot.lane.b32.xlu0 %v2226, 112
  %v2232 = vpop.permute.xlu0 %2231
  %v2233 = vrot.slane %v2230, 4
  %v2234 = vrot.slane %v2232, 4
  %v2235 = vsel %vm144, %v2233, %v2234
  %v2236 = vsel %vm503, %v2230, %v2235
  %2238 = vst [vmem:[#allocation2 + $0x78] sm:$0xff] %v2236
  %v2239 = vld [vmem:[#allocation3 + $0x4] sm:$0xff]
  %v2240 = vld [vmem:[#allocation3 + $0xc] sm:$0xf]
  %v2241 = vsel %vm513, %v2239, 0
  %v2242 = vsel %vm514, %v2240, 0
  %2245 = vrot.lane.b32.xlu0 %v2241, 111
  %v2246 = vpop.permute.xlu0 %2245
  %2247 = vrot.lane.b32.xlu0 %v2242, 111
  %v2248 = vpop.permute.xlu0 %2247
  %v2249 = vrot.slane %v2246, 4
  %v2250 = vrot.slane %v2248, 4
  %v2251 = vsel %vm144, %v2249, %v2250
  %v2252 = vsel %vm272, %v2246, %v2251
  %2254 = vst [vmem:[#allocation2 + $0x88] sm:$0xff] %v2252
  %v2255 = vld [vmem:[%s9] sm:$0xf]
  %v2256 = vld [vmem:[#allocation2] sm:$0xff]
  %v2257 = vld [vmem:[#allocation2 + $0x8] sm:$0xff]
  %v2258 = vld [vmem:[#allocation2 + $0x10] sm:$0xff]
  %v2259 = vld [vmem:[#allocation2 + $0x18] sm:$0xff]
  %v2260 = vld [vmem:[#allocation2 + $0x20] sm:$0xff]
  %v2261 = vld [vmem:[#allocation2 + $0x28] sm:$0xff]
  %v2262 = vld [vmem:[#allocation2 + $0x30] sm:$0xff]
  %v2263 = vld [vmem:[#allocation2 + $0x38] sm:$0xff]
  %v2264 = vld [vmem:[#allocation2 + $0x40] sm:$0xff]
  %v2265 = vld [vmem:[#allocation2 + $0x48] sm:$0xff]
  %v2266 = vld [vmem:[#allocation2 + $0x50] sm:$0xff]
  %v2267 = vld [vmem:[#allocation2 + $0x58] sm:$0xff]
  %v2268 = vld [vmem:[#allocation2 + $0x60] sm:$0xff]
  %v2269 = vld [vmem:[#allocation2 + $0x68] sm:$0xff]
  %v2270 = vld [vmem:[#allocation2 + $0x70] sm:$0xff]
  %v2271 = vld [vmem:[#allocation2 + $0x78] sm:$0xff]
  %v2272 = vld [vmem:[#allocation2 + $0x80] sm:$0xff]
  %v2273 = vld [vmem:[#allocation2 + $0x88] sm:$0xff]
  %v2274 = vld [vmem:[%s10] sm:$0xff]
  %2276 = vset.pattern.permute.xlu0 0
  %2277 = vperm.xlu0 %2276, %v2274
  %v2278 = vpop.permute.xlu0 %2277
  %v2298 = vunpack.c.l.b16 %v2256
  %v2299 = vunpack.c.h.b16 %v2256
  %v2300 = vunpack.c.l.b16 %v2257
  %v2301 = vunpack.c.h.b16 %v2257
  %v2302 = vunpack.c.l.b16 %v2258
  %v2303 = vunpack.c.h.b16 %v2258
  %v2304 = vunpack.c.l.b16 %v2259
  %v2305 = vunpack.c.h.b16 %v2259
  %v2306 = vunpack.c.l.b16 %v2260
  %v2307 = vunpack.c.h.b16 %v2260
  %v2308 = vunpack.c.l.b16 %v2261
  %v2309 = vunpack.c.h.b16 %v2261
  %v2310 = vunpack.c.l.b16 %v2262
  %v2311 = vunpack.c.h.b16 %v2262
  %v2312 = vunpack.c.l.b16 %v2263
  %v2313 = vunpack.c.h.b16 %v2263
  %v2314 = vunpack.c.l.b16 %v2264
  %v2315 = vunpack.c.h.b16 %v2264
  %v2316 = vunpack.c.l.b16 %v2265
  %v2317 = vunpack.c.h.b16 %v2265
  %v2318 = vunpack.c.l.b16 %v2266
  %v2319 = vunpack.c.h.b16 %v2266
  %v2320 = vunpack.c.l.b16 %v2267
  %v2321 = vunpack.c.h.b16 %v2267
  %v2322 = vunpack.c.l.b16 %v2268
  %v2323 = vunpack.c.h.b16 %v2268
  %v2324 = vunpack.c.l.b16 %v2269
  %v2325 = vunpack.c.h.b16 %v2269
  %v2326 = vunpack.c.l.b16 %v2270
  %v2327 = vunpack.c.h.b16 %v2270
  %v2328 = vunpack.c.l.b16 %v2271
  %v2329 = vunpack.c.h.b16 %v2271
  %v2330 = vunpack.c.l.b16 %v2272
  %v2331 = vunpack.c.h.b16 %v2272
  %v2332 = vunpack.c.l.b16 %v2273
  %v2333 = vunpack.c.h.b16 %v2273
  %v2334 = vpack.c.b16 %v2302, %v2298
  %v2335 = vpack.c.b16 %v2303, %v2299
  %v2336 = vpack.c.b16 %v2304, %v2300
  %v2337 = vpack.c.b16 %v2305, %v2301
  %v2338 = vpack.c.b16 %v2310, %v2306
  %v2339 = vpack.c.b16 %v2311, %v2307
  %v2340 = vpack.c.b16 %v2312, %v2308
  %v2341 = vpack.c.b16 %v2313, %v2309
  %v2342 = vpack.c.b16 %v2318, %v2314
  %v2343 = vpack.c.b16 %v2319, %v2315
  %v2344 = vpack.c.b16 %v2320, %v2316
  %v2345 = vpack.c.b16 %v2321, %v2317
  %v2346 = vpack.c.b16 %v2326, %v2322
  %v2347 = vpack.c.b16 %v2327, %v2323
  %v2348 = vpack.c.b16 %v2328, %v2324
  %v2349 = vpack.c.b16 %v2329, %v2325
  %v2350 = vpack.c.b16 %v2330, %v2330
  %v2351 = vpack.c.b16 %v2331, %v2331
  %v2352 = vpack.c.b16 %v2332, %v2332
  %v2353 = vpack.c.b16 %v2333, %v2333
  %v2371 = vsel %vm1352, %v2255, 0
  %v2374 = vsel %vm1356, %v2350, 0
  %v2377 = vsel %vm1356, %v2351, 0
  %v2380 = vsel %vm1356, %v2352, 0
  %v2383 = vsel %vm1356, %v2353, 0
  %2385 = vmatprep.subr.bf16.mxu0 %v2335
  %2386 = vmatpush1.bf16.msra.mxu0 %v2334
  %2387 = vmatprep.subr.bf16.mxu0 %v2339
  %2388 = vmatpush1.bf16.msra.mxu0 %v2338
  %2389 = vmatprep.subr.bf16.mxu0 %v2343
  %2390 = vmatpush1.bf16.msra.mxu0 %v2342
  %2391 = vmatprep.subr.bf16.mxu0 %v2347
  %2392 = vmatpush1.bf16.msra.mxu0 %v2346
  %2393 = vmatprep.subr.bf16.mxu0 %v2377
  %2394 = vmatpush1.bf16.msra.mxu0 %v2374
  %2395 = vmatprep.subr.bf16.mxu0 0
  %2396 = vmatpush1.bf16.msra.mxu0 0
  %2397 = vmatprep.subr.bf16.mxu0 0
  %2398 = vmatpush1.bf16.msra.mxu0 0
  %2399 = vmatprep.subr.bf16.mxu0 0
  %2400 = vmatpush1.bf16.msra.mxu0 0
  %2401 = vmatprep.subr.bf16.mxu0 0
  %2402 = vmatpush1.bf16.msra.mxu0 0
  %2403 = vmatprep.subr.bf16.mxu0 0
  %2404 = vmatpush1.bf16.msra.mxu0 0
  %2405 = vmatprep.subr.bf16.mxu0 0
  %2406 = vmatpush1.bf16.msra.mxu0 0
  %2407 = vmatprep.subr.bf16.mxu0 0
  %2408 = vmatpush1.bf16.msra.mxu0 0
  %2409 = vmatprep.subr.bf16.mxu0 0
  %2410 = vmatpush1.bf16.msra.mxu0 0
  %2411 = vmatprep.subr.bf16.mxu0 0
  %2412 = vmatpush1.bf16.msra.mxu0 0
  %2413 = vmatprep.subr.bf16.mxu0 0
  %2414 = vmatpush1.bf16.msra.mxu0 0
  %2415 = vmatprep.subr.bf16.mxu0 0
  %2416 = vmatpush1.bf16.msra.mxu0 0
  %2417 = vmatprep.mubr.bf16.mxu0 0
  %2418 = vmatmul.mubr.bf16.gmra.mrb[0].mxu0 %v2371
  %v2419 = vpop.f32.mrb[0].mxu0
  %v2420 = vadd.f32 %v2278, %v2419
  %v2421 = vpop.f32.mrb[0].mxu0
  %v2422 = vadd.f32 %v2278, %v2421
  %v2423 = vpop.f32.mrb[0].mxu0
  %v2424 = vpop.f32.mrb[0].mxu0
  %2425 = vdwg.mxu0
  %2426 = vmatprep.subr.bf16.mxu0 %v2337
  %2427 = vmatpush1.bf16.msra.mxu0 %v2336
  %2428 = vmatprep.subr.bf16.mxu0 %v2341
  %2429 = vmatpush1.bf16.msra.mxu0 %v2340
  %2430 = vmatprep.subr.bf16.mxu0 %v2345
  %2431 = vmatpush1.bf16.msra.mxu0 %v2344
  %2432 = vmatprep.subr.bf16.mxu0 %v2349
  %2433 = vmatpush1.bf16.msra.mxu0 %v2348
  %2434 = vmatprep.subr.bf16.mxu0 %v2383
  %2435 = vmatpush1.bf16.msra.mxu0 %v2380
  %2436 = vmatprep.subr.bf16.mxu0 0
  %2437 = vmatpush1.bf16.msra.mxu0 0
  %2438 = vmatprep.subr.bf16.mxu0 0
  %2439 = vmatpush1.bf16.msra.mxu0 0
  %2440 = vmatprep.subr.bf16.mxu0 0
  %2441 = vmatpush1.bf16.msra.mxu0 0
  %2442 = vmatprep.subr.bf16.mxu0 0
  %2443 = vmatpush1.bf16.msra.mxu0 0
  %2444 = vmatprep.subr.bf16.mxu0 0
  %2445 = vmatpush1.bf16.msra.mxu0 0
  %2446 = vmatprep.subr.bf16.mxu0 0
  %2447 = vmatpush1.bf16.msra.mxu0 0
  %2448 = vmatprep.subr.bf16.mxu0 0
  %2449 = vmatpush1.bf16.msra.mxu0 0
  %2450 = vmatprep.subr.bf16.mxu0 0
  %2451 = vmatpush1.bf16.msra.mxu0 0
  %2452 = vmatprep.subr.bf16.mxu0 0
  %2453 = vmatpush1.bf16.msra.mxu0 0
  %2454 = vmatprep.subr.bf16.mxu0 0
  %2455 = vmatpush1.bf16.msra.mxu0 0
  %2456 = vmatprep.subr.bf16.mxu0 0
  %2457 = vmatpush1.bf16.msra.mxu0 0
  %2458 = vmatprep.mubr.bf16.mxu0 0
  %2459 = vmatmul.mubr.bf16.gmra.mrb[0].mxu0 %v2371
  %v2460 = vpop.f32.mrb[0].mxu0
  %v2461 = vadd.f32 %v2278, %v2460
  %v2462 = vpop.f32.mrb[0].mxu0
  %v2463 = vadd.f32 %v2278, %v2462
  %v2464 = vpop.f32.mrb[0].mxu0
  %v2465 = vpop.f32.mrb[0].mxu0
  %2466 = vdwg.mxu0
  %v2467 = vmax.f32 %v2420, 0.0
  %v2468 = vmax.f32 %v2422, 0.0
  %v2469 = vmax.f32 %v2461, 0.0
  %v2470 = vmax.f32 %v2463, 0.0
  %v2471 = vld [vmem:[%s11] sm:$0xff]
  %2473 = vset.pattern.permute.xlu0 0
  %2474 = vperm.xlu0 %2473, %v2471
  %v2475 = vpop.permute.xlu0 %2474
  %v2477 = vmul.f32 %v2467, %v2475
  %v2478 = vmul.f32 %v2468, %v2475
  %v2479 = vmul.f32 %v2469, %v2475
  %v2480 = vmul.f32 %v2470, %v2475
  %v2481 = vld [vmem:[%s12] sm:$0xff]
  %2483 = vset.pattern.permute.xlu0 0
  %2484 = vperm.xlu0 %2483, %v2481
  %v2485 = vpop.permute.xlu0 %2484
  %v2487 = vadd.f32 %v2477, %v2485
  %v2488 = vadd.f32 %v2478, %v2485
  %v2489 = vadd.f32 %v2479, %v2485
  %v2490 = vadd.f32 %v2480, %v2485
  %v2491 = vadd.f32 %v2487, %v1981
  %v2492 = vadd.f32 %v2488, %v1982
  %v2493 = vadd.f32 %v2489, %v1983
  %v2494 = vadd.f32 %v2490, %v1984
  %2495 = vst [vmem:[%s13] sm:$0xff] %v2491
  %2496 = vst [vmem:[%s13 + $0x8] sm:$0xff] %v2492
  %2497 = vst [vmem:[%s13 + $0x10] sm:$0xff] %v2493
  %2498 = vst [vmem:[%s13 + $0x18] sm:$0xff] %v2494
  // Predicated region
  $region54: #{forward.1} parent=0 // pred_check
    _
  $region55: #{forward.1} parent=0 // pred_check_branch
    %2500 = sbr.rel (0) target = $region57
  $region56: #{forward.1} parent=0 // pred_region
    _
  $region57: #{forward.1} parent=0 // pred_fallthru
    _
  // Predicated region
  $region58: #{forward.1} parent=0 // pred_check
    _
  $region59: #{forward.1} parent=0 // pred_check_branch
    %2502 = sbr.rel (0) target = $region61
  $region60: #{forward.1} parent=0 // pred_region
    _
  $region61: #{forward.1} parent=0 // pred_fallthru
    _

</llo_original>
